<compile_context>
chip_gen: v6e
topology: v6e:2x2x1
jax: 0.10.0
libtpu: 0.0.40
codegen_flags: <defaults>
</compile_context>

<pallas_src>
import functools

import jax
import jax.numpy as jnp
from jax.experimental import pallas as pl
from jax.experimental.pallas import tpu as pltpu

BN_EPS = 1e-3
VMEM_LIMIT_BYTES = 32 * 1024 * 1024  # safe on v5e/v6e/v7x for these tiny tiles


# ----------------------------- activations ---------------------------------
def _hardsigmoid(x):
    # torch.nn.Hardsigmoid: relu6(x + 3) / 6
    return jnp.clip(x / 6.0 + 0.5, 0.0, 1.0)


def _hardswish(x):
    # torch.nn.Hardswish: x * relu6(x + 3) / 6
    return x * _hardsigmoid(x)


def _apply_act(x, act):
    if act == "relu":
        return jnp.maximum(x, 0.0)
    if act == "hardswish":
        return _hardswish(x)
    return x  # "none"


# --------------------- generic fused matmul (stem / lastconv) ---------------
def _mm_kernel(x_ref, w_ref, s_ref, b_ref, o_ref, *, act):
    y = jnp.dot(x_ref[...].astype(jnp.bfloat16), w_ref[...],
                preferred_element_type=jnp.float32)
    o_ref[...] = _apply_act(y * s_ref[...] + b_ref[...], act)


def matmul_scale_bias_act(x, w, scale, bias, act="none", tile_m=512):
    """out = act((x @ w) * scale + bias); x:(M,K) f32, w:(K,N) f32."""
    M, K = x.shape
    _, Nc = w.shape
    tm = min(tile_m, M)
    grid_m = pl.cdiv(M, tm)
    return pl.pallas_call(
        functools.partial(_mm_kernel, act=act),
        out_shape=jax.ShapeDtypeStruct((M, Nc), jnp.float32),
        grid=(grid_m,),
        in_specs=[
            pl.BlockSpec((tm, K), lambda i: (i, 0)),
            pl.BlockSpec((K, Nc), lambda i: (0, 0)),
            pl.BlockSpec((1, Nc), lambda i: (0, 0)),
            pl.BlockSpec((1, Nc), lambda i: (0, 0)),
        ],
        out_specs=pl.BlockSpec((tm, Nc), lambda i: (i, 0)),
        compiler_params=pltpu.CompilerParams(
            dimension_semantics=("parallel",),
            vmem_limit_bytes=VMEM_LIMIT_BYTES),
    )(x, w.astype(jnp.bfloat16), scale.reshape(1, Nc), bias.reshape(1, Nc))


# ----------------------------- glue helpers ---------------------------------
def _make_divisible(v, divisor=8, min_value=None):
    if min_value is None:
        min_value = divisor
    new_v = max(min_value, int(v + divisor / 2) // divisor * divisor)
    if new_v < 0.9 * v:
        new_v += divisor
    return new_v


def fold_bn(p):
    scale = p["gamma"] / jnp.sqrt(p["var"] + BN_EPS)
    bias = p["beta"] - p["mean"] * scale
    return scale, bias


def extract_patches(x, k, stride, padding):
    """x:(N,H,W,C) -> (k*k, N, Ho, Wo, C) per-tap shifted views (stem only)."""
    N, H, W, C = x.shape
    xp = jnp.pad(x, ((0, 0), (padding, padding), (padding, padding), (0, 0)))
    Ho = (H + 2 * padding - k) // stride + 1
    Wo = (W + 2 * padding - k) // stride + 1
    pats = []
    for dh in range(k):
        for dw in range(k):
            sl = xp[:, dh:dh + stride * (Ho - 1) + 1:stride,
                       dw:dw + stride * (Wo - 1) + 1:stride, :]
            pats.append(sl)
    return jnp.stack(pats, 0), Ho, Wo


def conv_bn_act(x, p, k, stride, act):
    """Regular conv (groups=1) + folded BatchNorm + activation. x is NHWC."""
    padding = (k - 1) // 2
    N, H, W, Cin = x.shape
    cout = p["w"].shape[0]
    scale, bias = fold_bn(p)
    if k == 1 and stride == 1:
        w = p["w"].reshape(cout, Cin).T                       # (Cin, Cout)
        y = matmul_scale_bias_act(x.reshape(N * H * W, Cin), w, scale, bias, act)
        return y.reshape(N, H, W, cout)
    # im2col path (only used for the tiny 3-channel stem conv).
    patches, Ho, Wo = extract_patches(x, k, stride, padding)  # (T,N,Ho,Wo,Cin)
    T = k * k
    pm = jnp.transpose(patches, (1, 2, 3, 0, 4)).reshape(N * Ho * Wo, T * Cin)
    wm = jnp.transpose(p["w"], (2, 3, 1, 0)).reshape(T * Cin, cout)  # (dh,dw,ci,co)
    y = matmul_scale_bias_act(pm, wm, scale, bias, act)
    return y.reshape(N, Ho, Wo, cout)


# ------------------- fused inverted-residual block kernel -------------------
def inverted_residual_block(x_nhwc, bp, cnf):
    """Fused expand->depthwise->SE->project->residual. One pallas_call.

    Grid iterates over the batch (parallel); all intermediates stay in VMEM.
    """
    N, H, W, Cin = x_nhwc.shape
    k, stride = cnf["k"], cnf["stride"]
    pad = (k - 1) // 2
    Cexp, Cout = cnf["cexp"], cnf["cout"]
    Ho = (H + 2 * pad - k) // stride + 1
    Wo = (W + 2 * pad - k) // stride + 1
    Hp, Wpd = H + 2 * pad, W + 2 * pad
    act = "hardswish" if cnf["use_hs"] else "relu"
    has_expand = "expand" in bp
    has_se = "se" in bp
    has_res = (stride == 1 and Cin == Cout)

    inputs = [x_nhwc.reshape(N, H * W, Cin)]
    in_specs = [pl.BlockSpec((None, H * W, Cin), lambda n: (n, 0, 0))]

    def add(arr):
        nd = arr.ndim
        inputs.append(arr)
        in_specs.append(pl.BlockSpec(arr.shape, lambda n: (0,) * nd))

    if has_expand:
        es, eb = fold_bn(bp["expand"])
        add(bp["expand"]["w"].reshape(Cexp, Cin).T.astype(jnp.bfloat16))
        add(es.reshape(1, Cexp))
        add(eb.reshape(1, Cexp))
    dws_, dwb_ = fold_bn(bp["dw"])
    add(bp["dw"]["w"].reshape(Cexp, k * k).T)          # (k*k, Cexp), f32
    add(dws_.reshape(1, Cexp))
    add(dwb_.reshape(1, Cexp))
    if has_se:
        Cs = bp["se"]["w1"].shape[0]
        add(bp["se"]["w1"].reshape(Cs, Cexp).T.astype(jnp.bfloat16))  # (Cexp,Cs)
        add(bp["se"]["b1"].reshape(1, Cs))
        add(bp["se"]["w2"].reshape(Cexp, Cs).T.astype(jnp.bfloat16))  # (Cs,Cexp)
        add(bp["se"]["b2"].reshape(1, Cexp))
    pjs_, pjb_ = fold_bn(bp["project"])
    add(bp["project"]["w"].reshape(Cout, Cexp).T.astype(jnp.bfloat16))  # (Cexp,Cout)
    add(pjs_.reshape(1, Cout))
    add(pjb_.reshape(1, Cout))

    n_in = len(inputs)

    def kernel(*refs):
        it = iter(refs[:n_in])
        x_ref = next(it)
        o_ref = refs[n_in]
        pad_scr = refs[n_in + 1]   # (Hp*Wpd, Cexp) zero-padded spatial scratch
        dw_scr = refs[n_in + 2]    # (Ho*Wo, Cexp)  depthwise output scratch
        if has_expand:
            we_ref, es_ref, eb_ref = next(it), next(it), next(it)
        dww_ref, dws_ref, dwb_ref = next(it), next(it), next(it)
        if has_se:
            w1_ref, b1_ref, w2_ref, b2_ref = next(it), next(it), next(it), next(it)
        wp_ref, pjs_ref, pjb_ref = next(it), next(it), next(it)

        x = x_ref[...]                                   # (H*W, Cin) f32

        # ---- expand 1x1 conv + BN + act (stays in VMEM) ----
        if has_expand:
            h = jnp.dot(x.astype(jnp.bfloat16), we_ref[...],
                        preferred_element_type=jnp.float32)
            h = _apply_act(h * es_ref[...] + eb_ref[...], act)
        else:
            h = x

        # ---- stage expanded activation in a zero-padded spatial scratch ----
        pad_scr[...] = jnp.zeros_like(pad_scr)
        for hh in range(H):
            r0 = (hh + pad) * Wpd + pad
            pad_scr[r0:r0 + W, :] = h[hh * W:(hh + 1) * W, :]

        # ---- depthwise kxk conv (in-kernel shifted taps) + BN + act ----
        dww = dww_ref[...]                               # (k*k, Cexp)
        dws = dws_ref[...]
        dwb = dwb_ref[...]
        for ho in range(Ho):
            acc = jnp.zeros((Wo, Cexp), jnp.float32)
            for dh in range(k):
                base = (ho * stride + dh) * Wpd
                for dwi in range(k):
                    t = dh * k + dwi
                    if stride == 1:
                        src = pad_scr[base + dwi:base + dwi + Wo, :]
                    else:
                        src = pad_scr[pl.ds(base + dwi, Wo, stride=stride), :]
                    acc = acc + src * dww[t:t + 1, :]
            dw_scr[ho * Wo:(ho + 1) * Wo, :] = _apply_act(acc * dws + dwb, act)

        y = dw_scr[...]                                  # (Ho*Wo, Cexp)

        # ---- squeeze-and-excitation (fully in VMEM) ----
        if has_se:
            s = jnp.mean(y, axis=0, keepdims=True)       # (1, Cexp)
            h1 = jnp.dot(s.astype(jnp.bfloat16), w1_ref[...],
                         preferred_element_type=jnp.float32) + b1_ref[...]
            h1 = jnp.maximum(h1, 0.0)
            sc = jnp.dot(h1.astype(jnp.bfloat16), w2_ref[...],
                         preferred_element_type=jnp.float32) + b2_ref[...]
            y = y * _hardsigmoid(sc)

        # ---- project 1x1 conv + BN (no act) + residual ----
        out = jnp.dot(y.astype(jnp.bfloat16), wp_ref[...],
                      preferred_element_type=jnp.float32)
        out = out * pjs_ref[...] + pjb_ref[...]
        if has_res:
            out = out + x
        o_ref[...] = out

    out = pl.pallas_call(
        kernel,
        out_shape=jax.ShapeDtypeStruct((N, Ho * Wo, Cout), jnp.float32),
        grid=(N,),
        in_specs=in_specs,
        out_specs=pl.BlockSpec((None, Ho * Wo, Cout), lambda n: (n, 0, 0)),
        scratch_shapes=[pltpu.VMEM((Hp * Wpd, Cexp), jnp.float32),
                        pltpu.VMEM((Ho * Wo, Cexp), jnp.float32)],
        compiler_params=pltpu.CompilerParams(
            dimension_semantics=("parallel",),
            vmem_limit_bytes=VMEM_LIMIT_BYTES),
    )(*inputs)
    return out.reshape(N, Ho, Wo, Cout)


# ------------------------ fused classifier head kernel ----------------------
def _head_kernel(*args, apply_sigmoid, has_reagent):
    if has_reagent:
        (x_ref, r_ref, w1_ref, b1_ref, wmh_ref, wmr_ref, bm_ref,
         feat_ref, out_ref) = args
    else:
        x_ref, w1_ref, b1_ref, wmh_ref, bm_ref, feat_ref, out_ref = args
    x = x_ref[...]                                   # (N, HW, C)
    feats = jnp.mean(x, axis=1)                      # (N, C) global avg pool
    feat_ref[...] = feats
    h = jnp.dot(feats.astype(jnp.bfloat16), w1_ref[...],
                preferred_element_type=jnp.float32) + b1_ref[...]
    h = _hardswish(h)
    # TODO(synk): Dropout is identity here (eval mode); training-mode dropout not implemented.
    out = jnp.dot(h.astype(jnp.bfloat16), wmh_ref[...],
                  preferred_element_type=jnp.float32) + bm_ref[...]
    if has_reagent:
        out = out + jnp.dot(r_ref[...].astype(jnp.bfloat16), wmr_ref[...],
                            preferred_element_type=jnp.float32)
    if apply_sigmoid:
        out = 1.0 / (1.0 + jnp.exp(-out))
    out_ref[...] = out


def classifier_head(x_nhwc, reagent, fc1, fc_meta, apply_sigmoid):
    """avgpool -> fc1 -> Hardswish -> [concat reagent] -> fc_meta [-> sigmoid]."""
    N, H, W, C = x_nhwc.shape
    x = x_nhwc.reshape(N, H * W, C)
    LC = fc1["w"].shape[0]
    nc = fc_meta["w"].shape[0]
    w1 = fc1["w"].T.astype(jnp.bfloat16)             # (C, LC)
    b1 = fc1["b"].reshape(1, LC)
    wm = fc_meta["w"].T                               # (LC [+R], nc)
    bm = fc_meta["b"].reshape(1, nc)
    has_reagent = reagent is not None
    if has_reagent:
        # Fold the concat into a split matmul: out = h@Wm[:LC] + r@Wm[LC:] + b
        wmh = wm[:LC].astype(jnp.bfloat16)
        wmr = wm[LC:].astype(jnp.bfloat16)
        args = (x, reagent.astype(jnp.float32), w1, b1, wmh, wmr, bm)
    else:
        wmh = wm.astype(jnp.bfloat16)
        args = (x, w1, b1, wmh, bm)
    feats, out = pl.pallas_call(
        functools.partial(_head_kernel, apply_sigmoid=apply_sigmoid,
                          has_reagent=has_reagent),
        out_shape=(jax.ShapeDtypeStruct((N, C), jnp.float32),
                   jax.ShapeDtypeStruct((N, nc), jnp.float32)),
        compiler_params=pltpu.CompilerParams(vmem_limit_bytes=VMEM_LIMIT_BYTES),
    )(*args)
    return feats, out


# ----------------------------- parameters -----------------------------------
def init_conv_bn(key, cin, cout, k, groups=1):
    fan_out = cout * k * k // groups
    w = jax.random.normal(key, (cout, cin // groups, k, k), jnp.float32) * (2.0 / fan_out) ** 0.5
    return {
        "w": w,
        "gamma": jnp.ones((cout,), jnp.float32),
        "beta": jnp.zeros((cout,), jnp.float32),
        "mean": jnp.zeros((cout,), jnp.float32),
        "var": jnp.ones((cout,), jnp.float32),
    }


def init_linear(key, cin, cout):
    return {
        "w": jax.random.normal(key, (cout, cin), jnp.float32) * 0.01,
        "b": jnp.zeros((cout,), jnp.float32),
    }


def init_se(key, c, cs):
    k1, k2 = jax.random.split(key)
    return {
        "w1": jax.random.normal(k1, (cs, c, 1, 1), jnp.float32) * (2.0 / cs) ** 0.5,
        "b1": jnp.zeros((cs,), jnp.float32),
        "w2": jax.random.normal(k2, (c, cs, 1, 1), jnp.float32) * (2.0 / c) ** 0.5,
        "b2": jnp.zeros((c,), jnp.float32),
    }


def make_settings():
    """Small InvertedResidualConfig list (width_mult=1.0), channels divisible by 8."""
    def cfg(cin, k, cexp, cout, use_se, activation, stride):
        adj = lambda c: _make_divisible(c * 1.0, 8)
        return dict(cin=adj(cin), k=k, cexp=adj(cexp), cout=adj(cout),
                    use_se=use_se, use_hs=(activation == "HS"), stride=stride)
    return [
        cfg(16, 3, 16, 16, True, "RE", 2),   # no expand conv, SE, stride 2
        cfg(16, 3, 64, 24, False, "RE", 2),  # expand, stride 2
        cfg(24, 3, 88, 24, False, "HS", 1),  # hardswish, residual connection
    ]


def build_params(key, settings, last_channel, num_classes, reagents_num):
    keys = list(jax.random.split(key, 64))
    ki = iter(range(64))
    params = {}
    firstconv_out = settings[0]["cin"]
    params["stem"] = init_conv_bn(keys[next(ki)], 3, firstconv_out, 3)
    blocks = []
    for cnf in settings:
        bp = {}
        if cnf["cexp"] != cnf["cin"]:
            bp["expand"] = init_conv_bn(keys[next(ki)], cnf["cin"], cnf["cexp"], 1)
        bp["dw"] = init_conv_bn(keys[next(ki)], cnf["cexp"], cnf["cexp"], cnf["k"],
                                groups=cnf["cexp"])
        if cnf["use_se"]:
            cs = _make_divisible(cnf["cexp"] // 4, 8)
            bp["se"] = init_se(keys[next(ki)], cnf["cexp"], cs)
        bp["project"] = init_conv_bn(keys[next(ki)], cnf["cexp"], cnf["cout"], 1)
        blocks.append(bp)
    params["blocks"] = blocks
    last_in = settings[-1]["cout"]
    last_out = 6 * last_in
    params["lastconv"] = init_conv_bn(keys[next(ki)], last_in, last_out, 1)
    params["fc1"] = init_linear(keys[next(ki)], last_out, last_channel)
    params["fc_meta"] = init_linear(keys[next(ki)], last_channel + reagents_num, num_classes)
    return params


# ----------------------------- forward pass ---------------------------------
def mobilenet_v3_ec_forward(params, settings, x_nchw, reagent=None,
                            return_features=False, get_net_outputs=False):
    x = jnp.transpose(x_nchw, (0, 2, 3, 1)).astype(jnp.float32)  # NCHW -> NHWC

    # features
    x = conv_bn_act(x, params["stem"], k=3, stride=2, act="hardswish")
    for cnf, bp in zip(settings, params["blocks"]):
        x = inverted_residual_block(x, bp, cnf)       # fused block kernel
    x = conv_bn_act(x, params["lastconv"], 1, 1, "hardswish")

    # fused head: avgpool + fc1/hardswish + [reagent concat] + fc_meta
    apply_sigmoid = bool(return_features and get_net_outputs)
    feats, out = classifier_head(x, reagent, params["fc1"], params["fc_meta"],
                                 apply_sigmoid)
    if return_features and not get_net_outputs:
        return feats
    if return_features and get_net_outputs:
        return feats, out
    return out   # NOTE: no sigmoid in the default path, matching the PyTorch module


# ----------------------------- main ------------------------------------------
if __name__ == "__main__":
    key = jax.random.PRNGKey(0)
    k_params, k_x, k_r = jax.random.split(key, 3)

    settings = make_settings()
    last_channel = 32
    num_classes = 5
    reagents_num = 4

    params = build_params(k_params, settings, last_channel, num_classes, reagents_num)

    x = jax.random.normal(k_x, (2, 3, 16, 16), jnp.float32)        # NCHW like PyTorch
    reagent = jax.random.normal(k_r, (2, reagents_num), jnp.float32)

    fwd = jax.jit(lambda p, xx, rr: mobilenet_v3_ec_forward(p, settings, xx, rr))
    out = jax.block_until_ready(fwd(params, x, reagent))
    assert out.shape == (2, num_classes), out.shape
    assert bool(jnp.all(jnp.isfinite(out)))
    print("KERNEL_OK")
</pallas_src>

<mosaic_0001>
module attributes {stable_mosaic.version = 11 : i64} {
  func.func @_mm_kernel(%arg0: i32, %arg1: memref<128x27xf32, #tpu.memory_space<vmem>>, %arg2: memref<27x16xbf16, #tpu.memory_space<vmem>>, %arg3: memref<1x16xf32, #tpu.memory_space<vmem>>, %arg4: memref<1x16xf32, #tpu.memory_space<vmem>>, %arg5: memref<128x16xf32, #tpu.memory_space<vmem>>) attributes {dimension_semantics = [#tpu.dimension_semantics<parallel>], iteration_bounds = array<i64: 1>, scalar_prefetch = 0 : i64, scratch_operands = 0 : i64, tpu.core_type = #tpu.core_type<tc>, window_params = [{transform_indices = @transform_0, window_bounds = array<i64: 128, 27>}, {pipeline_mode = #tpu.pipeline_mode<synchronous>, transform_indices = @transform_1, window_bounds = array<i64: 27, 16>}, {pipeline_mode = #tpu.pipeline_mode<synchronous>, transform_indices = @transform_2, window_bounds = array<i64: 1, 16>}, {pipeline_mode = #tpu.pipeline_mode<synchronous>, transform_indices = @transform_3, window_bounds = array<i64: 1, 16>}, {transform_indices = @transform_4, window_bounds = array<i64: 128, 16>}]} {
    %c0 = arith.constant 0 : index
    %c0_0 = arith.constant 0 : index
    %0 = vector.load %arg1[%c0, %c0_0] : memref<128x27xf32, #tpu.memory_space<vmem>>, vector<128x27xf32>
    %1 = arith.truncf %0 : vector<128x27xf32> to vector<128x27xbf16>
    %c0_1 = arith.constant 0 : index
    %c0_2 = arith.constant 0 : index
    %2 = vector.load %arg2[%c0_1, %c0_2] : memref<27x16xbf16, #tpu.memory_space<vmem>>, vector<27x16xbf16>
    %cst = arith.constant dense<0.000000e+00> : vector<128x16xf32>
    %3 = tpu.matmul %1, %2, %cst {dimension_numbers = #tpu.dot_dimension_numbers<[1], [0], [0], [1], [0, 0, 1, 1], [], []>} : vector<128x27xbf16>, vector<27x16xbf16>, vector<128x16xf32> -> vector<128x16xf32>
    %c0_3 = arith.constant 0 : index
    %c0_4 = arith.constant 0 : index
    %4 = vector.load %arg3[%c0_3, %c0_4] : memref<1x16xf32, #tpu.memory_space<vmem>>, vector<1x16xf32>
    %5 = vector.broadcast %4 : vector<1x16xf32> to vector<128x16xf32>
    %6 = arith.mulf %3, %5 : vector<128x16xf32>
    %c0_5 = arith.constant 0 : index
    %c0_6 = arith.constant 0 : index
    %7 = vector.load %arg4[%c0_5, %c0_6] : memref<1x16xf32, #tpu.memory_space<vmem>>, vector<1x16xf32>
    %8 = vector.broadcast %7 : vector<1x16xf32> to vector<128x16xf32>
    %9 = arith.addf %6, %8 : vector<128x16xf32>
    %cst_7 = arith.constant 6.000000e+00 : f32
    %10 = vector.broadcast %cst_7 : f32 to vector<128x16xf32>
    %11 = arith.divf %9, %10 : vector<128x16xf32>
    %cst_8 = arith.constant 5.000000e-01 : f32
    %12 = vector.broadcast %cst_8 : f32 to vector<128x16xf32>
    %13 = arith.addf %11, %12 : vector<128x16xf32>
    %cst_9 = arith.constant 0.000000e+00 : f32
    %cst_10 = arith.constant 1.000000e+00 : f32
    %14 = vector.broadcast %cst_9 : f32 to vector<128x16xf32>
    %15 = arith.maximumf %14, %13 : vector<128x16xf32>
    %16 = vector.broadcast %cst_10 : f32 to vector<128x16xf32>
    %17 = arith.minimumf %16, %15 : vector<128x16xf32>
    %18 = arith.mulf %9, %17 : vector<128x16xf32>
    %c0_11 = arith.constant 0 : index
    %c0_12 = arith.constant 0 : index
    %19 = vector.load %arg5[%c0_11, %c0_12] : memref<128x16xf32, #tpu.memory_space<vmem>>, vector<128x16xf32>
    tpu.vector_store %arg5[%c0_11, %c0_12], %18 {strides = array<i32>} : memref<128x16xf32, #tpu.memory_space<vmem>>, vector<128x16xf32>,
    return
  }
  func.func @transform_0(%arg0: i32) -> (i32, i32) {
    %c0_i32 = arith.constant 0 : i32
    %c0_i32_0 = arith.constant 0 : i32
    return %arg0, %c0_i32 : i32, i32
  }
  func.func @transform_1(%arg0: i32) -> (i32, i32) {
    %c0_i32 = arith.constant 0 : i32
    %c0_i32_0 = arith.constant 0 : i32
    %c0_i32_1 = arith.constant 0 : i32
    return %c0_i32, %c0_i32_0 : i32, i32
  }
  func.func @transform_2(%arg0: i32) -> (i32, i32) {
    %c0_i32 = arith.constant 0 : i32
    %c0_i32_0 = arith.constant 0 : i32
    %c0_i32_1 = arith.constant 0 : i32
    return %c0_i32, %c0_i32_0 : i32, i32
  }
  func.func @transform_3(%arg0: i32) -> (i32, i32) {
    %c0_i32 = arith.constant 0 : i32
    %c0_i32_0 = arith.constant 0 : i32
    %c0_i32_1 = arith.constant 0 : i32
    return %c0_i32, %c0_i32_0 : i32, i32
  }
  func.func @transform_4(%arg0: i32) -> (i32, i32) {
    %c0_i32 = arith.constant 0 : i32
    %c0_i32_0 = arith.constant 0 : i32
    return %arg0, %c0_i32 : i32, i32
  }
}

module attributes {stable_mosaic.version = 11 : i64} {
  func.func @kernel(%arg0: i32, %arg1: memref<1x64x16xf32, #tpu.memory_space<vmem>>, %arg2: memref<9x16xf32, #tpu.memory_space<vmem>>, %arg3: memref<1x16xf32, #tpu.memory_space<vmem>>, %arg4: memref<1x16xf32, #tpu.memory_space<vmem>>, %arg5: memref<16x8xbf16, #tpu.memory_space<vmem>>, %arg6: memref<1x8xf32, #tpu.memory_space<vmem>>, %arg7: memref<8x16xbf16, #tpu.memory_space<vmem>>, %arg8: memref<1x16xf32, #tpu.memory_space<vmem>>, %arg9: memref<16x16xbf16, #tpu.memory_space<vmem>>, %arg10: memref<1x16xf32, #tpu.memory_space<vmem>>, %arg11: memref<1x16xf32, #tpu.memory_space<vmem>>, %arg12: memref<1x16x16xf32, #tpu.memory_space<vmem>>, %arg13: memref<100x16xf32, #tpu.memory_space<vmem>>, %arg14: memref<16x16xf32, #tpu.memory_space<vmem>>) attributes {dimension_semantics = [#tpu.dimension_semantics<parallel>], iteration_bounds = array<i64: 2>, scalar_prefetch = 0 : i64, scratch_operands = 2 : i64, tpu.core_type = #tpu.core_type<tc>, window_params = [{transform_indices = @transform_0, window_bounds = array<i64: 1, 64, 16>}, {pipeline_mode = #tpu.pipeline_mode<synchronous>, transform_indices = @transform_1, window_bounds = array<i64: 9, 16>}, {pipeline_mode = #tpu.pipeline_mode<synchronous>, transform_indices = @transform_2, window_bounds = array<i64: 1, 16>}, {pipeline_mode = #tpu.pipeline_mode<synchronous>, transform_indices = @transform_3, window_bounds = array<i64: 1, 16>}, {pipeline_mode = #tpu.pipeline_mode<synchronous>, transform_indices = @transform_4, window_bounds = array<i64: 16, 8>}, {pipeline_mode = #tpu.pipeline_mode<synchronous>, transform_indices = @transform_5, window_bounds = array<i64: 1, 8>}, {pipeline_mode = #tpu.pipeline_mode<synchronous>, transform_indices = @transform_6, window_bounds = array<i64: 8, 16>}, {pipeline_mode = #tpu.pipeline_mode<synchronous>, transform_indices = @transform_7, window_bounds = array<i64: 1, 16>}, {pipeline_mode = #tpu.pipeline_mode<synchronous>, transform_indices = @transform_8, window_bounds = array<i64: 16, 16>}, {pipeline_mode = #tpu.pipeline_mode<synchronous>, transform_indices = @transform_9, window_bounds = array<i64: 1, 16>}, {pipeline_mode = #tpu.pipeline_mode<synchronous>, transform_indices = @transform_10, window_bounds = array<i64: 1, 16>}, {transform_indices = @transform_11, window_bounds = array<i64: 1, 16, 16>}]} {
    %c0 = arith.constant 0 : index
    %c0_0 = arith.constant 0 : index
    %c0_1 = arith.constant 0 : index
    %0 = vector.load %arg1[%c0, %c0_0, %c0_1] : memref<1x64x16xf32, #tpu.memory_space<vmem>>, vector<1x64x16xf32>
    %1 = vector.shape_cast %0 : vector<1x64x16xf32> to vector<64x16xf32>
    %cst = arith.constant 0.000000e+00 : f32
    %2 = vector.broadcast %cst : f32 to vector<100x16xf32>
    %c0_2 = arith.constant 0 : index
    %c0_3 = arith.constant 0 : index
    %3 = vector.load %arg13[%c0_2, %c0_3] : memref<100x16xf32, #tpu.memory_space<vmem>>, vector<100x16xf32>
    tpu.vector_store %arg13[%c0_2, %c0_3], %2 {strides = array<i32>} : memref<100x16xf32, #tpu.memory_space<vmem>>, vector<100x16xf32>,
    %4 = vector.extract_strided_slice %1 {offsets = [0, 0], sizes = [8, 16], strides = [1, 1]} : vector<64x16xf32> to vector<8x16xf32>
    %c11 = arith.constant 11 : index
    %c0_4 = arith.constant 0 : index
    %5 = vector.load %arg13[%c11, %c0_4] : memref<100x16xf32, #tpu.memory_space<vmem>>, vector<8x16xf32>
    tpu.vector_store %arg13[%c11, %c0_4], %4 {strides = array<i32>} : memref<100x16xf32, #tpu.memory_space<vmem>>, vector<8x16xf32>,
    %6 = vector.extract_strided_slice %1 {offsets = [8, 0], sizes = [8, 16], strides = [1, 1]} : vector<64x16xf32> to vector<8x16xf32>
    %c21 = arith.constant 21 : index
    %c0_5 = arith.constant 0 : index
    %7 = vector.load %arg13[%c21, %c0_5] : memref<100x16xf32, #tpu.memory_space<vmem>>, vector<8x16xf32>
    tpu.vector_store %arg13[%c21, %c0_5], %6 {strides = array<i32>} : memref<100x16xf32, #tpu.memory_space<vmem>>, vector<8x16xf32>,
    %8 = vector.extract_strided_slice %1 {offsets = [16, 0], sizes = [8, 16], strides = [1, 1]} : vector<64x16xf32> to vector<8x16xf32>
    %c31 = arith.constant 31 : index
    %c0_6 = arith.constant 0 : index
    %9 = vector.load %arg13[%c31, %c0_6] : memref<100x16xf32, #tpu.memory_space<vmem>>, vector<8x16xf32>
    tpu.vector_store %arg13[%c31, %c0_6], %8 {strides = array<i32>} : memref<100x16xf32, #tpu.memory_space<vmem>>, vector<8x16xf32>,
    %10 = vector.extract_strided_slice %1 {offsets = [24, 0], sizes = [8, 16], strides = [1, 1]} : vector<64x16xf32> to vector<8x16xf32>
    %c41 = arith.constant 41 : index
    %c0_7 = arith.constant 0 : index
    %11 = vector.load %arg13[%c41, %c0_7] : memref<100x16xf32, #tpu.memory_space<vmem>>, vector<8x16xf32>
    tpu.vector_store %arg13[%c41, %c0_7], %10 {strides = array<i32>} : memref<100x16xf32, #tpu.memory_space<vmem>>, vector<8x16xf32>,
    %12 = vector.extract_strided_slice %1 {offsets = [32, 0], sizes = [8, 16], strides = [1, 1]} : vector<64x16xf32> to vector<8x16xf32>
    %c51 = arith.constant 51 : index
    %c0_8 = arith.constant 0 : index
    %13 = vector.load %arg13[%c51, %c0_8] : memref<100x16xf32, #tpu.memory_space<vmem>>, vector<8x16xf32>
    tpu.vector_store %arg13[%c51, %c0_8], %12 {strides = array<i32>} : memref<100x16xf32, #tpu.memory_space<vmem>>, vector<8x16xf32>,
    %14 = vector.extract_strided_slice %1 {offsets = [40, 0], sizes = [8, 16], strides = [1, 1]} : vector<64x16xf32> to vector<8x16xf32>
    %c61 = arith.constant 61 : index
    %c0_9 = arith.constant 0 : index
    %15 = vector.load %arg13[%c61, %c0_9] : memref<100x16xf32, #tpu.memory_space<vmem>>, vector<8x16xf32>
    tpu.vector_store %arg13[%c61, %c0_9], %14 {strides = array<i32>} : memref<100x16xf32, #tpu.memory_space<vmem>>, vector<8x16xf32>,
    %16 = vector.extract_strided_slice %1 {offsets = [48, 0], sizes = [8, 16], strides = [1, 1]} : vector<64x16xf32> to vector<8x16xf32>
    %c71 = arith.constant 71 : index
    %c0_10 = arith.constant 0 : index
    %17 = vector.load %arg13[%c71, %c0_10] : memref<100x16xf32, #tpu.memory_space<vmem>>, vector<8x16xf32>
    tpu.vector_store %arg13[%c71, %c0_10], %16 {strides = array<i32>} : memref<100x16xf32, #tpu.memory_space<vmem>>, vector<8x16xf32>,
    %18 = vector.extract_strided_slice %1 {offsets = [56, 0], sizes = [8, 16], strides = [1, 1]} : vector<64x16xf32> to vector<8x16xf32>
    %c81 = arith.constant 81 : index
    %c0_11 = arith.constant 0 : index
    %19 = vector.load %arg13[%c81, %c0_11] : memref<100x16xf32, #tpu.memory_space<vmem>>, vector<8x16xf32>
    tpu.vector_store %arg13[%c81, %c0_11], %18 {strides = array<i32>} : memref<100x16xf32, #tpu.memory_space<vmem>>, vector<8x16xf32>,
    %c0_12 = arith.constant 0 : index
    %c0_13 = arith.constant 0 : index
    %20 = vector.load %arg2[%c0_12, %c0_13] : memref<9x16xf32, #tpu.memory_space<vmem>>, vector<9x16xf32>
    %c0_14 = arith.constant 0 : index
    %c0_15 = arith.constant 0 : index
    %21 = vector.load %arg3[%c0_14, %c0_15] : memref<1x16xf32, #tpu.memory_space<vmem>>, vector<1x16xf32>
    %c0_16 = arith.constant 0 : index
    %c0_17 = arith.constant 0 : index
    %22 = vector.load %arg4[%c0_16, %c0_17] : memref<1x16xf32, #tpu.memory_space<vmem>>, vector<1x16xf32>
    %cst_18 = arith.constant 0.000000e+00 : f32
    %23 = vector.broadcast %cst_18 : f32 to vector<4x16xf32>
    %c0_19 = arith.constant 0 : index
    %c0_20 = arith.constant 0 : index
    %24 = tpu.strided_load %arg13[%c0_19, %c0_20] {strides = array<i32: 2, 1>} : memref<100x16xf32, #tpu.memory_space<vmem>>, vector<4x16xf32>
    %25 = vector.extract_strided_slice %20 {offsets = [0, 0], sizes = [1, 16], strides = [1, 1]} : vector<9x16xf32> to vector<1x16xf32>
    %26 = vector.broadcast %25 : vector<1x16xf32> to vector<4x16xf32>
    %27 = arith.mulf %24, %26 : vector<4x16xf32>
    %28 = arith.addf %23, %27 : vector<4x16xf32>
    %c1 = arith.constant 1 : index
    %c0_21 = arith.constant 0 : index
    %29 = tpu.strided_load %arg13[%c1, %c0_21] {strides = array<i32: 2, 1>} : memref<100x16xf32, #tpu.memory_space<vmem>>, vector<4x16xf32>
    %30 = vector.extract_strided_slice %20 {offsets = [1, 0], sizes = [1, 16], strides = [1, 1]} : vector<9x16xf32> to vector<1x16xf32>
    %31 = vector.broadcast %30 : vector<1x16xf32> to vector<4x16xf32>
    %32 = arith.mulf %29, %31 : vector<4x16xf32>
    %33 = arith.addf %28, %32 : vector<4x16xf32>
    %c2 = arith.constant 2 : index
    %c0_22 = arith.constant 0 : index
    %34 = tpu.strided_load %arg13[%c2, %c0_22] {strides = array<i32: 2, 1>} : memref<100x16xf32, #tpu.memory_space<vmem>>, vector<4x16xf32>
    %35 = vector.extract_strided_slice %20 {offsets = [2, 0], sizes = [1, 16], strides = [1, 1]} : vector<9x16xf32> to vector<1x16xf32>
    %36 = vector.broadcast %35 : vector<1x16xf32> to vector<4x16xf32>
    %37 = arith.mulf %34, %36 : vector<4x16xf32>
    %38 = arith.addf %33, %37 : vector<4x16xf32>
    %c10 = arith.constant 10 : index
    %c0_23 = arith.constant 0 : index
    %39 = tpu.strided_load %arg13[%c10, %c0_23] {strides = array<i32: 2, 1>} : memref<100x16xf32, #tpu.memory_space<vmem>>, vector<4x16xf32>
    %40 = vector.extract_strided_slice %20 {offsets = [3, 0], sizes = [1, 16], strides = [1, 1]} : vector<9x16xf32> to vector<1x16xf32>
    %41 = vector.broadcast %40 : vector<1x16xf32> to vector<4x16xf32>
    %42 = arith.mulf %39, %41 : vector<4x16xf32>
    %43 = arith.addf %38, %42 : vector<4x16xf32>
    %c11_24 = arith.constant 11 : index
    %c0_25 = arith.constant 0 : index
    %44 = tpu.strided_load %arg13[%c11_24, %c0_25] {strides = array<i32: 2, 1>} : memref<100x16xf32, #tpu.memory_space<vmem>>, vector<4x16xf32>
    %45 = vector.extract_strided_slice %20 {offsets = [4, 0], sizes = [1, 16], strides = [1, 1]} : vector<9x16xf32> to vector<1x16xf32>
    %46 = vector.broadcast %45 : vector<1x16xf32> to vector<4x16xf32>
    %47 = arith.mulf %44, %46 : vector<4x16xf32>
    %48 = arith.addf %43, %47 : vector<4x16xf32>
    %c12 = arith.constant 12 : index
    %c0_26 = arith.constant 0 : index
    %49 = tpu.strided_load %arg13[%c12, %c0_26] {strides = array<i32: 2, 1>} : memref<100x16xf32, #tpu.memory_space<vmem>>, vector<4x16xf32>
    %50 = vector.extract_strided_slice %20 {offsets = [5, 0], sizes = [1, 16], strides = [1, 1]} : vector<9x16xf32> to vector<1x16xf32>
    %51 = vector.broadcast %50 : vector<1x16xf32> to vector<4x16xf32>
    %52 = arith.mulf %49, %51 : vector<4x16xf32>
    %53 = arith.addf %48, %52 : vector<4x16xf32>
    %c20 = arith.constant 20 : index
    %c0_27 = arith.constant 0 : index
    %54 = tpu.strided_load %arg13[%c20, %c0_27] {strides = array<i32: 2, 1>} : memref<100x16xf32, #tpu.memory_space<vmem>>, vector<4x16xf32>
    %55 = vector.extract_strided_slice %20 {offsets = [6, 0], sizes = [1, 16], strides = [1, 1]} : vector<9x16xf32> to vector<1x16xf32>
    %56 = vector.broadcast %55 : vector<1x16xf32> to vector<4x16xf32>
    %57 = arith.mulf %54, %56 : vector<4x16xf32>
    %58 = arith.addf %53, %57 : vector<4x16xf32>
    %c21_28 = arith.constant 21 : index
    %c0_29 = arith.constant 0 : index
    %59 = tpu.strided_load %arg13[%c21_28, %c0_29] {strides = array<i32: 2, 1>} : memref<100x16xf32, #tpu.memory_space<vmem>>, vector<4x16xf32>
    %60 = vector.extract_strided_slice %20 {offsets = [7, 0], sizes = [1, 16], strides = [1, 1]} : vector<9x16xf32> to vector<1x16xf32>
    %61 = vector.broadcast %60 : vector<1x16xf32> to vector<4x16xf32>
    %62 = arith.mulf %59, %61 : vector<4x16xf32>
    %63 = arith.addf %58, %62 : vector<4x16xf32>
    %c22 = arith.constant 22 : index
    %c0_30 = arith.constant 0 : index
    %64 = tpu.strided_load %arg13[%c22, %c0_30] {strides = array<i32: 2, 1>} : memref<100x16xf32, #tpu.memory_space<vmem>>, vector<4x16xf32>
    %65 = vector.extract_strided_slice %20 {offsets = [8, 0], sizes = [1, 16], strides = [1, 1]} : vector<9x16xf32> to vector<1x16xf32>
    %66 = vector.broadcast %65 : vector<1x16xf32> to vector<4x16xf32>
    %67 = arith.mulf %64, %66 : vector<4x16xf32>
    %68 = arith.addf %63, %67 : vector<4x16xf32>
    %69 = vector.broadcast %21 : vector<1x16xf32> to vector<4x16xf32>
    %70 = arith.mulf %68, %69 : vector<4x16xf32>
    %71 = vector.broadcast %22 : vector<1x16xf32> to vector<4x16xf32>
    %72 = arith.addf %70, %71 : vector<4x16xf32>
    %cst_31 = arith.constant 0.000000e+00 : f32
    %73 = vector.broadcast %cst_31 : f32 to vector<4x16xf32>
    %74 = arith.maximumf %72, %73 : vector<4x16xf32>
    %c0_32 = arith.constant 0 : index
    %c0_33 = arith.constant 0 : index
    %75 = vector.load %arg14[%c0_32, %c0_33] : memref<16x16xf32, #tpu.memory_space<vmem>>, vector<4x16xf32>
    tpu.vector_store %arg14[%c0_32, %c0_33], %74 {strides = array<i32>} : memref<16x16xf32, #tpu.memory_space<vmem>>, vector<4x16xf32>,
    %cst_34 = arith.constant 0.000000e+00 : f32
    %76 = vector.broadcast %cst_34 : f32 to vector<4x16xf32>
    %c20_35 = arith.constant 20 : index
    %c0_36 = arith.constant 0 : index
    %77 = tpu.strided_load %arg13[%c20_35, %c0_36] {strides = array<i32: 2, 1>} : memref<100x16xf32, #tpu.memory_space<vmem>>, vector<4x16xf32>
    %78 = vector.extract_strided_slice %20 {offsets = [0, 0], sizes = [1, 16], strides = [1, 1]} : vector<9x16xf32> to vector<1x16xf32>
    %79 = vector.broadcast %78 : vector<1x16xf32> to vector<4x16xf32>
    %80 = arith.mulf %77, %79 : vector<4x16xf32>
    %81 = arith.addf %76, %80 : vector<4x16xf32>
    %c21_37 = arith.constant 21 : index
    %c0_38 = arith.constant 0 : index
    %82 = tpu.strided_load %arg13[%c21_37, %c0_38] {strides = array<i32: 2, 1>} : memref<100x16xf32, #tpu.memory_space<vmem>>, vector<4x16xf32>
    %83 = vector.extract_strided_slice %20 {offsets = [1, 0], sizes = [1, 16], strides = [1, 1]} : vector<9x16xf32> to vector<1x16xf32>
    %84 = vector.broadcast %83 : vector<1x16xf32> to vector<4x16xf32>
    %85 = arith.mulf %82, %84 : vector<4x16xf32>
    %86 = arith.addf %81, %85 : vector<4x16xf32>
    %c22_39 = arith.constant 22 : index
    %c0_40 = arith.constant 0 : index
    %87 = tpu.strided_load %arg13[%c22_39, %c0_40] {strides = array<i32: 2, 1>} : memref<100x16xf32, #tpu.memory_space<vmem>>, vector<4x16xf32>
    %88 = vector.extract_strided_slice %20 {offsets = [2, 0], sizes = [1, 16], strides = [1, 1]} : vector<9x16xf32> to vector<1x16xf32>
    %89 = vector.broadcast %88 : vector<1x16xf32> to vector<4x16xf32>
    %90 = arith.mulf %87, %89 : vector<4x16xf32>
    %91 = arith.addf %86, %90 : vector<4x16xf32>
    %c30 = arith.constant 30 : index
    %c0_41 = arith.constant 0 : index
    %92 = tpu.strided_load %arg13[%c30, %c0_41] {strides = array<i32: 2, 1>} : memref<100x16xf32, #tpu.memory_space<vmem>>, vector<4x16xf32>
    %93 = vector.extract_strided_slice %20 {offsets = [3, 0], sizes = [1, 16], strides = [1, 1]} : vector<9x16xf32> to vector<1x16xf32>
    %94 = vector.broadcast %93 : vector<1x16xf32> to vector<4x16xf32>
    %95 = arith.mulf %92, %94 : vector<4x16xf32>
    %96 = arith.addf %91, %95 : vector<4x16xf32>
    %c31_42 = arith.constant 31 : index
    %c0_43 = arith.constant 0 : index
    %97 = tpu.strided_load %arg13[%c31_42, %c0_43] {strides = array<i32: 2, 1>} : memref<100x16xf32, #tpu.memory_space<vmem>>, vector<4x16xf32>
    %98 = vector.extract_strided_slice %20 {offsets = [4, 0], sizes = [1, 16], strides = [1, 1]} : vector<9x16xf32> to vector<1x16xf32>
    %99 = vector.broadcast %98 : vector<1x16xf32> to vector<4x16xf32>
    %100 = arith.mulf %97, %99 : vector<4x16xf32>
    %101 = arith.addf %96, %100 : vector<4x16xf32>
    %c32 = arith.constant 32 : index
    %c0_44 = arith.constant 0 : index
    %102 = tpu.strided_load %arg13[%c32, %c0_44] {strides = array<i32: 2, 1>} : memref<100x16xf32, #tpu.memory_space<vmem>>, vector<4x16xf32>
    %103 = vector.extract_strided_slice %20 {offsets = [5, 0], sizes = [1, 16], strides = [1, 1]} : vector<9x16xf32> to vector<1x16xf32>
    %104 = vector.broadcast %103 : vector<1x16xf32> to vector<4x16xf32>
    %105 = arith.mulf %102, %104 : vector<4x16xf32>
    %106 = arith.addf %101, %105 : vector<4x16xf32>
    %c40 = arith.constant 40 : index
    %c0_45 = arith.constant 0 : index
    %107 = tpu.strided_load %arg13[%c40, %c0_45] {strides = array<i32: 2, 1>} : memref<100x16xf32, #tpu.memory_space<vmem>>, vector<4x16xf32>
    %108 = vector.extract_strided_slice %20 {offsets = [6, 0], sizes = [1, 16], strides = [1, 1]} : vector<9x16xf32> to vector<1x16xf32>
    %109 = vector.broadcast %108 : vector<1x16xf32> to vector<4x16xf32>
    %110 = arith.mulf %107, %109 : vector<4x16xf32>
    %111 = arith.addf %106, %110 : vector<4x16xf32>
    %c41_46 = arith.constant 41 : index
    %c0_47 = arith.constant 0 : index
    %112 = tpu.strided_load %arg13[%c41_46, %c0_47] {strides = array<i32: 2, 1>} : memref<100x16xf32, #tpu.memory_space<vmem>>, vector<4x16xf32>
    %113 = vector.extract_strided_slice %20 {offsets = [7, 0], sizes = [1, 16], strides = [1, 1]} : vector<9x16xf32> to vector<1x16xf32>
    %114 = vector.broadcast %113 : vector<1x16xf32> to vector<4x16xf32>
    %115 = arith.mulf %112, %114 : vector<4x16xf32>
    %116 = arith.addf %111, %115 : vector<4x16xf32>
    %c42 = arith.constant 42 : index
    %c0_48 = arith.constant 0 : index
    %117 = tpu.strided_load %arg13[%c42, %c0_48] {strides = array<i32: 2, 1>} : memref<100x16xf32, #tpu.memory_space<vmem>>, vector<4x16xf32>
    %118 = vector.extract_strided_slice %20 {offsets = [8, 0], sizes = [1, 16], strides = [1, 1]} : vector<9x16xf32> to vector<1x16xf32>
    %119 = vector.broadcast %118 : vector<1x16xf32> to vector<4x16xf32>
    %120 = arith.mulf %117, %119 : vector<4x16xf32>
    %121 = arith.addf %116, %120 : vector<4x16xf32>
    %122 = vector.broadcast %21 : vector<1x16xf32> to vector<4x16xf32>
    %123 = arith.mulf %121, %122 : vector<4x16xf32>
    %124 = vector.broadcast %22 : vector<1x16xf32> to vector<4x16xf32>
    %125 = arith.addf %123, %124 : vector<4x16xf32>
    %cst_49 = arith.constant 0.000000e+00 : f32
    %126 = vector.broadcast %cst_49 : f32 to vector<4x16xf32>
    %127 = arith.maximumf %125, %126 : vector<4x16xf32>
    %c4 = arith.constant 4 : index
    %c0_50 = arith.constant 0 : index
    %128 = vector.load %arg14[%c4, %c0_50] : memref<16x16xf32, #tpu.memory_space<vmem>>, vector<4x16xf32>
    tpu.vector_store %arg14[%c4, %c0_50], %127 {strides = array<i32>} : memref<16x16xf32, #tpu.memory_space<vmem>>, vector<4x16xf32>,
    %cst_51 = arith.constant 0.000000e+00 : f32
    %129 = vector.broadcast %cst_51 : f32 to vector<4x16xf32>
    %c40_52 = arith.constant 40 : index
    %c0_53 = arith.constant 0 : index
    %130 = tpu.strided_load %arg13[%c40_52, %c0_53] {strides = array<i32: 2, 1>} : memref<100x16xf32, #tpu.memory_space<vmem>>, vector<4x16xf32>
    %131 = vector.extract_strided_slice %20 {offsets = [0, 0], sizes = [1, 16], strides = [1, 1]} : vector<9x16xf32> to vector<1x16xf32>
    %132 = vector.broadcast %131 : vector<1x16xf32> to vector<4x16xf32>
    %133 = arith.mulf %130, %132 : vector<4x16xf32>
    %134 = arith.addf %129, %133 : vector<4x16xf32>
    %c41_54 = arith.constant 41 : index
    %c0_55 = arith.constant 0 : index
    %135 = tpu.strided_load %arg13[%c41_54, %c0_55] {strides = array<i32: 2, 1>} : memref<100x16xf32, #tpu.memory_space<vmem>>, vector<4x16xf32>
    %136 = vector.extract_strided_slice %20 {offsets = [1, 0], sizes = [1, 16], strides = [1, 1]} : vector<9x16xf32> to vector<1x16xf32>
    %137 = vector.broadcast %136 : vector<1x16xf32> to vector<4x16xf32>
    %138 = arith.mulf %135, %137 : vector<4x16xf32>
    %139 = arith.addf %134, %138 : vector<4x16xf32>
    %c42_56 = arith.constant 42 : index
    %c0_57 = arith.constant 0 : index
    %140 = tpu.strided_load %arg13[%c42_56, %c0_57] {strides = array<i32: 2, 1>} : memref<100x16xf32, #tpu.memory_space<vmem>>, vector<4x16xf32>
    %141 = vector.extract_strided_slice %20 {offsets = [2, 0], sizes = [1, 16], strides = [1, 1]} : vector<9x16xf32> to vector<1x16xf32>
    %142 = vector.broadcast %141 : vector<1x16xf32> to vector<4x16xf32>
    %143 = arith.mulf %140, %142 : vector<4x16xf32>
    %144 = arith.addf %139, %143 : vector<4x16xf32>
    %c50 = arith.constant 50 : index
    %c0_58 = arith.constant 0 : index
    %145 = tpu.strided_load %arg13[%c50, %c0_58] {strides = array<i32: 2, 1>} : memref<100x16xf32, #tpu.memory_space<vmem>>, vector<4x16xf32>
    %146 = vector.extract_strided_slice %20 {offsets = [3, 0], sizes = [1, 16], strides = [1, 1]} : vector<9x16xf32> to vector<1x16xf32>
    %147 = vector.broadcast %146 : vector<1x16xf32> to vector<4x16xf32>
    %148 = arith.mulf %145, %147 : vector<4x16xf32>
    %149 = arith.addf %144, %148 : vector<4x16xf32>
    %c51_59 = arith.constant 51 : index
    %c0_60 = arith.constant 0 : index
    %150 = tpu.strided_load %arg13[%c51_59, %c0_60] {strides = array<i32: 2, 1>} : memref<100x16xf32, #tpu.memory_space<vmem>>, vector<4x16xf32>
    %151 = vector.extract_strided_slice %20 {offsets = [4, 0], sizes = [1, 16], strides = [1, 1]} : vector<9x16xf32> to vector<1x16xf32>
    %152 = vector.broadcast %151 : vector<1x16xf32> to vector<4x16xf32>
    %153 = arith.mulf %150, %152 : vector<4x16xf32>
    %154 = arith.addf %149, %153 : vector<4x16xf32>
    %c52 = arith.constant 52 : index
    %c0_61 = arith.constant 0 : index
    %155 = tpu.strided_load %arg13[%c52, %c0_61] {strides = array<i32: 2, 1>} : memref<100x16xf32, #tpu.memory_space<vmem>>, vector<4x16xf32>
    %156 = vector.extract_strided_slice %20 {offsets = [5, 0], sizes = [1, 16], strides = [1, 1]} : vector<9x16xf32> to vector<1x16xf32>
    %157 = vector.broadcast %156 : vector<1x16xf32> to vector<4x16xf32>
    %158 = arith.mulf %155, %157 : vector<4x16xf32>
    %159 = arith.addf %154, %158 : vector<4x16xf32>
    %c60 = arith.constant 60 : index
    %c0_62 = arith.constant 0 : index
    %160 = tpu.strided_load %arg13[%c60, %c0_62] {strides = array<i32: 2, 1>} : memref<100x16xf32, #tpu.memory_space<vmem>>, vector<4x16xf32>
    %161 = vector.extract_strided_slice %20 {offsets = [6, 0], sizes = [1, 16], strides = [1, 1]} : vector<9x16xf32> to vector<1x16xf32>
    %162 = vector.broadcast %161 : vector<1x16xf32> to vector<4x16xf32>
    %163 = arith.mulf %160, %162 : vector<4x16xf32>
    %164 = arith.addf %159, %163 : vector<4x16xf32>
    %c61_63 = arith.constant 61 : index
    %c0_64 = arith.constant 0 : index
    %165 = tpu.strided_load %arg13[%c61_63, %c0_64] {strides = array<i32: 2, 1>} : memref<100x16xf32, #tpu.memory_space<vmem>>, vector<4x16xf32>
    %166 = vector.extract_strided_slice %20 {offsets = [7, 0], sizes = [1, 16], strides = [1, 1]} : vector<9x16xf32> to vector<1x16xf32>
    %167 = vector.broadcast %166 : vector<1x16xf32> to vector<4x16xf32>
    %168 = arith.mulf %165, %167 : vector<4x16xf32>
    %169 = arith.addf %164, %168 : vector<4x16xf32>
    %c62 = arith.constant 62 : index
    %c0_65 = arith.constant 0 : index
    %170 = tpu.strided_load %arg13[%c62, %c0_65] {strides = array<i32: 2, 1>} : memref<100x16xf32, #tpu.memory_space<vmem>>, vector<4x16xf32>
    %171 = vector.extract_strided_slice %20 {offsets = [8, 0], sizes = [1, 16], strides = [1, 1]} : vector<9x16xf32> to vector<1x16xf32>
    %172 = vector.broadcast %171 : vector<1x16xf32> to vector<4x16xf32>
    %173 = arith.mulf %170, %172 : vector<4x16xf32>
    %174 = arith.addf %169, %173 : vector<4x16xf32>
    %175 = vector.broadcast %21 : vector<1x16xf32> to vector<4x16xf32>
    %176 = arith.mulf %174, %175 : vector<4x16xf32>
    %177 = vector.broadcast %22 : vector<1x16xf32> to vector<4x16xf32>
    %178 = arith.addf %176, %177 : vector<4x16xf32>
    %cst_66 = arith.constant 0.000000e+00 : f32
    %179 = vector.broadcast %cst_66 : f32 to vector<4x16xf32>
    %180 = arith.maximumf %178, %179 : vector<4x16xf32>
    %c8 = arith.constant 8 : index
    %c0_67 = arith.constant 0 : index
    %181 = vector.load %arg14[%c8, %c0_67] : memref<16x16xf32, #tpu.memory_space<vmem>>, vector<4x16xf32>
    tpu.vector_store %arg14[%c8, %c0_67], %180 {strides = array<i32>} : memref<16x16xf32, #tpu.memory_space<vmem>>, vector<4x16xf32>,
    %cst_68 = arith.constant 0.000000e+00 : f32
    %182 = vector.broadcast %cst_68 : f32 to vector<4x16xf32>
    %c60_69 = arith.constant 60 : index
    %c0_70 = arith.constant 0 : index
    %183 = tpu.strided_load %arg13[%c60_69, %c0_70] {strides = array<i32: 2, 1>} : memref<100x16xf32, #tpu.memory_space<vmem>>, vector<4x16xf32>
    %184 = vector.extract_strided_slice %20 {offsets = [0, 0], sizes = [1, 16], strides = [1, 1]} : vector<9x16xf32> to vector<1x16xf32>
    %185 = vector.broadcast %184 : vector<1x16xf32> to vector<4x16xf32>
    %186 = arith.mulf %183, %185 : vector<4x16xf32>
    %187 = arith.addf %182, %186 : vector<4x16xf32>
    %c61_71 = arith.constant 61 : index
    %c0_72 = arith.constant 0 : index
    %188 = tpu.strided_load %arg13[%c61_71, %c0_72] {strides = array<i32: 2, 1>} : memref<100x16xf32, #tpu.memory_space<vmem>>, vector<4x16xf32>
    %189 = vector.extract_strided_slice %20 {offsets = [1, 0], sizes = [1, 16], strides = [1, 1]} : vector<9x16xf32> to vector<1x16xf32>
    %190 = vector.broadcast %189 : vector<1x16xf32> to vector<4x16xf32>
    %191 = arith.mulf %188, %190 : vector<4x16xf32>
    %192 = arith.addf %187, %191 : vector<4x16xf32>
    %c62_73 = arith.constant 62 : index
    %c0_74 = arith.constant 0 : index
    %193 = tpu.strided_load %arg13[%c62_73, %c0_74] {strides = array<i32: 2, 1>} : memref<100x16xf32, #tpu.memory_space<vmem>>, vector<4x16xf32>
    %194 = vector.extract_strided_slice %20 {offsets = [2, 0], sizes = [1, 16], strides = [1, 1]} : vector<9x16xf32> to vector<1x16xf32>
    %195 = vector.broadcast %194 : vector<1x16xf32> to vector<4x16xf32>
    %196 = arith.mulf %193, %195 : vector<4x16xf32>
    %197 = arith.addf %192, %196 : vector<4x16xf32>
    %c70 = arith.constant 70 : index
    %c0_75 = arith.constant 0 : index
    %198 = tpu.strided_load %arg13[%c70, %c0_75] {strides = array<i32: 2, 1>} : memref<100x16xf32, #tpu.memory_space<vmem>>, vector<4x16xf32>
    %199 = vector.extract_strided_slice %20 {offsets = [3, 0], sizes = [1, 16], strides = [1, 1]} : vector<9x16xf32> to vector<1x16xf32>
    %200 = vector.broadcast %199 : vector<1x16xf32> to vector<4x16xf32>
    %201 = arith.mulf %198, %200 : vector<4x16xf32>
    %202 = arith.addf %197, %201 : vector<4x16xf32>
    %c71_76 = arith.constant 71 : index
    %c0_77 = arith.constant 0 : index
    %203 = tpu.strided_load %arg13[%c71_76, %c0_77] {strides = array<i32: 2, 1>} : memref<100x16xf32, #tpu.memory_space<vmem>>, vector<4x16xf32>
    %204 = vector.extract_strided_slice %20 {offsets = [4, 0], sizes = [1, 16], strides = [1, 1]} : vector<9x16xf32> to vector<1x16xf32>
    %205 = vector.broadcast %204 : vector<1x16xf32> to vector<4x16xf32>
    %206 = arith.mulf %203, %205 : vector<4x16xf32>
    %207 = arith.addf %202, %206 : vector<4x16xf32>
    %c72 = arith.constant 72 : index
    %c0_78 = arith.constant 0 : index
    %208 = tpu.strided_load %arg13[%c72, %c0_78] {strides = array<i32: 2, 1>} : memref<100x16xf32, #tpu.memory_space<vmem>>, vector<4x16xf32>
    %209 = vector.extract_strided_slice %20 {offsets = [5, 0], sizes = [1, 16], strides = [1, 1]} : vector<9x16xf32> to vector<1x16xf32>
    %210 = vector.broadcast %209 : vector<1x16xf32> to vector<4x16xf32>
    %211 = arith.mulf %208, %210 : vector<4x16xf32>
    %212 = arith.addf %207, %211 : vector<4x16xf32>
    %c80 = arith.constant 80 : index
    %c0_79 = arith.constant 0 : index
    %213 = tpu.strided_load %arg13[%c80, %c0_79] {strides = array<i32: 2, 1>} : memref<100x16xf32, #tpu.memory_space<vmem>>, vector<4x16xf32>
    %214 = vector.extract_strided_slice %20 {offsets = [6, 0], sizes = [1, 16], strides = [1, 1]} : vector<9x16xf32> to vector<1x16xf32>
    %215 = vector.broadcast %214 : vector<1x16xf32> to vector<4x16xf32>
    %216 = arith.mulf %213, %215 : vector<4x16xf32>
    %217 = arith.addf %212, %216 : vector<4x16xf32>
    %c81_80 = arith.constant 81 : index
    %c0_81 = arith.constant 0 : index
    %218 = tpu.strided_load %arg13[%c81_80, %c0_81] {strides = array<i32: 2, 1>} : memref<100x16xf32, #tpu.memory_space<vmem>>, vector<4x16xf32>
    %219 = vector.extract_strided_slice %20 {offsets = [7, 0], sizes = [1, 16], strides = [1, 1]} : vector<9x16xf32> to vector<1x16xf32>
    %220 = vector.broadcast %219 : vector<1x16xf32> to vector<4x16xf32>
    %221 = arith.mulf %218, %220 : vector<4x16xf32>
    %222 = arith.addf %217, %221 : vector<4x16xf32>
    %c82 = arith.constant 82 : index
    %c0_82 = arith.constant 0 : index
    %223 = tpu.strided_load %arg13[%c82, %c0_82] {strides = array<i32: 2, 1>} : memref<100x16xf32, #tpu.memory_space<vmem>>, vector<4x16xf32>
    %224 = vector.extract_strided_slice %20 {offsets = [8, 0], sizes = [1, 16], strides = [1, 1]} : vector<9x16xf32> to vector<1x16xf32>
    %225 = vector.broadcast %224 : vector<1x16xf32> to vector<4x16xf32>
    %226 = arith.mulf %223, %225 : vector<4x16xf32>
    %227 = arith.addf %222, %226 : vector<4x16xf32>
    %228 = vector.broadcast %21 : vector<1x16xf32> to vector<4x16xf32>
    %229 = arith.mulf %227, %228 : vector<4x16xf32>
    %230 = vector.broadcast %22 : vector<1x16xf32> to vector<4x16xf32>
    %231 = arith.addf %229, %230 : vector<4x16xf32>
    %cst_83 = arith.constant 0.000000e+00 : f32
    %232 = vector.broadcast %cst_83 : f32 to vector<4x16xf32>
    %233 = arith.maximumf %231, %232 : vector<4x16xf32>
    %c12_84 = arith.constant 12 : index
    %c0_85 = arith.constant 0 : index
    %234 = vector.load %arg14[%c12_84, %c0_85] : memref<16x16xf32, #tpu.memory_space<vmem>>, vector<4x16xf32>
    tpu.vector_store %arg14[%c12_84, %c0_85], %233 {strides = array<i32>} : memref<16x16xf32, #tpu.memory_space<vmem>>, vector<4x16xf32>,
    %c0_86 = arith.constant 0 : index
    %c0_87 = arith.constant 0 : index
    %235 = vector.load %arg14[%c0_86, %c0_87] : memref<16x16xf32, #tpu.memory_space<vmem>>, vector<16x16xf32>
    %cst_88 = arith.constant dense<0.000000e+00> : vector<16xf32>
    %236 = vector.multi_reduction <add>, %235, %cst_88 [0] : vector<16x16xf32> to vector<16xf32>
    %237 = vector.shape_cast %236 : vector<16xf32> to vector<1x16xf32>
    %cst_89 = arith.constant 1.600000e+01 : f32
    %238 = vector.broadcast %cst_89 : f32 to vector<1x16xf32>
    %239 = arith.divf %237, %238 : vector<1x16xf32>
    %240 = arith.truncf %239 : vector<1x16xf32> to vector<1x16xbf16>
    %c0_90 = arith.constant 0 : index
    %c0_91 = arith.constant 0 : index
    %241 = vector.load %arg5[%c0_90, %c0_91] : memref<16x8xbf16, #tpu.memory_space<vmem>>, vector<16x8xbf16>
    %cst_92 = arith.constant dense<0.000000e+00> : vector<1x8xf32>
    %242 = tpu.matmul %240, %241, %cst_92 {dimension_numbers = #tpu.dot_dimension_numbers<[1], [0], [0], [1], [0, 0, 1, 1], [], []>} : vector<1x16xbf16>, vector<16x8xbf16>, vector<1x8xf32> -> vector<1x8xf32>
    %c0_93 = arith.constant 0 : index
    %c0_94 = arith.constant 0 : index
    %243 = vector.load %arg6[%c0_93, %c0_94] : memref<1x8xf32, #tpu.memory_space<vmem>>, vector<1x8xf32>
    %244 = arith.addf %242, %243 : vector<1x8xf32>
    %cst_95 = arith.constant 0.000000e+00 : f32
    %245 = vector.broadcast %cst_95 : f32 to vector<1x8xf32>
    %246 = arith.maximumf %244, %245 : vector<1x8xf32>
    %247 = arith.truncf %246 : vector<1x8xf32> to vector<1x8xbf16>
    %c0_96 = arith.constant 0 : index
    %c0_97 = arith.constant 0 : index
    %248 = vector.load %arg7[%c0_96, %c0_97] : memref<8x16xbf16, #tpu.memory_space<vmem>>, vector<8x16xbf16>
    %cst_98 = arith.constant dense<0.000000e+00> : vector<1x16xf32>
    %249 = tpu.matmul %247, %248, %cst_98 {dimension_numbers = #tpu.dot_dimension_numbers<[1], [0], [0], [1], [0, 0, 1, 1], [], []>} : vector<1x8xbf16>, vector<8x16xbf16>, vector<1x16xf32> -> vector<1x16xf32>
    %c0_99 = arith.constant 0 : index
    %c0_100 = arith.constant 0 : index
    %250 = vector.load %arg8[%c0_99, %c0_100] : memref<1x16xf32, #tpu.memory_space<vmem>>, vector<1x16xf32>
    %251 = arith.addf %249, %250 : vector<1x16xf32>
    %cst_101 = arith.constant 6.000000e+00 : f32
    %252 = vector.broadcast %cst_101 : f32 to vector<1x16xf32>
    %253 = arith.divf %251, %252 : vector<1x16xf32>
    %cst_102 = arith.constant 5.000000e-01 : f32
    %254 = vector.broadcast %cst_102 : f32 to vector<1x16xf32>
    %255 = arith.addf %253, %254 : vector<1x16xf32>
    %cst_103 = arith.constant 0.000000e+00 : f32
    %cst_104 = arith.constant 1.000000e+00 : f32
    %256 = vector.broadcast %cst_103 : f32 to vector<1x16xf32>
    %257 = arith.maximumf %256, %255 : vector<1x16xf32>
    %258 = vector.broadcast %cst_104 : f32 to vector<1x16xf32>
    %259 = arith.minimumf %258, %257 : vector<1x16xf32>
    %260 = vector.broadcast %259 : vector<1x16xf32> to vector<16x16xf32>
    %261 = arith.mulf %235, %260 : vector<16x16xf32>
    %262 = arith.truncf %261 : vector<16x16xf32> to vector<16x16xbf16>
    %c0_105 = arith.constant 0 : index
    %c0_106 = arith.constant 0 : index
    %263 = vector.load %arg9[%c0_105, %c0_106] : memref<16x16xbf16, #tpu.memory_space<vmem>>, vector<16x16xbf16>
    %cst_107 = arith.constant dense<0.000000e+00> : vector<16x16xf32>
    %264 = tpu.matmul %262, %263, %cst_107 {dimension_numbers = #tpu.dot_dimension_numbers<[1], [0], [0], [1], [0, 0, 1, 1], [], []>} : vector<16x16xbf16>, vector<16x16xbf16>, vector<16x16xf32> -> vector<16x16xf32>
    %c0_108 = arith.constant 0 : index
    %c0_109 = arith.constant 0 : index
    %265 = vector.load %arg10[%c0_108, %c0_109] : memref<1x16xf32, #tpu.memory_space<vmem>>, vector<1x16xf32>
    %266 = vector.broadcast %265 : vector<1x16xf32> to vector<16x16xf32>
    %267 = arith.mulf %264, %266 : vector<16x16xf32>
    %c0_110 = arith.constant 0 : index
    %c0_111 = arith.constant 0 : index
    %268 = vector.load %arg11[%c0_110, %c0_111] : memref<1x16xf32, #tpu.memory_space<vmem>>, vector<1x16xf32>
    %269 = vector.broadcast %268 : vector<1x16xf32> to vector<16x16xf32>
    %270 = arith.addf %267, %269 : vector<16x16xf32>
    %c0_112 = arith.constant 0 : index
    %c0_113 = arith.constant 0 : index
    %c0_114 = arith.constant 0 : index
    %271 = vector.load %arg12[%c0_112, %c0_113, %c0_114] : memref<1x16x16xf32, #tpu.memory_space<vmem>>, vector<1x16x16xf32>
    %272 = vector.shape_cast %271 : vector<1x16x16xf32> to vector<16x16xf32>
    %273 = vector.shape_cast %270 : vector<16x16xf32> to vector<1x16x16xf32>
    tpu.vector_store %arg12[%c0_112, %c0_113, %c0_114], %273 {strides = array<i32>} : memref<1x16x16xf32, #tpu.memory_space<vmem>>, vector<1x16x16xf32>,
    return
  }
  func.func @transform_0(%arg0: i32) -> (i32, i32, i32) {
    %c0_i32 = arith.constant 0 : i32
    %c0_i32_0 = arith.constant 0 : i32
    %c0_i32_1 = arith.constant 0 : i32
    return %arg0, %c0_i32, %c0_i32_0 : i32, i32, i32
  }
  func.func @transform_1(%arg0: i32) -> (i32, i32) {
    %c0_i32 = arith.constant 0 : i32
    %c0_i32_0 = arith.constant 0 : i32
    %c0_i32_1 = arith.constant 0 : i32
    return %c0_i32, %c0_i32_0 : i32, i32
  }
  func.func @transform_2(%arg0: i32) -> (i32, i32) {
    %c0_i32 = arith.constant 0 : i32
    %c0_i32_0 = arith.constant 0 : i32
    %c0_i32_1 = arith.constant 0 : i32
    return %c0_i32, %c0_i32_0 : i32, i32
  }
  func.func @transform_3(%arg0: i32) -> (i32, i32) {
    %c0_i32 = arith.constant 0 : i32
    %c0_i32_0 = arith.constant 0 : i32
    %c0_i32_1 = arith.constant 0 : i32
    return %c0_i32, %c0_i32_0 : i32, i32
  }
  func.func @transform_4(%arg0: i32) -> (i32, i32) {
    %c0_i32 = arith.constant 0 : i32
    %c0_i32_0 = arith.constant 0 : i32
    %c0_i32_1 = arith.constant 0 : i32
    return %c0_i32, %c0_i32_0 : i32, i32
  }
  func.func @transform_5(%arg0: i32) -> (i32, i32) {
    %c0_i32 = arith.constant 0 : i32
    %c0_i32_0 = arith.constant 0 : i32
    %c0_i32_1 = arith.constant 0 : i32
    return %c0_i32, %c0_i32_0 : i32, i32
  }
  func.func @transform_6(%arg0: i32) -> (i32, i32) {
    %c0_i32 = arith.constant 0 : i32
    %c0_i32_0 = arith.constant 0 : i32
    %c0_i32_1 = arith.constant 0 : i32
    return %c0_i32, %c0_i32_0 : i32, i32
  }
  func.func @transform_7(%arg0: i32) -> (i32, i32) {
    %c0_i32 = arith.constant 0 : i32
    %c0_i32_0 = arith.constant 0 : i32
    %c0_i32_1 = arith.constant 0 : i32
    return %c0_i32, %c0_i32_0 : i32, i32
  }
  func.func @transform_8(%arg0: i32) -> (i32, i32) {
    %c0_i32 = arith.constant 0 : i32
    %c0_i32_0 = arith.constant 0 : i32
    %c0_i32_1 = arith.constant 0 : i32
    return %c0_i32, %c0_i32_0 : i32, i32
  }
  func.func @transform_9(%arg0: i32) -> (i32, i32) {
    %c0_i32 = arith.constant 0 : i32
    %c0_i32_0 = arith.constant 0 : i32
    %c0_i32_1 = arith.constant 0 : i32
    return %c0_i32, %c0_i32_0 : i32, i32
  }
  func.func @transform_10(%arg0: i32) -> (i32, i32) {
    %c0_i32 = arith.constant 0 : i32
    %c0_i32_0 = arith.constant 0 : i32
    %c0_i32_1 = arith.constant 0 : i32
    return %c0_i32, %c0_i32_0 : i32, i32
  }
  func.func @transform_11(%arg0: i32) -> (i32, i32, i32) {
    %c0_i32 = arith.constant 0 : i32
    %c0_i32_0 = arith.constant 0 : i32
    %c0_i32_1 = arith.constant 0 : i32
    return %arg0, %c0_i32, %c0_i32_0 : i32, i32, i32
  }
}

module attributes {stable_mosaic.version = 11 : i64} {
  func.func @kernel(%arg0: i32, %arg1: memref<1x16x16xf32, #tpu.memory_space<vmem>>, %arg2: memref<16x64xbf16, #tpu.memory_space<vmem>>, %arg3: memref<1x64xf32, #tpu.memory_space<vmem>>, %arg4: memref<1x64xf32, #tpu.memory_space<vmem>>, %arg5: memref<9x64xf32, #tpu.memory_space<vmem>>, %arg6: memref<1x64xf32, #tpu.memory_space<vmem>>, %arg7: memref<1x64xf32, #tpu.memory_space<vmem>>, %arg8: memref<64x24xbf16, #tpu.memory_space<vmem>>, %arg9: memref<1x24xf32, #tpu.memory_space<vmem>>, %arg10: memref<1x24xf32, #tpu.memory_space<vmem>>, %arg11: memref<1x4x24xf32, #tpu.memory_space<vmem>>, %arg12: memref<36x64xf32, #tpu.memory_space<vmem>>, %arg13: memref<4x64xf32, #tpu.memory_space<vmem>>) attributes {dimension_semantics = [#tpu.dimension_semantics<parallel>], iteration_bounds = array<i64: 2>, scalar_prefetch = 0 : i64, scratch_operands = 2 : i64, tpu.core_type = #tpu.core_type<tc>, window_params = [{transform_indices = @transform_0, window_bounds = array<i64: 1, 16, 16>}, {pipeline_mode = #tpu.pipeline_mode<synchronous>, transform_indices = @transform_1, window_bounds = array<i64: 16, 64>}, {pipeline_mode = #tpu.pipeline_mode<synchronous>, transform_indices = @transform_2, window_bounds = array<i64: 1, 64>}, {pipeline_mode = #tpu.pipeline_mode<synchronous>, transform_indices = @transform_3, window_bounds = array<i64: 1, 64>}, {pipeline_mode = #tpu.pipeline_mode<synchronous>, transform_indices = @transform_4, window_bounds = array<i64: 9, 64>}, {pipeline_mode = #tpu.pipeline_mode<synchronous>, transform_indices = @transform_5, window_bounds = array<i64: 1, 64>}, {pipeline_mode = #tpu.pipeline_mode<synchronous>, transform_indices = @transform_6, window_bounds = array<i64: 1, 64>}, {pipeline_mode = #tpu.pipeline_mode<synchronous>, transform_indices = @transform_7, window_bounds = array<i64: 64, 24>}, {pipeline_mode = #tpu.pipeline_mode<synchronous>, transform_indices = @transform_8, window_bounds = array<i64: 1, 24>}, {pipeline_mode = #tpu.pipeline_mode<synchronous>, transform_indices = @transform_9, window_bounds = array<i64: 1, 24>}, {transform_indices = @transform_10, window_bounds = array<i64: 1, 4, 24>}]} {
    %c0 = arith.constant 0 : index
    %c0_0 = arith.constant 0 : index
    %c0_1 = arith.constant 0 : index
    %0 = vector.load %arg1[%c0, %c0_0, %c0_1] : memref<1x16x16xf32, #tpu.memory_space<vmem>>, vector<1x16x16xf32>
    %1 = vector.shape_cast %0 : vector<1x16x16xf32> to vector<16x16xf32>
    %2 = arith.truncf %1 : vector<16x16xf32> to vector<16x16xbf16>
    %c0_2 = arith.constant 0 : index
    %c0_3 = arith.constant 0 : index
    %3 = vector.load %arg2[%c0_2, %c0_3] : memref<16x64xbf16, #tpu.memory_space<vmem>>, vector<16x64xbf16>
    %cst = arith.constant dense<0.000000e+00> : vector<16x64xf32>
    %4 = tpu.matmul %2, %3, %cst {dimension_numbers = #tpu.dot_dimension_numbers<[1], [0], [0], [1], [0, 0, 1, 1], [], []>} : vector<16x16xbf16>, vector<16x64xbf16>, vector<16x64xf32> -> vector<16x64xf32>
    %c0_4 = arith.constant 0 : index
    %c0_5 = arith.constant 0 : index
    %5 = vector.load %arg3[%c0_4, %c0_5] : memref<1x64xf32, #tpu.memory_space<vmem>>, vector<1x64xf32>
    %6 = vector.broadcast %5 : vector<1x64xf32> to vector<16x64xf32>
    %7 = arith.mulf %4, %6 : vector<16x64xf32>
    %c0_6 = arith.constant 0 : index
    %c0_7 = arith.constant 0 : index
    %8 = vector.load %arg4[%c0_6, %c0_7] : memref<1x64xf32, #tpu.memory_space<vmem>>, vector<1x64xf32>
    %9 = vector.broadcast %8 : vector<1x64xf32> to vector<16x64xf32>
    %10 = arith.addf %7, %9 : vector<16x64xf32>
    %cst_8 = arith.constant 0.000000e+00 : f32
    %11 = vector.broadcast %cst_8 : f32 to vector<16x64xf32>
    %12 = arith.maximumf %10, %11 : vector<16x64xf32>
    %cst_9 = arith.constant 0.000000e+00 : f32
    %13 = vector.broadcast %cst_9 : f32 to vector<36x64xf32>
    %c0_10 = arith.constant 0 : index
    %c0_11 = arith.constant 0 : index
    %14 = vector.load %arg12[%c0_10, %c0_11] : memref<36x64xf32, #tpu.memory_space<vmem>>, vector<36x64xf32>
    tpu.vector_store %arg12[%c0_10, %c0_11], %13 {strides = array<i32>} : memref<36x64xf32, #tpu.memory_space<vmem>>, vector<36x64xf32>,
    %15 = vector.extract_strided_slice %12 {offsets = [0, 0], sizes = [4, 64], strides = [1, 1]} : vector<16x64xf32> to vector<4x64xf32>
    %c7 = arith.constant 7 : index
    %c0_12 = arith.constant 0 : index
    %16 = vector.load %arg12[%c7, %c0_12] : memref<36x64xf32, #tpu.memory_space<vmem>>, vector<4x64xf32>
    tpu.vector_store %arg12[%c7, %c0_12], %15 {strides = array<i32>} : memref<36x64xf32, #tpu.memory_space<vmem>>, vector<4x64xf32>,
    %17 = vector.extract_strided_slice %12 {offsets = [4, 0], sizes = [4, 64], strides = [1, 1]} : vector<16x64xf32> to vector<4x64xf32>
    %c13 = arith.constant 13 : index
    %c0_13 = arith.constant 0 : index
    %18 = vector.load %arg12[%c13, %c0_13] : memref<36x64xf32, #tpu.memory_space<vmem>>, vector<4x64xf32>
    tpu.vector_store %arg12[%c13, %c0_13], %17 {strides = array<i32>} : memref<36x64xf32, #tpu.memory_space<vmem>>, vector<4x64xf32>,
    %19 = vector.extract_strided_slice %12 {offsets = [8, 0], sizes = [4, 64], strides = [1, 1]} : vector<16x64xf32> to vector<4x64xf32>
    %c19 = arith.constant 19 : index
    %c0_14 = arith.constant 0 : index
    %20 = vector.load %arg12[%c19, %c0_14] : memref<36x64xf32, #tpu.memory_space<vmem>>, vector<4x64xf32>
    tpu.vector_store %arg12[%c19, %c0_14], %19 {strides = array<i32>} : memref<36x64xf32, #tpu.memory_space<vmem>>, vector<4x64xf32>,
    %21 = vector.extract_strided_slice %12 {offsets = [12, 0], sizes = [4, 64], strides = [1, 1]} : vector<16x64xf32> to vector<4x64xf32>
    %c25 = arith.constant 25 : index
    %c0_15 = arith.constant 0 : index
    %22 = vector.load %arg12[%c25, %c0_15] : memref<36x64xf32, #tpu.memory_space<vmem>>, vector<4x64xf32>
    tpu.vector_store %arg12[%c25, %c0_15], %21 {strides = array<i32>} : memref<36x64xf32, #tpu.memory_space<vmem>>, vector<4x64xf32>,
    %c0_16 = arith.constant 0 : index
    %c0_17 = arith.constant 0 : index
    %23 = vector.load %arg5[%c0_16, %c0_17] : memref<9x64xf32, #tpu.memory_space<vmem>>, vector<9x64xf32>
    %c0_18 = arith.constant 0 : index
    %c0_19 = arith.constant 0 : index
    %24 = vector.load %arg6[%c0_18, %c0_19] : memref<1x64xf32, #tpu.memory_space<vmem>>, vector<1x64xf32>
    %c0_20 = arith.constant 0 : index
    %c0_21 = arith.constant 0 : index
    %25 = vector.load %arg7[%c0_20, %c0_21] : memref<1x64xf32, #tpu.memory_space<vmem>>, vector<1x64xf32>
    %cst_22 = arith.constant 0.000000e+00 : f32
    %26 = vector.broadcast %cst_22 : f32 to vector<2x64xf32>
    %c0_23 = arith.constant 0 : index
    %c0_24 = arith.constant 0 : index
    %27 = tpu.strided_load %arg12[%c0_23, %c0_24] {strides = array<i32: 2, 1>} : memref<36x64xf32, #tpu.memory_space<vmem>>, vector<2x64xf32>
    %28 = vector.extract_strided_slice %23 {offsets = [0, 0], sizes = [1, 64], strides = [1, 1]} : vector<9x64xf32> to vector<1x64xf32>
    %29 = vector.broadcast %28 : vector<1x64xf32> to vector<2x64xf32>
    %30 = arith.mulf %27, %29 : vector<2x64xf32>
    %31 = arith.addf %26, %30 : vector<2x64xf32>
    %c1 = arith.constant 1 : index
    %c0_25 = arith.constant 0 : index
    %32 = tpu.strided_load %arg12[%c1, %c0_25] {strides = array<i32: 2, 1>} : memref<36x64xf32, #tpu.memory_space<vmem>>, vector<2x64xf32>
    %33 = vector.extract_strided_slice %23 {offsets = [1, 0], sizes = [1, 64], strides = [1, 1]} : vector<9x64xf32> to vector<1x64xf32>
    %34 = vector.broadcast %33 : vector<1x64xf32> to vector<2x64xf32>
    %35 = arith.mulf %32, %34 : vector<2x64xf32>
    %36 = arith.addf %31, %35 : vector<2x64xf32>
    %c2 = arith.constant 2 : index
    %c0_26 = arith.constant 0 : index
    %37 = tpu.strided_load %arg12[%c2, %c0_26] {strides = array<i32: 2, 1>} : memref<36x64xf32, #tpu.memory_space<vmem>>, vector<2x64xf32>
    %38 = vector.extract_strided_slice %23 {offsets = [2, 0], sizes = [1, 64], strides = [1, 1]} : vector<9x64xf32> to vector<1x64xf32>
    %39 = vector.broadcast %38 : vector<1x64xf32> to vector<2x64xf32>
    %40 = arith.mulf %37, %39 : vector<2x64xf32>
    %41 = arith.addf %36, %40 : vector<2x64xf32>
    %c6 = arith.constant 6 : index
    %c0_27 = arith.constant 0 : index
    %42 = tpu.strided_load %arg12[%c6, %c0_27] {strides = array<i32: 2, 1>} : memref<36x64xf32, #tpu.memory_space<vmem>>, vector<2x64xf32>
    %43 = vector.extract_strided_slice %23 {offsets = [3, 0], sizes = [1, 64], strides = [1, 1]} : vector<9x64xf32> to vector<1x64xf32>
    %44 = vector.broadcast %43 : vector<1x64xf32> to vector<2x64xf32>
    %45 = arith.mulf %42, %44 : vector<2x64xf32>
    %46 = arith.addf %41, %45 : vector<2x64xf32>
    %c7_28 = arith.constant 7 : index
    %c0_29 = arith.constant 0 : index
    %47 = tpu.strided_load %arg12[%c7_28, %c0_29] {strides = array<i32: 2, 1>} : memref<36x64xf32, #tpu.memory_space<vmem>>, vector<2x64xf32>
    %48 = vector.extract_strided_slice %23 {offsets = [4, 0], sizes = [1, 64], strides = [1, 1]} : vector<9x64xf32> to vector<1x64xf32>
    %49 = vector.broadcast %48 : vector<1x64xf32> to vector<2x64xf32>
    %50 = arith.mulf %47, %49 : vector<2x64xf32>
    %51 = arith.addf %46, %50 : vector<2x64xf32>
    %c8 = arith.constant 8 : index
    %c0_30 = arith.constant 0 : index
    %52 = tpu.strided_load %arg12[%c8, %c0_30] {strides = array<i32: 2, 1>} : memref<36x64xf32, #tpu.memory_space<vmem>>, vector<2x64xf32>
    %53 = vector.extract_strided_slice %23 {offsets = [5, 0], sizes = [1, 64], strides = [1, 1]} : vector<9x64xf32> to vector<1x64xf32>
    %54 = vector.broadcast %53 : vector<1x64xf32> to vector<2x64xf32>
    %55 = arith.mulf %52, %54 : vector<2x64xf32>
    %56 = arith.addf %51, %55 : vector<2x64xf32>
    %c12 = arith.constant 12 : index
    %c0_31 = arith.constant 0 : index
    %57 = tpu.strided_load %arg12[%c12, %c0_31] {strides = array<i32: 2, 1>} : memref<36x64xf32, #tpu.memory_space<vmem>>, vector<2x64xf32>
    %58 = vector.extract_strided_slice %23 {offsets = [6, 0], sizes = [1, 64], strides = [1, 1]} : vector<9x64xf32> to vector<1x64xf32>
    %59 = vector.broadcast %58 : vector<1x64xf32> to vector<2x64xf32>
    %60 = arith.mulf %57, %59 : vector<2x64xf32>
    %61 = arith.addf %56, %60 : vector<2x64xf32>
    %c13_32 = arith.constant 13 : index
    %c0_33 = arith.constant 0 : index
    %62 = tpu.strided_load %arg12[%c13_32, %c0_33] {strides = array<i32: 2, 1>} : memref<36x64xf32, #tpu.memory_space<vmem>>, vector<2x64xf32>
    %63 = vector.extract_strided_slice %23 {offsets = [7, 0], sizes = [1, 64], strides = [1, 1]} : vector<9x64xf32> to vector<1x64xf32>
    %64 = vector.broadcast %63 : vector<1x64xf32> to vector<2x64xf32>
    %65 = arith.mulf %62, %64 : vector<2x64xf32>
    %66 = arith.addf %61, %65 : vector<2x64xf32>
    %c14 = arith.constant 14 : index
    %c0_34 = arith.constant 0 : index
    %67 = tpu.strided_load %arg12[%c14, %c0_34] {strides = array<i32: 2, 1>} : memref<36x64xf32, #tpu.memory_space<vmem>>, vector<2x64xf32>
    %68 = vector.extract_strided_slice %23 {offsets = [8, 0], sizes = [1, 64], strides = [1, 1]} : vector<9x64xf32> to vector<1x64xf32>
    %69 = vector.broadcast %68 : vector<1x64xf32> to vector<2x64xf32>
    %70 = arith.mulf %67, %69 : vector<2x64xf32>
    %71 = arith.addf %66, %70 : vector<2x64xf32>
    %72 = vector.broadcast %24 : vector<1x64xf32> to vector<2x64xf32>
    %73 = arith.mulf %71, %72 : vector<2x64xf32>
    %74 = vector.broadcast %25 : vector<1x64xf32> to vector<2x64xf32>
    %75 = arith.addf %73, %74 : vector<2x64xf32>
    %cst_35 = arith.constant 0.000000e+00 : f32
    %76 = vector.broadcast %cst_35 : f32 to vector<2x64xf32>
    %77 = arith.maximumf %75, %76 : vector<2x64xf32>
    %c0_36 = arith.constant 0 : index
    %c0_37 = arith.constant 0 : index
    %78 = vector.load %arg13[%c0_36, %c0_37] : memref<4x64xf32, #tpu.memory_space<vmem>>, vector<2x64xf32>
    tpu.vector_store %arg13[%c0_36, %c0_37], %77 {strides = array<i32>} : memref<4x64xf32, #tpu.memory_space<vmem>>, vector<2x64xf32>,
    %cst_38 = arith.constant 0.000000e+00 : f32
    %79 = vector.broadcast %cst_38 : f32 to vector<2x64xf32>
    %c12_39 = arith.constant 12 : index
    %c0_40 = arith.constant 0 : index
    %80 = tpu.strided_load %arg12[%c12_39, %c0_40] {strides = array<i32: 2, 1>} : memref<36x64xf32, #tpu.memory_space<vmem>>, vector<2x64xf32>
    %81 = vector.extract_strided_slice %23 {offsets = [0, 0], sizes = [1, 64], strides = [1, 1]} : vector<9x64xf32> to vector<1x64xf32>
    %82 = vector.broadcast %81 : vector<1x64xf32> to vector<2x64xf32>
    %83 = arith.mulf %80, %82 : vector<2x64xf32>
    %84 = arith.addf %79, %83 : vector<2x64xf32>
    %c13_41 = arith.constant 13 : index
    %c0_42 = arith.constant 0 : index
    %85 = tpu.strided_load %arg12[%c13_41, %c0_42] {strides = array<i32: 2, 1>} : memref<36x64xf32, #tpu.memory_space<vmem>>, vector<2x64xf32>
    %86 = vector.extract_strided_slice %23 {offsets = [1, 0], sizes = [1, 64], strides = [1, 1]} : vector<9x64xf32> to vector<1x64xf32>
    %87 = vector.broadcast %86 : vector<1x64xf32> to vector<2x64xf32>
    %88 = arith.mulf %85, %87 : vector<2x64xf32>
    %89 = arith.addf %84, %88 : vector<2x64xf32>
    %c14_43 = arith.constant 14 : index
    %c0_44 = arith.constant 0 : index
    %90 = tpu.strided_load %arg12[%c14_43, %c0_44] {strides = array<i32: 2, 1>} : memref<36x64xf32, #tpu.memory_space<vmem>>, vector<2x64xf32>
    %91 = vector.extract_strided_slice %23 {offsets = [2, 0], sizes = [1, 64], strides = [1, 1]} : vector<9x64xf32> to vector<1x64xf32>
    %92 = vector.broadcast %91 : vector<1x64xf32> to vector<2x64xf32>
    %93 = arith.mulf %90, %92 : vector<2x64xf32>
    %94 = arith.addf %89, %93 : vector<2x64xf32>
    %c18 = arith.constant 18 : index
    %c0_45 = arith.constant 0 : index
    %95 = tpu.strided_load %arg12[%c18, %c0_45] {strides = array<i32: 2, 1>} : memref<36x64xf32, #tpu.memory_space<vmem>>, vector<2x64xf32>
    %96 = vector.extract_strided_slice %23 {offsets = [3, 0], sizes = [1, 64], strides = [1, 1]} : vector<9x64xf32> to vector<1x64xf32>
    %97 = vector.broadcast %96 : vector<1x64xf32> to vector<2x64xf32>
    %98 = arith.mulf %95, %97 : vector<2x64xf32>
    %99 = arith.addf %94, %98 : vector<2x64xf32>
    %c19_46 = arith.constant 19 : index
    %c0_47 = arith.constant 0 : index
    %100 = tpu.strided_load %arg12[%c19_46, %c0_47] {strides = array<i32: 2, 1>} : memref<36x64xf32, #tpu.memory_space<vmem>>, vector<2x64xf32>
    %101 = vector.extract_strided_slice %23 {offsets = [4, 0], sizes = [1, 64], strides = [1, 1]} : vector<9x64xf32> to vector<1x64xf32>
    %102 = vector.broadcast %101 : vector<1x64xf32> to vector<2x64xf32>
    %103 = arith.mulf %100, %102 : vector<2x64xf32>
    %104 = arith.addf %99, %103 : vector<2x64xf32>
    %c20 = arith.constant 20 : index
    %c0_48 = arith.constant 0 : index
    %105 = tpu.strided_load %arg12[%c20, %c0_48] {strides = array<i32: 2, 1>} : memref<36x64xf32, #tpu.memory_space<vmem>>, vector<2x64xf32>
    %106 = vector.extract_strided_slice %23 {offsets = [5, 0], sizes = [1, 64], strides = [1, 1]} : vector<9x64xf32> to vector<1x64xf32>
    %107 = vector.broadcast %106 : vector<1x64xf32> to vector<2x64xf32>
    %108 = arith.mulf %105, %107 : vector<2x64xf32>
    %109 = arith.addf %104, %108 : vector<2x64xf32>
    %c24 = arith.constant 24 : index
    %c0_49 = arith.constant 0 : index
    %110 = tpu.strided_load %arg12[%c24, %c0_49] {strides = array<i32: 2, 1>} : memref<36x64xf32, #tpu.memory_space<vmem>>, vector<2x64xf32>
    %111 = vector.extract_strided_slice %23 {offsets = [6, 0], sizes = [1, 64], strides = [1, 1]} : vector<9x64xf32> to vector<1x64xf32>
    %112 = vector.broadcast %111 : vector<1x64xf32> to vector<2x64xf32>
    %113 = arith.mulf %110, %112 : vector<2x64xf32>
    %114 = arith.addf %109, %113 : vector<2x64xf32>
    %c25_50 = arith.constant 25 : index
    %c0_51 = arith.constant 0 : index
    %115 = tpu.strided_load %arg12[%c25_50, %c0_51] {strides = array<i32: 2, 1>} : memref<36x64xf32, #tpu.memory_space<vmem>>, vector<2x64xf32>
    %116 = vector.extract_strided_slice %23 {offsets = [7, 0], sizes = [1, 64], strides = [1, 1]} : vector<9x64xf32> to vector<1x64xf32>
    %117 = vector.broadcast %116 : vector<1x64xf32> to vector<2x64xf32>
    %118 = arith.mulf %115, %117 : vector<2x64xf32>
    %119 = arith.addf %114, %118 : vector<2x64xf32>
    %c26 = arith.constant 26 : index
    %c0_52 = arith.constant 0 : index
    %120 = tpu.strided_load %arg12[%c26, %c0_52] {strides = array<i32: 2, 1>} : memref<36x64xf32, #tpu.memory_space<vmem>>, vector<2x64xf32>
    %121 = vector.extract_strided_slice %23 {offsets = [8, 0], sizes = [1, 64], strides = [1, 1]} : vector<9x64xf32> to vector<1x64xf32>
    %122 = vector.broadcast %121 : vector<1x64xf32> to vector<2x64xf32>
    %123 = arith.mulf %120, %122 : vector<2x64xf32>
    %124 = arith.addf %119, %123 : vector<2x64xf32>
    %125 = vector.broadcast %24 : vector<1x64xf32> to vector<2x64xf32>
    %126 = arith.mulf %124, %125 : vector<2x64xf32>
    %127 = vector.broadcast %25 : vector<1x64xf32> to vector<2x64xf32>
    %128 = arith.addf %126, %127 : vector<2x64xf32>
    %cst_53 = arith.constant 0.000000e+00 : f32
    %129 = vector.broadcast %cst_53 : f32 to vector<2x64xf32>
    %130 = arith.maximumf %128, %129 : vector<2x64xf32>
    %c2_54 = arith.constant 2 : index
    %c0_55 = arith.constant 0 : index
    %131 = vector.load %arg13[%c2_54, %c0_55] : memref<4x64xf32, #tpu.memory_space<vmem>>, vector<2x64xf32>
    tpu.vector_store %arg13[%c2_54, %c0_55], %130 {strides = array<i32>} : memref<4x64xf32, #tpu.memory_space<vmem>>, vector<2x64xf32>,
    %c0_56 = arith.constant 0 : index
    %c0_57 = arith.constant 0 : index
    %132 = vector.load %arg13[%c0_56, %c0_57] : memref<4x64xf32, #tpu.memory_space<vmem>>, vector<4x64xf32>
    %133 = arith.truncf %132 : vector<4x64xf32> to vector<4x64xbf16>
    %c0_58 = arith.constant 0 : index
    %c0_59 = arith.constant 0 : index
    %134 = vector.load %arg8[%c0_58, %c0_59] : memref<64x24xbf16, #tpu.memory_space<vmem>>, vector<64x24xbf16>
    %cst_60 = arith.constant dense<0.000000e+00> : vector<4x24xf32>
    %135 = tpu.matmul %133, %134, %cst_60 {dimension_numbers = #tpu.dot_dimension_numbers<[1], [0], [0], [1], [0, 0, 1, 1], [], []>} : vector<4x64xbf16>, vector<64x24xbf16>, vector<4x24xf32> -> vector<4x24xf32>
    %c0_61 = arith.constant 0 : index
    %c0_62 = arith.constant 0 : index
    %136 = vector.load %arg9[%c0_61, %c0_62] : memref<1x24xf32, #tpu.memory_space<vmem>>, vector<1x24xf32>
    %137 = vector.broadcast %136 : vector<1x24xf32> to vector<4x24xf32>
    %138 = arith.mulf %135, %137 : vector<4x24xf32>
    %c0_63 = arith.constant 0 : index
    %c0_64 = arith.constant 0 : index
    %139 = vector.load %arg10[%c0_63, %c0_64] : memref<1x24xf32, #tpu.memory_space<vmem>>, vector<1x24xf32>
    %140 = vector.broadcast %139 : vector<1x24xf32> to vector<4x24xf32>
    %141 = arith.addf %138, %140 : vector<4x24xf32>
    %c0_65 = arith.constant 0 : index
    %c0_66 = arith.constant 0 : index
    %c0_67 = arith.constant 0 : index
    %142 = vector.load %arg11[%c0_65, %c0_66, %c0_67] : memref<1x4x24xf32, #tpu.memory_space<vmem>>, vector<1x4x24xf32>
    %143 = vector.shape_cast %142 : vector<1x4x24xf32> to vector<4x24xf32>
    %144 = vector.shape_cast %141 : vector<4x24xf32> to vector<1x4x24xf32>
    tpu.vector_store %arg11[%c0_65, %c0_66, %c0_67], %144 {strides = array<i32>} : memref<1x4x24xf32, #tpu.memory_space<vmem>>, vector<1x4x24xf32>,
    return
  }
  func.func @transform_0(%arg0: i32) -> (i32, i32, i32) {
    %c0_i32 = arith.constant 0 : i32
    %c0_i32_0 = arith.constant 0 : i32
    %c0_i32_1 = arith.constant 0 : i32
    return %arg0, %c0_i32, %c0_i32_0 : i32, i32, i32
  }
  func.func @transform_1(%arg0: i32) -> (i32, i32) {
    %c0_i32 = arith.constant 0 : i32
    %c0_i32_0 = arith.constant 0 : i32
    %c0_i32_1 = arith.constant 0 : i32
    return %c0_i32, %c0_i32_0 : i32, i32
  }
  func.func @transform_2(%arg0: i32) -> (i32, i32) {
    %c0_i32 = arith.constant 0 : i32
    %c0_i32_0 = arith.constant 0 : i32
    %c0_i32_1 = arith.constant 0 : i32
    return %c0_i32, %c0_i32_0 : i32, i32
  }
  func.func @transform_3(%arg0: i32) -> (i32, i32) {
    %c0_i32 = arith.constant 0 : i32
    %c0_i32_0 = arith.constant 0 : i32
    %c0_i32_1 = arith.constant 0 : i32
    return %c0_i32, %c0_i32_0 : i32, i32
  }
  func.func @transform_4(%arg0: i32) -> (i32, i32) {
    %c0_i32 = arith.constant 0 : i32
    %c0_i32_0 = arith.constant 0 : i32
    %c0_i32_1 = arith.constant 0 : i32
    return %c0_i32, %c0_i32_0 : i32, i32
  }
  func.func @transform_5(%arg0: i32) -> (i32, i32) {
    %c0_i32 = arith.constant 0 : i32
    %c0_i32_0 = arith.constant 0 : i32
    %c0_i32_1 = arith.constant 0 : i32
    return %c0_i32, %c0_i32_0 : i32, i32
  }
  func.func @transform_6(%arg0: i32) -> (i32, i32) {
    %c0_i32 = arith.constant 0 : i32
    %c0_i32_0 = arith.constant 0 : i32
    %c0_i32_1 = arith.constant 0 : i32
    return %c0_i32, %c0_i32_0 : i32, i32
  }
  func.func @transform_7(%arg0: i32) -> (i32, i32) {
    %c0_i32 = arith.constant 0 : i32
    %c0_i32_0 = arith.constant 0 : i32
    %c0_i32_1 = arith.constant 0 : i32
    return %c0_i32, %c0_i32_0 : i32, i32
  }
  func.func @transform_8(%arg0: i32) -> (i32, i32) {
    %c0_i32 = arith.constant 0 : i32
    %c0_i32_0 = arith.constant 0 : i32
    %c0_i32_1 = arith.constant 0 : i32
    return %c0_i32, %c0_i32_0 : i32, i32
  }
  func.func @transform_9(%arg0: i32) -> (i32, i32) {
    %c0_i32 = arith.constant 0 : i32
    %c0_i32_0 = arith.constant 0 : i32
    %c0_i32_1 = arith.constant 0 : i32
    return %c0_i32, %c0_i32_0 : i32, i32
  }
  func.func @transform_10(%arg0: i32) -> (i32, i32, i32) {
    %c0_i32 = arith.constant 0 : i32
    %c0_i32_0 = arith.constant 0 : i32
    %c0_i32_1 = arith.constant 0 : i32
    return %arg0, %c0_i32, %c0_i32_0 : i32, i32, i32
  }
}

module attributes {stable_mosaic.version = 11 : i64} {
  func.func @kernel(%arg0: i32, %arg1: memref<1x4x24xf32, #tpu.memory_space<vmem>>, %arg2: memref<24x88xbf16, #tpu.memory_space<vmem>>, %arg3: memref<1x88xf32, #tpu.memory_space<vmem>>, %arg4: memref<1x88xf32, #tpu.memory_space<vmem>>, %arg5: memref<9x88xf32, #tpu.memory_space<vmem>>, %arg6: memref<1x88xf32, #tpu.memory_space<vmem>>, %arg7: memref<1x88xf32, #tpu.memory_space<vmem>>, %arg8: memref<88x24xbf16, #tpu.memory_space<vmem>>, %arg9: memref<1x24xf32, #tpu.memory_space<vmem>>, %arg10: memref<1x24xf32, #tpu.memory_space<vmem>>, %arg11: memref<1x4x24xf32, #tpu.memory_space<vmem>>, %arg12: memref<16x88xf32, #tpu.memory_space<vmem>>, %arg13: memref<4x88xf32, #tpu.memory_space<vmem>>) attributes {dimension_semantics = [#tpu.dimension_semantics<parallel>], iteration_bounds = array<i64: 2>, scalar_prefetch = 0 : i64, scratch_operands = 2 : i64, tpu.core_type = #tpu.core_type<tc>, window_params = [{transform_indices = @transform_0, window_bounds = array<i64: 1, 4, 24>}, {pipeline_mode = #tpu.pipeline_mode<synchronous>, transform_indices = @transform_1, window_bounds = array<i64: 24, 88>}, {pipeline_mode = #tpu.pipeline_mode<synchronous>, transform_indices = @transform_2, window_bounds = array<i64: 1, 88>}, {pipeline_mode = #tpu.pipeline_mode<synchronous>, transform_indices = @transform_3, window_bounds = array<i64: 1, 88>}, {pipeline_mode = #tpu.pipeline_mode<synchronous>, transform_indices = @transform_4, window_bounds = array<i64: 9, 88>}, {pipeline_mode = #tpu.pipeline_mode<synchronous>, transform_indices = @transform_5, window_bounds = array<i64: 1, 88>}, {pipeline_mode = #tpu.pipeline_mode<synchronous>, transform_indices = @transform_6, window_bounds = array<i64: 1, 88>}, {pipeline_mode = #tpu.pipeline_mode<synchronous>, transform_indices = @transform_7, window_bounds = array<i64: 88, 24>}, {pipeline_mode = #tpu.pipeline_mode<synchronous>, transform_indices = @transform_8, window_bounds = array<i64: 1, 24>}, {pipeline_mode = #tpu.pipeline_mode<synchronous>, transform_indices = @transform_9, window_bounds = array<i64: 1, 24>}, {transform_indices = @transform_10, window_bounds = array<i64: 1, 4, 24>}]} {
    %c0 = arith.constant 0 : index
    %c0_0 = arith.constant 0 : index
    %c0_1 = arith.constant 0 : index
    %0 = vector.load %arg1[%c0, %c0_0, %c0_1] : memref<1x4x24xf32, #tpu.memory_space<vmem>>, vector<1x4x24xf32>
    %1 = vector.shape_cast %0 : vector<1x4x24xf32> to vector<4x24xf32>
    %2 = arith.truncf %1 : vector<4x24xf32> to vector<4x24xbf16>
    %c0_2 = arith.constant 0 : index
    %c0_3 = arith.constant 0 : index
    %3 = vector.load %arg2[%c0_2, %c0_3] : memref<24x88xbf16, #tpu.memory_space<vmem>>, vector<24x88xbf16>
    %cst = arith.constant dense<0.000000e+00> : vector<4x88xf32>
    %4 = tpu.matmul %2, %3, %cst {dimension_numbers = #tpu.dot_dimension_numbers<[1], [0], [0], [1], [0, 0, 1, 1], [], []>} : vector<4x24xbf16>, vector<24x88xbf16>, vector<4x88xf32> -> vector<4x88xf32>
    %c0_4 = arith.constant 0 : index
    %c0_5 = arith.constant 0 : index
    %5 = vector.load %arg3[%c0_4, %c0_5] : memref<1x88xf32, #tpu.memory_space<vmem>>, vector<1x88xf32>
    %6 = vector.broadcast %5 : vector<1x88xf32> to vector<4x88xf32>
    %7 = arith.mulf %4, %6 : vector<4x88xf32>
    %c0_6 = arith.constant 0 : index
    %c0_7 = arith.constant 0 : index
    %8 = vector.load %arg4[%c0_6, %c0_7] : memref<1x88xf32, #tpu.memory_space<vmem>>, vector<1x88xf32>
    %9 = vector.broadcast %8 : vector<1x88xf32> to vector<4x88xf32>
    %10 = arith.addf %7, %9 : vector<4x88xf32>
    %cst_8 = arith.constant 6.000000e+00 : f32
    %11 = vector.broadcast %cst_8 : f32 to vector<4x88xf32>
    %12 = arith.divf %10, %11 : vector<4x88xf32>
    %cst_9 = arith.constant 5.000000e-01 : f32
    %13 = vector.broadcast %cst_9 : f32 to vector<4x88xf32>
    %14 = arith.addf %12, %13 : vector<4x88xf32>
    %cst_10 = arith.constant 0.000000e+00 : f32
    %cst_11 = arith.constant 1.000000e+00 : f32
    %15 = vector.broadcast %cst_10 : f32 to vector<4x88xf32>
    %16 = arith.maximumf %15, %14 : vector<4x88xf32>
    %17 = vector.broadcast %cst_11 : f32 to vector<4x88xf32>
    %18 = arith.minimumf %17, %16 : vector<4x88xf32>
    %19 = arith.mulf %10, %18 : vector<4x88xf32>
    %cst_12 = arith.constant 0.000000e+00 : f32
    %20 = vector.broadcast %cst_12 : f32 to vector<16x88xf32>
    %c0_13 = arith.constant 0 : index
    %c0_14 = arith.constant 0 : index
    %21 = vector.load %arg12[%c0_13, %c0_14] : memref<16x88xf32, #tpu.memory_space<vmem>>, vector<16x88xf32>
    tpu.vector_store %arg12[%c0_13, %c0_14], %20 {strides = array<i32>} : memref<16x88xf32, #tpu.memory_space<vmem>>, vector<16x88xf32>,
    %22 = vector.extract_strided_slice %19 {offsets = [0, 0], sizes = [2, 88], strides = [1, 1]} : vector<4x88xf32> to vector<2x88xf32>
    %c5 = arith.constant 5 : index
    %c0_15 = arith.constant 0 : index
    %23 = vector.load %arg12[%c5, %c0_15] : memref<16x88xf32, #tpu.memory_space<vmem>>, vector<2x88xf32>
    tpu.vector_store %arg12[%c5, %c0_15], %22 {strides = array<i32>} : memref<16x88xf32, #tpu.memory_space<vmem>>, vector<2x88xf32>,
    %24 = vector.extract_strided_slice %19 {offsets = [2, 0], sizes = [2, 88], strides = [1, 1]} : vector<4x88xf32> to vector<2x88xf32>
    %c9 = arith.constant 9 : index
    %c0_16 = arith.constant 0 : index
    %25 = vector.load %arg12[%c9, %c0_16] : memref<16x88xf32, #tpu.memory_space<vmem>>, vector<2x88xf32>
    tpu.vector_store %arg12[%c9, %c0_16], %24 {strides = array<i32>} : memref<16x88xf32, #tpu.memory_space<vmem>>, vector<2x88xf32>,
    %c0_17 = arith.constant 0 : index
    %c0_18 = arith.constant 0 : index
    %26 = vector.load %arg5[%c0_17, %c0_18] : memref<9x88xf32, #tpu.memory_space<vmem>>, vector<9x88xf32>
    %c0_19 = arith.constant 0 : index
    %c0_20 = arith.constant 0 : index
    %27 = vector.load %arg6[%c0_19, %c0_20] : memref<1x88xf32, #tpu.memory_space<vmem>>, vector<1x88xf32>
    %c0_21 = arith.constant 0 : index
    %c0_22 = arith.constant 0 : index
    %28 = vector.load %arg7[%c0_21, %c0_22] : memref<1x88xf32, #tpu.memory_space<vmem>>, vector<1x88xf32>
    %cst_23 = arith.constant 0.000000e+00 : f32
    %29 = vector.broadcast %cst_23 : f32 to vector<2x88xf32>
    %c0_24 = arith.constant 0 : index
    %c0_25 = arith.constant 0 : index
    %30 = vector.load %arg12[%c0_24, %c0_25] : memref<16x88xf32, #tpu.memory_space<vmem>>, vector<2x88xf32>
    %31 = vector.extract_strided_slice %26 {offsets = [0, 0], sizes = [1, 88], strides = [1, 1]} : vector<9x88xf32> to vector<1x88xf32>
    %32 = vector.broadcast %31 : vector<1x88xf32> to vector<2x88xf32>
    %33 = arith.mulf %30, %32 : vector<2x88xf32>
    %34 = arith.addf %29, %33 : vector<2x88xf32>
    %c1 = arith.constant 1 : index
    %c0_26 = arith.constant 0 : index
    %35 = vector.load %arg12[%c1, %c0_26] : memref<16x88xf32, #tpu.memory_space<vmem>>, vector<2x88xf32>
    %36 = vector.extract_strided_slice %26 {offsets = [1, 0], sizes = [1, 88], strides = [1, 1]} : vector<9x88xf32> to vector<1x88xf32>
    %37 = vector.broadcast %36 : vector<1x88xf32> to vector<2x88xf32>
    %38 = arith.mulf %35, %37 : vector<2x88xf32>
    %39 = arith.addf %34, %38 : vector<2x88xf32>
    %c2 = arith.constant 2 : index
    %c0_27 = arith.constant 0 : index
    %40 = vector.load %arg12[%c2, %c0_27] : memref<16x88xf32, #tpu.memory_space<vmem>>, vector<2x88xf32>
    %41 = vector.extract_strided_slice %26 {offsets = [2, 0], sizes = [1, 88], strides = [1, 1]} : vector<9x88xf32> to vector<1x88xf32>
    %42 = vector.broadcast %41 : vector<1x88xf32> to vector<2x88xf32>
    %43 = arith.mulf %40, %42 : vector<2x88xf32>
    %44 = arith.addf %39, %43 : vector<2x88xf32>
    %c4 = arith.constant 4 : index
    %c0_28 = arith.constant 0 : index
    %45 = vector.load %arg12[%c4, %c0_28] : memref<16x88xf32, #tpu.memory_space<vmem>>, vector<2x88xf32>
    %46 = vector.extract_strided_slice %26 {offsets = [3, 0], sizes = [1, 88], strides = [1, 1]} : vector<9x88xf32> to vector<1x88xf32>
    %47 = vector.broadcast %46 : vector<1x88xf32> to vector<2x88xf32>
    %48 = arith.mulf %45, %47 : vector<2x88xf32>
    %49 = arith.addf %44, %48 : vector<2x88xf32>
    %c5_29 = arith.constant 5 : index
    %c0_30 = arith.constant 0 : index
    %50 = vector.load %arg12[%c5_29, %c0_30] : memref<16x88xf32, #tpu.memory_space<vmem>>, vector<2x88xf32>
    %51 = vector.extract_strided_slice %26 {offsets = [4, 0], sizes = [1, 88], strides = [1, 1]} : vector<9x88xf32> to vector<1x88xf32>
    %52 = vector.broadcast %51 : vector<1x88xf32> to vector<2x88xf32>
    %53 = arith.mulf %50, %52 : vector<2x88xf32>
    %54 = arith.addf %49, %53 : vector<2x88xf32>
    %c6 = arith.constant 6 : index
    %c0_31 = arith.constant 0 : index
    %55 = vector.load %arg12[%c6, %c0_31] : memref<16x88xf32, #tpu.memory_space<vmem>>, vector<2x88xf32>
    %56 = vector.extract_strided_slice %26 {offsets = [5, 0], sizes = [1, 88], strides = [1, 1]} : vector<9x88xf32> to vector<1x88xf32>
    %57 = vector.broadcast %56 : vector<1x88xf32> to vector<2x88xf32>
    %58 = arith.mulf %55, %57 : vector<2x88xf32>
    %59 = arith.addf %54, %58 : vector<2x88xf32>
    %c8 = arith.constant 8 : index
    %c0_32 = arith.constant 0 : index
    %60 = vector.load %arg12[%c8, %c0_32] : memref<16x88xf32, #tpu.memory_space<vmem>>, vector<2x88xf32>
    %61 = vector.extract_strided_slice %26 {offsets = [6, 0], sizes = [1, 88], strides = [1, 1]} : vector<9x88xf32> to vector<1x88xf32>
    %62 = vector.broadcast %61 : vector<1x88xf32> to vector<2x88xf32>
    %63 = arith.mulf %60, %62 : vector<2x88xf32>
    %64 = arith.addf %59, %63 : vector<2x88xf32>
    %c9_33 = arith.constant 9 : index
    %c0_34 = arith.constant 0 : index
    %65 = vector.load %arg12[%c9_33, %c0_34] : memref<16x88xf32, #tpu.memory_space<vmem>>, vector<2x88xf32>
    %66 = vector.extract_strided_slice %26 {offsets = [7, 0], sizes = [1, 88], strides = [1, 1]} : vector<9x88xf32> to vector<1x88xf32>
    %67 = vector.broadcast %66 : vector<1x88xf32> to vector<2x88xf32>
    %68 = arith.mulf %65, %67 : vector<2x88xf32>
    %69 = arith.addf %64, %68 : vector<2x88xf32>
    %c10 = arith.constant 10 : index
    %c0_35 = arith.constant 0 : index
    %70 = vector.load %arg12[%c10, %c0_35] : memref<16x88xf32, #tpu.memory_space<vmem>>, vector<2x88xf32>
    %71 = vector.extract_strided_slice %26 {offsets = [8, 0], sizes = [1, 88], strides = [1, 1]} : vector<9x88xf32> to vector<1x88xf32>
    %72 = vector.broadcast %71 : vector<1x88xf32> to vector<2x88xf32>
    %73 = arith.mulf %70, %72 : vector<2x88xf32>
    %74 = arith.addf %69, %73 : vector<2x88xf32>
    %75 = vector.broadcast %27 : vector<1x88xf32> to vector<2x88xf32>
    %76 = arith.mulf %74, %75 : vector<2x88xf32>
    %77 = vector.broadcast %28 : vector<1x88xf32> to vector<2x88xf32>
    %78 = arith.addf %76, %77 : vector<2x88xf32>
    %cst_36 = arith.constant 6.000000e+00 : f32
    %79 = vector.broadcast %cst_36 : f32 to vector<2x88xf32>
    %80 = arith.divf %78, %79 : vector<2x88xf32>
    %cst_37 = arith.constant 5.000000e-01 : f32
    %81 = vector.broadcast %cst_37 : f32 to vector<2x88xf32>
    %82 = arith.addf %80, %81 : vector<2x88xf32>
    %cst_38 = arith.constant 0.000000e+00 : f32
    %cst_39 = arith.constant 1.000000e+00 : f32
    %83 = vector.broadcast %cst_38 : f32 to vector<2x88xf32>
    %84 = arith.maximumf %83, %82 : vector<2x88xf32>
    %85 = vector.broadcast %cst_39 : f32 to vector<2x88xf32>
    %86 = arith.minimumf %85, %84 : vector<2x88xf32>
    %87 = arith.mulf %78, %86 : vector<2x88xf32>
    %c0_40 = arith.constant 0 : index
    %c0_41 = arith.constant 0 : index
    %88 = vector.load %arg13[%c0_40, %c0_41] : memref<4x88xf32, #tpu.memory_space<vmem>>, vector<2x88xf32>
    tpu.vector_store %arg13[%c0_40, %c0_41], %87 {strides = array<i32>} : memref<4x88xf32, #tpu.memory_space<vmem>>, vector<2x88xf32>,
    %cst_42 = arith.constant 0.000000e+00 : f32
    %89 = vector.broadcast %cst_42 : f32 to vector<2x88xf32>
    %c4_43 = arith.constant 4 : index
    %c0_44 = arith.constant 0 : index
    %90 = vector.load %arg12[%c4_43, %c0_44] : memref<16x88xf32, #tpu.memory_space<vmem>>, vector<2x88xf32>
    %91 = vector.extract_strided_slice %26 {offsets = [0, 0], sizes = [1, 88], strides = [1, 1]} : vector<9x88xf32> to vector<1x88xf32>
    %92 = vector.broadcast %91 : vector<1x88xf32> to vector<2x88xf32>
    %93 = arith.mulf %90, %92 : vector<2x88xf32>
    %94 = arith.addf %89, %93 : vector<2x88xf32>
    %c5_45 = arith.constant 5 : index
    %c0_46 = arith.constant 0 : index
    %95 = vector.load %arg12[%c5_45, %c0_46] : memref<16x88xf32, #tpu.memory_space<vmem>>, vector<2x88xf32>
    %96 = vector.extract_strided_slice %26 {offsets = [1, 0], sizes = [1, 88], strides = [1, 1]} : vector<9x88xf32> to vector<1x88xf32>
    %97 = vector.broadcast %96 : vector<1x88xf32> to vector<2x88xf32>
    %98 = arith.mulf %95, %97 : vector<2x88xf32>
    %99 = arith.addf %94, %98 : vector<2x88xf32>
    %c6_47 = arith.constant 6 : index
    %c0_48 = arith.constant 0 : index
    %100 = vector.load %arg12[%c6_47, %c0_48] : memref<16x88xf32, #tpu.memory_space<vmem>>, vector<2x88xf32>
    %101 = vector.extract_strided_slice %26 {offsets = [2, 0], sizes = [1, 88], strides = [1, 1]} : vector<9x88xf32> to vector<1x88xf32>
    %102 = vector.broadcast %101 : vector<1x88xf32> to vector<2x88xf32>
    %103 = arith.mulf %100, %102 : vector<2x88xf32>
    %104 = arith.addf %99, %103 : vector<2x88xf32>
    %c8_49 = arith.constant 8 : index
    %c0_50 = arith.constant 0 : index
    %105 = vector.load %arg12[%c8_49, %c0_50] : memref<16x88xf32, #tpu.memory_space<vmem>>, vector<2x88xf32>
    %106 = vector.extract_strided_slice %26 {offsets = [3, 0], sizes = [1, 88], strides = [1, 1]} : vector<9x88xf32> to vector<1x88xf32>
    %107 = vector.broadcast %106 : vector<1x88xf32> to vector<2x88xf32>
    %108 = arith.mulf %105, %107 : vector<2x88xf32>
    %109 = arith.addf %104, %108 : vector<2x88xf32>
    %c9_51 = arith.constant 9 : index
    %c0_52 = arith.constant 0 : index
    %110 = vector.load %arg12[%c9_51, %c0_52] : memref<16x88xf32, #tpu.memory_space<vmem>>, vector<2x88xf32>
    %111 = vector.extract_strided_slice %26 {offsets = [4, 0], sizes = [1, 88], strides = [1, 1]} : vector<9x88xf32> to vector<1x88xf32>
    %112 = vector.broadcast %111 : vector<1x88xf32> to vector<2x88xf32>
    %113 = arith.mulf %110, %112 : vector<2x88xf32>
    %114 = arith.addf %109, %113 : vector<2x88xf32>
    %c10_53 = arith.constant 10 : index
    %c0_54 = arith.constant 0 : index
    %115 = vector.load %arg12[%c10_53, %c0_54] : memref<16x88xf32, #tpu.memory_space<vmem>>, vector<2x88xf32>
    %116 = vector.extract_strided_slice %26 {offsets = [5, 0], sizes = [1, 88], strides = [1, 1]} : vector<9x88xf32> to vector<1x88xf32>
    %117 = vector.broadcast %116 : vector<1x88xf32> to vector<2x88xf32>
    %118 = arith.mulf %115, %117 : vector<2x88xf32>
    %119 = arith.addf %114, %118 : vector<2x88xf32>
    %c12 = arith.constant 12 : index
    %c0_55 = arith.constant 0 : index
    %120 = vector.load %arg12[%c12, %c0_55] : memref<16x88xf32, #tpu.memory_space<vmem>>, vector<2x88xf32>
    %121 = vector.extract_strided_slice %26 {offsets = [6, 0], sizes = [1, 88], strides = [1, 1]} : vector<9x88xf32> to vector<1x88xf32>
    %122 = vector.broadcast %121 : vector<1x88xf32> to vector<2x88xf32>
    %123 = arith.mulf %120, %122 : vector<2x88xf32>
    %124 = arith.addf %119, %123 : vector<2x88xf32>
    %c13 = arith.constant 13 : index
    %c0_56 = arith.constant 0 : index
    %125 = vector.load %arg12[%c13, %c0_56] : memref<16x88xf32, #tpu.memory_space<vmem>>, vector<2x88xf32>
    %126 = vector.extract_strided_slice %26 {offsets = [7, 0], sizes = [1, 88], strides = [1, 1]} : vector<9x88xf32> to vector<1x88xf32>
    %127 = vector.broadcast %126 : vector<1x88xf32> to vector<2x88xf32>
    %128 = arith.mulf %125, %127 : vector<2x88xf32>
    %129 = arith.addf %124, %128 : vector<2x88xf32>
    %c14 = arith.constant 14 : index
    %c0_57 = arith.constant 0 : index
    %130 = vector.load %arg12[%c14, %c0_57] : memref<16x88xf32, #tpu.memory_space<vmem>>, vector<2x88xf32>
    %131 = vector.extract_strided_slice %26 {offsets = [8, 0], sizes = [1, 88], strides = [1, 1]} : vector<9x88xf32> to vector<1x88xf32>
    %132 = vector.broadcast %131 : vector<1x88xf32> to vector<2x88xf32>
    %133 = arith.mulf %130, %132 : vector<2x88xf32>
    %134 = arith.addf %129, %133 : vector<2x88xf32>
    %135 = vector.broadcast %27 : vector<1x88xf32> to vector<2x88xf32>
    %136 = arith.mulf %134, %135 : vector<2x88xf32>
    %137 = vector.broadcast %28 : vector<1x88xf32> to vector<2x88xf32>
    %138 = arith.addf %136, %137 : vector<2x88xf32>
    %cst_58 = arith.constant 6.000000e+00 : f32
    %139 = vector.broadcast %cst_58 : f32 to vector<2x88xf32>
    %140 = arith.divf %138, %139 : vector<2x88xf32>
    %cst_59 = arith.constant 5.000000e-01 : f32
    %141 = vector.broadcast %cst_59 : f32 to vector<2x88xf32>
    %142 = arith.addf %140, %141 : vector<2x88xf32>
    %cst_60 = arith.constant 0.000000e+00 : f32
    %cst_61 = arith.constant 1.000000e+00 : f32
    %143 = vector.broadcast %cst_60 : f32 to vector<2x88xf32>
    %144 = arith.maximumf %143, %142 : vector<2x88xf32>
    %145 = vector.broadcast %cst_61 : f32 to vector<2x88xf32>
    %146 = arith.minimumf %145, %144 : vector<2x88xf32>
    %147 = arith.mulf %138, %146 : vector<2x88xf32>
    %c2_62 = arith.constant 2 : index
    %c0_63 = arith.constant 0 : index
    %148 = vector.load %arg13[%c2_62, %c0_63] : memref<4x88xf32, #tpu.memory_space<vmem>>, vector<2x88xf32>
    tpu.vector_store %arg13[%c2_62, %c0_63], %147 {strides = array<i32>} : memref<4x88xf32, #tpu.memory_space<vmem>>, vector<2x88xf32>,
    %c0_64 = arith.constant 0 : index
    %c0_65 = arith.constant 0 : index
    %149 = vector.load %arg13[%c0_64, %c0_65] : memref<4x88xf32, #tpu.memory_space<vmem>>, vector<4x88xf32>
    %150 = arith.truncf %149 : vector<4x88xf32> to vector<4x88xbf16>
    %c0_66 = arith.constant 0 : index
    %c0_67 = arith.constant 0 : index
    %151 = vector.load %arg8[%c0_66, %c0_67] : memref<88x24xbf16, #tpu.memory_space<vmem>>, vector<88x24xbf16>
    %cst_68 = arith.constant dense<0.000000e+00> : vector<4x24xf32>
    %152 = tpu.matmul %150, %151, %cst_68 {dimension_numbers = #tpu.dot_dimension_numbers<[1], [0], [0], [1], [0, 0, 1, 1], [], []>} : vector<4x88xbf16>, vector<88x24xbf16>, vector<4x24xf32> -> vector<4x24xf32>
    %c0_69 = arith.constant 0 : index
    %c0_70 = arith.constant 0 : index
    %153 = vector.load %arg9[%c0_69, %c0_70] : memref<1x24xf32, #tpu.memory_space<vmem>>, vector<1x24xf32>
    %154 = vector.broadcast %153 : vector<1x24xf32> to vector<4x24xf32>
    %155 = arith.mulf %152, %154 : vector<4x24xf32>
    %c0_71 = arith.constant 0 : index
    %c0_72 = arith.constant 0 : index
    %156 = vector.load %arg10[%c0_71, %c0_72] : memref<1x24xf32, #tpu.memory_space<vmem>>, vector<1x24xf32>
    %157 = vector.broadcast %156 : vector<1x24xf32> to vector<4x24xf32>
    %158 = arith.addf %155, %157 : vector<4x24xf32>
    %159 = arith.addf %158, %1 : vector<4x24xf32>
    %c0_73 = arith.constant 0 : index
    %c0_74 = arith.constant 0 : index
    %c0_75 = arith.constant 0 : index
    %160 = vector.load %arg11[%c0_73, %c0_74, %c0_75] : memref<1x4x24xf32, #tpu.memory_space<vmem>>, vector<1x4x24xf32>
    %161 = vector.shape_cast %160 : vector<1x4x24xf32> to vector<4x24xf32>
    %162 = vector.shape_cast %159 : vector<4x24xf32> to vector<1x4x24xf32>
    tpu.vector_store %arg11[%c0_73, %c0_74, %c0_75], %162 {strides = array<i32>} : memref<1x4x24xf32, #tpu.memory_space<vmem>>, vector<1x4x24xf32>,
    return
  }
  func.func @transform_0(%arg0: i32) -> (i32, i32, i32) {
    %c0_i32 = arith.constant 0 : i32
    %c0_i32_0 = arith.constant 0 : i32
    %c0_i32_1 = arith.constant 0 : i32
    return %arg0, %c0_i32, %c0_i32_0 : i32, i32, i32
  }
  func.func @transform_1(%arg0: i32) -> (i32, i32) {
    %c0_i32 = arith.constant 0 : i32
    %c0_i32_0 = arith.constant 0 : i32
    %c0_i32_1 = arith.constant 0 : i32
    return %c0_i32, %c0_i32_0 : i32, i32
  }
  func.func @transform_2(%arg0: i32) -> (i32, i32) {
    %c0_i32 = arith.constant 0 : i32
    %c0_i32_0 = arith.constant 0 : i32
    %c0_i32_1 = arith.constant 0 : i32
    return %c0_i32, %c0_i32_0 : i32, i32
  }
  func.func @transform_3(%arg0: i32) -> (i32, i32) {
    %c0_i32 = arith.constant 0 : i32
    %c0_i32_0 = arith.constant 0 : i32
    %c0_i32_1 = arith.constant 0 : i32
    return %c0_i32, %c0_i32_0 : i32, i32
  }
  func.func @transform_4(%arg0: i32) -> (i32, i32) {
    %c0_i32 = arith.constant 0 : i32
    %c0_i32_0 = arith.constant 0 : i32
    %c0_i32_1 = arith.constant 0 : i32
    return %c0_i32, %c0_i32_0 : i32, i32
  }
  func.func @transform_5(%arg0: i32) -> (i32, i32) {
    %c0_i32 = arith.constant 0 : i32
    %c0_i32_0 = arith.constant 0 : i32
    %c0_i32_1 = arith.constant 0 : i32
    return %c0_i32, %c0_i32_0 : i32, i32
  }
  func.func @transform_6(%arg0: i32) -> (i32, i32) {
    %c0_i32 = arith.constant 0 : i32
    %c0_i32_0 = arith.constant 0 : i32
    %c0_i32_1 = arith.constant 0 : i32
    return %c0_i32, %c0_i32_0 : i32, i32
  }
  func.func @transform_7(%arg0: i32) -> (i32, i32) {
    %c0_i32 = arith.constant 0 : i32
    %c0_i32_0 = arith.constant 0 : i32
    %c0_i32_1 = arith.constant 0 : i32
    return %c0_i32, %c0_i32_0 : i32, i32
  }
  func.func @transform_8(%arg0: i32) -> (i32, i32) {
    %c0_i32 = arith.constant 0 : i32
    %c0_i32_0 = arith.constant 0 : i32
    %c0_i32_1 = arith.constant 0 : i32
    return %c0_i32, %c0_i32_0 : i32, i32
  }
  func.func @transform_9(%arg0: i32) -> (i32, i32) {
    %c0_i32 = arith.constant 0 : i32
    %c0_i32_0 = arith.constant 0 : i32
    %c0_i32_1 = arith.constant 0 : i32
    return %c0_i32, %c0_i32_0 : i32, i32
  }
  func.func @transform_10(%arg0: i32) -> (i32, i32, i32) {
    %c0_i32 = arith.constant 0 : i32
    %c0_i32_0 = arith.constant 0 : i32
    %c0_i32_1 = arith.constant 0 : i32
    return %arg0, %c0_i32, %c0_i32_0 : i32, i32, i32
  }
}

module attributes {stable_mosaic.version = 11 : i64} {
  func.func @_mm_kernel(%arg0: i32, %arg1: memref<8x24xf32, #tpu.memory_space<vmem>>, %arg2: memref<24x144xbf16, #tpu.memory_space<vmem>>, %arg3: memref<1x144xf32, #tpu.memory_space<vmem>>, %arg4: memref<1x144xf32, #tpu.memory_space<vmem>>, %arg5: memref<8x144xf32, #tpu.memory_space<vmem>>) attributes {dimension_semantics = [#tpu.dimension_semantics<parallel>], iteration_bounds = array<i64: 1>, scalar_prefetch = 0 : i64, scratch_operands = 0 : i64, tpu.core_type = #tpu.core_type<tc>, window_params = [{transform_indices = @transform_0, window_bounds = array<i64: 8, 24>}, {pipeline_mode = #tpu.pipeline_mode<synchronous>, transform_indices = @transform_1, window_bounds = array<i64: 24, 144>}, {pipeline_mode = #tpu.pipeline_mode<synchronous>, transform_indices = @transform_2, window_bounds = array<i64: 1, 144>}, {pipeline_mode = #tpu.pipeline_mode<synchronous>, transform_indices = @transform_3, window_bounds = array<i64: 1, 144>}, {transform_indices = @transform_4, window_bounds = array<i64: 8, 144>}]} {
    %c0 = arith.constant 0 : index
    %c0_0 = arith.constant 0 : index
    %0 = vector.load %arg1[%c0, %c0_0] : memref<8x24xf32, #tpu.memory_space<vmem>>, vector<8x24xf32>
    %1 = arith.truncf %0 : vector<8x24xf32> to vector<8x24xbf16>
    %c0_1 = arith.constant 0 : index
    %c0_2 = arith.constant 0 : index
    %2 = vector.load %arg2[%c0_1, %c0_2] : memref<24x144xbf16, #tpu.memory_space<vmem>>, vector<24x144xbf16>
    %cst = arith.constant dense<0.000000e+00> : vector<8x144xf32>
    %3 = tpu.matmul %1, %2, %cst {dimension_numbers = #tpu.dot_dimension_numbers<[1], [0], [0], [1], [0, 0, 1, 1], [], []>} : vector<8x24xbf16>, vector<24x144xbf16>, vector<8x144xf32> -> vector<8x144xf32>
    %c0_3 = arith.constant 0 : index
    %c0_4 = arith.constant 0 : index
    %4 = vector.load %arg3[%c0_3, %c0_4] : memref<1x144xf32, #tpu.memory_space<vmem>>, vector<1x144xf32>
    %5 = vector.broadcast %4 : vector<1x144xf32> to vector<8x144xf32>
    %6 = arith.mulf %3, %5 : vector<8x144xf32>
    %c0_5 = arith.constant 0 : index
    %c0_6 = arith.constant 0 : index
    %7 = vector.load %arg4[%c0_5, %c0_6] : memref<1x144xf32, #tpu.memory_space<vmem>>, vector<1x144xf32>
    %8 = vector.broadcast %7 : vector<1x144xf32> to vector<8x144xf32>
    %9 = arith.addf %6, %8 : vector<8x144xf32>
    %cst_7 = arith.constant 6.000000e+00 : f32
    %10 = vector.broadcast %cst_7 : f32 to vector<8x144xf32>
    %11 = arith.divf %9, %10 : vector<8x144xf32>
    %cst_8 = arith.constant 5.000000e-01 : f32
    %12 = vector.broadcast %cst_8 : f32 to vector<8x144xf32>
    %13 = arith.addf %11, %12 : vector<8x144xf32>
    %cst_9 = arith.constant 0.000000e+00 : f32
    %cst_10 = arith.constant 1.000000e+00 : f32
    %14 = vector.broadcast %cst_9 : f32 to vector<8x144xf32>
    %15 = arith.maximumf %14, %13 : vector<8x144xf32>
    %16 = vector.broadcast %cst_10 : f32 to vector<8x144xf32>
    %17 = arith.minimumf %16, %15 : vector<8x144xf32>
    %18 = arith.mulf %9, %17 : vector<8x144xf32>
    %c0_11 = arith.constant 0 : index
    %c0_12 = arith.constant 0 : index
    %19 = vector.load %arg5[%c0_11, %c0_12] : memref<8x144xf32, #tpu.memory_space<vmem>>, vector<8x144xf32>
    tpu.vector_store %arg5[%c0_11, %c0_12], %18 {strides = array<i32>} : memref<8x144xf32, #tpu.memory_space<vmem>>, vector<8x144xf32>,
    return
  }
  func.func @transform_0(%arg0: i32) -> (i32, i32) {
    %c0_i32 = arith.constant 0 : i32
    %c0_i32_0 = arith.constant 0 : i32
    return %arg0, %c0_i32 : i32, i32
  }
  func.func @transform_1(%arg0: i32) -> (i32, i32) {
    %c0_i32 = arith.constant 0 : i32
    %c0_i32_0 = arith.constant 0 : i32
    %c0_i32_1 = arith.constant 0 : i32
    return %c0_i32, %c0_i32_0 : i32, i32
  }
  func.func @transform_2(%arg0: i32) -> (i32, i32) {
    %c0_i32 = arith.constant 0 : i32
    %c0_i32_0 = arith.constant 0 : i32
    %c0_i32_1 = arith.constant 0 : i32
    return %c0_i32, %c0_i32_0 : i32, i32
  }
  func.func @transform_3(%arg0: i32) -> (i32, i32) {
    %c0_i32 = arith.constant 0 : i32
    %c0_i32_0 = arith.constant 0 : i32
    %c0_i32_1 = arith.constant 0 : i32
    return %c0_i32, %c0_i32_0 : i32, i32
  }
  func.func @transform_4(%arg0: i32) -> (i32, i32) {
    %c0_i32 = arith.constant 0 : i32
    %c0_i32_0 = arith.constant 0 : i32
    return %arg0, %c0_i32 : i32, i32
  }
}

module attributes {stable_mosaic.version = 11 : i64} {
  func.func @_head_kernel(%arg0: memref<2x4x144xf32, #tpu.memory_space<vmem>>, %arg1: memref<2x4xf32, #tpu.memory_space<vmem>>, %arg2: memref<144x32xbf16, #tpu.memory_space<vmem>>, %arg3: memref<1x32xf32, #tpu.memory_space<vmem>>, %arg4: memref<32x5xbf16, #tpu.memory_space<vmem>>, %arg5: memref<4x5xbf16, #tpu.memory_space<vmem>>, %arg6: memref<1x5xf32, #tpu.memory_space<vmem>>, %arg7: memref<2x144xf32, #tpu.memory_space<vmem>>, %arg8: memref<2x5xf32, #tpu.memory_space<vmem>>) attributes {dimension_semantics = [], scalar_prefetch = 0 : i64, scratch_operands = 0 : i64, tpu.core_type = #tpu.core_type<tc>} {
    %c0 = arith.constant 0 : index
    %c0_0 = arith.constant 0 : index
    %c0_1 = arith.constant 0 : index
    %0 = vector.load %arg0[%c0, %c0_0, %c0_1] : memref<2x4x144xf32, #tpu.memory_space<vmem>>, vector<2x4x144xf32>
    %cst = arith.constant dense<0.000000e+00> : vector<2x144xf32>
    %1 = vector.multi_reduction <add>, %0, %cst [1] : vector<2x4x144xf32> to vector<2x144xf32>
    %cst_2 = arith.constant 4.000000e+00 : f32
    %2 = vector.broadcast %cst_2 : f32 to vector<2x144xf32>
    %3 = arith.divf %1, %2 : vector<2x144xf32>
    %c0_3 = arith.constant 0 : index
    %c0_4 = arith.constant 0 : index
    %4 = vector.load %arg7[%c0_3, %c0_4] : memref<2x144xf32, #tpu.memory_space<vmem>>, vector<2x144xf32>
    tpu.vector_store %arg7[%c0_3, %c0_4], %3 {strides = array<i32>} : memref<2x144xf32, #tpu.memory_space<vmem>>, vector<2x144xf32>,
    %5 = arith.truncf %3 : vector<2x144xf32> to vector<2x144xbf16>
    %c0_5 = arith.constant 0 : index
    %c0_6 = arith.constant 0 : index
    %6 = vector.load %arg2[%c0_5, %c0_6] : memref<144x32xbf16, #tpu.memory_space<vmem>>, vector<144x32xbf16>
    %cst_7 = arith.constant dense<0.000000e+00> : vector<2x32xf32>
    %7 = tpu.matmul %5, %6, %cst_7 {dimension_numbers = #tpu.dot_dimension_numbers<[1], [0], [0], [1], [0, 0, 1, 1], [], []>} : vector<2x144xbf16>, vector<144x32xbf16>, vector<2x32xf32> -> vector<2x32xf32>
    %c0_8 = arith.constant 0 : index
    %c0_9 = arith.constant 0 : index
    %8 = vector.load %arg3[%c0_8, %c0_9] : memref<1x32xf32, #tpu.memory_space<vmem>>, vector<1x32xf32>
    %9 = vector.broadcast %8 : vector<1x32xf32> to vector<2x32xf32>
    %10 = arith.addf %7, %9 : vector<2x32xf32>
    %cst_10 = arith.constant 6.000000e+00 : f32
    %11 = vector.broadcast %cst_10 : f32 to vector<2x32xf32>
    %12 = arith.divf %10, %11 : vector<2x32xf32>
    %cst_11 = arith.constant 5.000000e-01 : f32
    %13 = vector.broadcast %cst_11 : f32 to vector<2x32xf32>
    %14 = arith.addf %12, %13 : vector<2x32xf32>
    %cst_12 = arith.constant 0.000000e+00 : f32
    %cst_13 = arith.constant 1.000000e+00 : f32
    %15 = vector.broadcast %cst_12 : f32 to vector<2x32xf32>
    %16 = arith.maximumf %15, %14 : vector<2x32xf32>
    %17 = vector.broadcast %cst_13 : f32 to vector<2x32xf32>
    %18 = arith.minimumf %17, %16 : vector<2x32xf32>
    %19 = arith.mulf %10, %18 : vector<2x32xf32>
    %20 = arith.truncf %19 : vector<2x32xf32> to vector<2x32xbf16>
    %c0_14 = arith.constant 0 : index
    %c0_15 = arith.constant 0 : index
    %21 = vector.load %arg4[%c0_14, %c0_15] : memref<32x5xbf16, #tpu.memory_space<vmem>>, vector<32x5xbf16>
    %cst_16 = arith.constant dense<0.000000e+00> : vector<2x5xf32>
    %22 = tpu.matmul %20, %21, %cst_16 {dimension_numbers = #tpu.dot_dimension_numbers<[1], [0], [0], [1], [0, 0, 1, 1], [], []>} : vector<2x32xbf16>, vector<32x5xbf16>, vector<2x5xf32> -> vector<2x5xf32>
    %c0_17 = arith.constant 0 : index
    %c0_18 = arith.constant 0 : index
    %23 = vector.load %arg6[%c0_17, %c0_18] : memref<1x5xf32, #tpu.memory_space<vmem>>, vector<1x5xf32>
    %24 = vector.broadcast %23 : vector<1x5xf32> to vector<2x5xf32>
    %25 = arith.addf %22, %24 : vector<2x5xf32>
    %c0_19 = arith.constant 0 : index
    %c0_20 = arith.constant 0 : index
    %26 = vector.load %arg1[%c0_19, %c0_20] : memref<2x4xf32, #tpu.memory_space<vmem>>, vector<2x4xf32>
    %27 = arith.truncf %26 : vector<2x4xf32> to vector<2x4xbf16>
    %c0_21 = arith.constant 0 : index
    %c0_22 = arith.constant 0 : index
    %28 = vector.load %arg5[%c0_21, %c0_22] : memref<4x5xbf16, #tpu.memory_space<vmem>>, vector<4x5xbf16>
    %cst_23 = arith.constant dense<0.000000e+00> : vector<2x5xf32>
    %29 = tpu.matmul %27, %28, %cst_23 {dimension_numbers = #tpu.dot_dimension_numbers<[1], [0], [0], [1], [0, 0, 1, 1], [], []>} : vector<2x4xbf16>, vector<4x5xbf16>, vector<2x5xf32> -> vector<2x5xf32>
    %30 = arith.addf %25, %29 : vector<2x5xf32>
    %c0_24 = arith.constant 0 : index
    %c0_25 = arith.constant 0 : index
    %31 = vector.load %arg8[%c0_24, %c0_25] : memref<2x5xf32, #tpu.memory_space<vmem>>, vector<2x5xf32>
    tpu.vector_store %arg8[%c0_24, %c0_25], %30 {strides = array<i32>} : memref<2x5xf32, #tpu.memory_space<vmem>>, vector<2x5xf32>,
    return
  }
}

</mosaic_0001>

<llo_original>
// kernel: _lambda_.6
$region0: #{_lambda_.6}
  #allocation0 [shape = 'u32[]', space=smem, size = 0x4, offset = 0x4, fixed_abs, tag = 'smem constant byte address 0x4 - core index']
  #allocation1 [shape = 'u32[144,128]{1,0:T(1,128)}', space=vmem, size = 0x12000, scoped, tag = 'internal scratch']
  %s0 = inlined_call_operand.vmem [shape: f32[128,27], index: 0, kind: input, shape index: {}]
  %s1 = inlined_call_operand.vmem [shape: bf16[27,16], index: 1, kind: input, shape index: {}]
  %s2 = inlined_call_operand.vmem [shape: f32[1,16], index: 2, kind: input, shape index: {}]
  %s3 = inlined_call_operand.vmem [shape: f32[1,16], index: 3, kind: input, shape index: {}]
  %s4 = inlined_call_operand.vmem [shape: f32[128,16], index: 4, kind: output, shape index: {}]
  %s5 = sld [smem:[#allocation0]]
  $region26: #{_lambda_.6} parent=0
    _
  %s7 = ssub.s32 1, %s5
  %s8 = scalar_select 0, %s7, %s5
  // Predicated region
  $region2: #{_lambda_.6} parent=0 // pred_check
    _
  $region3: #{_lambda_.6} parent=0 // pred_check_branch
    %10 = sbr.rel (0) target = $region5
  $region4: #{_lambda_.6} parent=0 // pred_region
    _
  $region5: #{_lambda_.6} parent=0 // pred_fallthru
    _
  // Predicated region
  $region6: #{_lambda_.6} parent=0 // pred_check
    _
  $region7: #{_lambda_.6} parent=0 // pred_check_branch
    %12 = sbr.rel (0) target = $region9
  $region8: #{_lambda_.6} parent=0 // pred_region
    _
  $region9: #{_lambda_.6} parent=0 // pred_fallthru
    _
  // Predicated region
  $region10: #{_lambda_.6} parent=0 // pred_check
    _
  $region11: #{_lambda_.6} parent=0 // pred_check_branch
    %14 = sbr.rel (0) target = $region13
  $region12: #{_lambda_.6} parent=0 // pred_region
    _
  $region13: #{_lambda_.6} parent=0 // pred_fallthru
    _
  // Predicated region
  $region14: #{_lambda_.6} parent=0 // pred_check
    _
  $region15: #{_lambda_.6} parent=0 // pred_check_branch
    %16 = sbr.rel (0) target = $region17
  $region16: #{_lambda_.6} parent=0 // pred_region
    _
  $region17: #{_lambda_.6} parent=0 // pred_fallthru
    _
  %v18 = vld [vmem:[%s0] sm:$0xff]
  %v19 = vld [vmem:[%s0 + $0x8] sm:$0xff]
  %v20 = vld [vmem:[%s0 + $0x10] sm:$0xff]
  %v21 = vld [vmem:[%s0 + $0x18] sm:$0xff]
  %v22 = vld [vmem:[%s0 + $0x20] sm:$0xff]
  %v23 = vld [vmem:[%s0 + $0x28] sm:$0xff]
  %v24 = vld [vmem:[%s0 + $0x30] sm:$0xff]
  %v25 = vld [vmem:[%s0 + $0x38] sm:$0xff]
  %v26 = vld [vmem:[%s0 + $0x40] sm:$0xff]
  %v27 = vld [vmem:[%s0 + $0x48] sm:$0xff]
  %v28 = vld [vmem:[%s0 + $0x50] sm:$0xff]
  %v29 = vld [vmem:[%s0 + $0x58] sm:$0xff]
  %v30 = vld [vmem:[%s0 + $0x60] sm:$0xff]
  %v31 = vld [vmem:[%s0 + $0x68] sm:$0xff]
  %v32 = vld [vmem:[%s0 + $0x70] sm:$0xff]
  %v33 = vld [vmem:[%s0 + $0x78] sm:$0xff]
  %v34 = vpack.c.bf16 %v19, %v18
  %v35 = vpack.c.bf16 %v21, %v20
  %v36 = vpack.c.bf16 %v23, %v22
  %v37 = vpack.c.bf16 %v25, %v24
  %v38 = vpack.c.bf16 %v27, %v26
  %v39 = vpack.c.bf16 %v29, %v28
  %v40 = vpack.c.bf16 %v31, %v30
  %v41 = vpack.c.bf16 %v33, %v32
  %v42 = vld [vmem:[%s1] sm:$0xf]
  %v43 = vld [vmem:[%s1 + $0x4] sm:$0xf]
  %v44 = vld [vmem:[%s1 + $0x8] sm:$0xf]
  %v45 = vld [vmem:[%s1 + $0xc] sm:$0x3]
  %v50 = vunpack.c.l.b16 %v42
  %v51 = vunpack.c.l.b16 %v43
  %v52 = vunpack.c.l.b16 %v44
  %v53 = vunpack.c.l.b16 %v45
  %v54 = vpack.c.b16 %v51, %v50
  %v55 = vpack.c.b16 %v53, %v52
  %vm57 = vcmask 220160
  %v59 = vsel %vm57, %v34, 0
  %v62 = vsel %vm57, %v35, 0
  %v65 = vsel %vm57, %v36, 0
  %v68 = vsel %vm57, %v37, 0
  %v71 = vsel %vm57, %v38, 0
  %v74 = vsel %vm57, %v39, 0
  %v77 = vsel %vm57, %v40, 0
  %v80 = vsel %vm57, %v41, 0
  %vm82 = vcmask 1044480
  %vm83 = vcmask 1045504
  %v84 = vsel %vm82, 4294967295, 65535
  %v85 = vsel %vm83, %v84, 0
  %v87 = vand.u32 %v55, %v85
  %89 = vmatprep.subr.bf16.mxu0 0
  %90 = vmatpush1.bf16.msra.mxu0 0
  %91 = vmatprep.subr.bf16.mxu0 0
  %92 = vmatpush1.bf16.msra.mxu0 0
  %93 = vmatprep.subr.bf16.mxu0 0
  %94 = vmatpush1.bf16.msra.mxu0 0
  %95 = vmatprep.subr.bf16.mxu0 0
  %96 = vmatpush1.bf16.msra.mxu0 0
  %97 = vmatprep.subr.bf16.mxu0 0
  %98 = vmatpush1.bf16.msra.mxu0 0
  %99 = vmatprep.subr.bf16.mxu0 0
  %100 = vmatpush1.bf16.msra.mxu0 0
  %101 = vmatprep.subr.bf16.mxu0 0
  %102 = vmatpush1.bf16.msra.mxu0 %v87
  %103 = vmatprep.subr.bf16.mxu0 0
  %104 = vmatpush1.bf16.msra.mxu0 %v54
  %105 = vmatprep.subr.bf16.mxu0 0
  %106 = vmatpush2.bf16.msra.mxu0 0
  %107 = vmatprep.subr.bf16.mxu0 0
  %108 = vmatpush2.bf16.msra.mxu0 0
  %109 = vmatprep.subr.bf16.mxu0 0
  %110 = vmatpush2.bf16.msra.mxu0 0
  %111 = vmatprep.subr.bf16.mxu0 0
  %112 = vmatpush2.bf16.msra.mxu0 0
  %113 = vmatprep.subr.bf16.mxu0 0
  %114 = vmatpush2.bf16.msra.mxu0 0
  %115 = vmatprep.subr.bf16.mxu0 0
  %116 = vmatpush2.bf16.msra.mxu0 0
  %117 = vmatprep.subr.bf16.mxu0 0
  %118 = vmatpush2.bf16.msra.mxu0 0
  %119 = vmatprep.subr.bf16.mxu0 0
  %120 = vmatpush2.bf16.msra.mxu0 0
  %121 = vmatprep.mubr.bf16.mxu0 0
  %122 = vmatmul.mubr.bf16.gmra.mxu0 %v59
  %v123 = vpop.f32.mrf.mxu0
  %v124 = vadd.f32 0.0, %v123
  %v125 = vpop.f32.mrf.mxu0
  %v126 = vpop.f32.mrf.mxu0
  %v127 = vadd.f32 0.0, %v126
  %v128 = vpop.f32.mrf.mxu0
  %129 = vmatprep.mubr.bf16.mxu0 0
  %130 = vmatmul.mubr.bf16.gmra.mxu0 %v62
  %v131 = vpop.f32.mrf.mxu0
  %v132 = vadd.f32 0.0, %v131
  %v133 = vpop.f32.mrf.mxu0
  %v134 = vpop.f32.mrf.mxu0
  %v135 = vadd.f32 0.0, %v134
  %v136 = vpop.f32.mrf.mxu0
  %137 = vmatprep.mubr.bf16.mxu0 0
  %138 = vmatmul.mubr.bf16.gmra.mxu0 %v65
  %v139 = vpop.f32.mrf.mxu0
  %v140 = vadd.f32 0.0, %v139
  %v141 = vpop.f32.mrf.mxu0
  %v142 = vpop.f32.mrf.mxu0
  %v143 = vadd.f32 0.0, %v142
  %v144 = vpop.f32.mrf.mxu0
  %145 = vmatprep.mubr.bf16.mxu0 0
  %146 = vmatmul.mubr.bf16.gmra.mxu0 %v68
  %v147 = vpop.f32.mrf.mxu0
  %v148 = vadd.f32 0.0, %v147
  %v149 = vpop.f32.mrf.mxu0
  %v150 = vpop.f32.mrf.mxu0
  %v151 = vadd.f32 0.0, %v150
  %v152 = vpop.f32.mrf.mxu0
  %153 = vmatprep.mubr.bf16.mxu0 0
  %154 = vmatmul.mubr.bf16.gmra.mxu0 %v71
  %v155 = vpop.f32.mrf.mxu0
  %v156 = vadd.f32 0.0, %v155
  %v157 = vpop.f32.mrf.mxu0
  %v158 = vpop.f32.mrf.mxu0
  %v159 = vadd.f32 0.0, %v158
  %v160 = vpop.f32.mrf.mxu0
  %161 = vmatprep.mubr.bf16.mxu0 0
  %162 = vmatmul.mubr.bf16.gmra.mxu0 %v74
  %v163 = vpop.f32.mrf.mxu0
  %v164 = vadd.f32 0.0, %v163
  %v165 = vpop.f32.mrf.mxu0
  %v166 = vpop.f32.mrf.mxu0
  %v167 = vadd.f32 0.0, %v166
  %v168 = vpop.f32.mrf.mxu0
  %169 = vmatprep.mubr.bf16.mxu0 0
  %170 = vmatmul.mubr.bf16.gmra.mxu0 %v77
  %v171 = vpop.f32.mrf.mxu0
  %v172 = vadd.f32 0.0, %v171
  %v173 = vpop.f32.mrf.mxu0
  %v174 = vpop.f32.mrf.mxu0
  %v175 = vadd.f32 0.0, %v174
  %v176 = vpop.f32.mrf.mxu0
  %177 = vmatprep.mubr.bf16.mxu0 0
  %178 = vmatmul.mubr.bf16.gmra.mxu0 %v80
  %v179 = vpop.f32.mrf.mxu0
  %v180 = vadd.f32 0.0, %v179
  %v181 = vpop.f32.mrf.mxu0
  %v182 = vpop.f32.mrf.mxu0
  %v183 = vadd.f32 0.0, %v182
  %v184 = vpop.f32.mrf.mxu0
  %185 = vdwg.mxu0
  %v186 = vld [vmem:[%s2] sm:$0x1]
  %v188 = vlaneseq
  %v189 = vshrl.u32 %v188, 7
  %v190 = vsub.s32 0, %v189
  %v191 = vrot.slane %v186, %v190
  %v193 = vmul.f32 %v124, %v191
  %v194 = vmul.f32 %v127, %v191
  %v195 = vmul.f32 %v132, %v191
  %v196 = vmul.f32 %v135, %v191
  %v197 = vmul.f32 %v140, %v191
  %v198 = vmul.f32 %v143, %v191
  %v199 = vmul.f32 %v148, %v191
  %v200 = vmul.f32 %v151, %v191
  %v201 = vmul.f32 %v156, %v191
  %v202 = vmul.f32 %v159, %v191
  %v203 = vmul.f32 %v164, %v191
  %v204 = vmul.f32 %v167, %v191
  %v205 = vmul.f32 %v172, %v191
  %v206 = vmul.f32 %v175, %v191
  %v207 = vmul.f32 %v180, %v191
  %v208 = vmul.f32 %v183, %v191
  %v209 = vld [vmem:[%s3] sm:$0x1]
  %v211 = vlaneseq
  %v212 = vshrl.u32 %v211, 7
  %v213 = vsub.s32 0, %v212
  %v214 = vrot.slane %v209, %v213
  %v216 = vadd.f32 %v193, %v214
  %v217 = vadd.f32 %v194, %v214
  %v218 = vadd.f32 %v195, %v214
  %v219 = vadd.f32 %v196, %v214
  %v220 = vadd.f32 %v197, %v214
  %v221 = vadd.f32 %v198, %v214
  %v222 = vadd.f32 %v199, %v214
  %v223 = vadd.f32 %v200, %v214
  %v224 = vadd.f32 %v201, %v214
  %v225 = vadd.f32 %v202, %v214
  %v226 = vadd.f32 %v203, %v214
  %v227 = vadd.f32 %v204, %v214
  %v228 = vadd.f32 %v205, %v214
  %v229 = vadd.f32 %v206, %v214
  %v230 = vadd.f32 %v207, %v214
  %v231 = vadd.f32 %v208, %v214
  %v232 = vrcp.pop 6.0
  %v233 = vmul.f32 %v216, %v232
  %v234 = vmul.f32 %v217, %v232
  %v235 = vmul.f32 %v218, %v232
  %v236 = vmul.f32 %v219, %v232
  %v237 = vmul.f32 %v220, %v232
  %v238 = vmul.f32 %v221, %v232
  %v239 = vmul.f32 %v222, %v232
  %v240 = vmul.f32 %v223, %v232
  %v241 = vmul.f32 %v224, %v232
  %v242 = vmul.f32 %v225, %v232
  %v243 = vmul.f32 %v226, %v232
  %v244 = vmul.f32 %v227, %v232
  %v245 = vmul.f32 %v228, %v232
  %v246 = vmul.f32 %v229, %v232
  %v247 = vmul.f32 %v230, %v232
  %v248 = vmul.f32 %v231, %v232
  %v249 = vadd.f32 %v233, 0.5
  %v250 = vadd.f32 %v234, 0.5
  %v251 = vadd.f32 %v235, 0.5
  %v252 = vadd.f32 %v236, 0.5
  %v253 = vadd.f32 %v237, 0.5
  %v254 = vadd.f32 %v238, 0.5
  %v255 = vadd.f32 %v239, 0.5
  %v256 = vadd.f32 %v240, 0.5
  %v257 = vadd.f32 %v241, 0.5
  %v258 = vadd.f32 %v242, 0.5
  %v259 = vadd.f32 %v243, 0.5
  %v260 = vadd.f32 %v244, 0.5
  %v261 = vadd.f32 %v245, 0.5
  %v262 = vadd.f32 %v246, 0.5
  %v263 = vadd.f32 %v247, 0.5
  %v264 = vadd.f32 %v248, 0.5
  %v265 = vmax.f32 %v249, 0.0
  %v266 = vmax.f32 %v250, 0.0
  %v267 = vmax.f32 %v251, 0.0
  %v268 = vmax.f32 %v252, 0.0
  %v269 = vmax.f32 %v253, 0.0
  %v270 = vmax.f32 %v254, 0.0
  %v271 = vmax.f32 %v255, 0.0
  %v272 = vmax.f32 %v256, 0.0
  %v273 = vmax.f32 %v257, 0.0
  %v274 = vmax.f32 %v258, 0.0
  %v275 = vmax.f32 %v259, 0.0
  %v276 = vmax.f32 %v260, 0.0
  %v277 = vmax.f32 %v261, 0.0
  %v278 = vmax.f32 %v262, 0.0
  %v279 = vmax.f32 %v263, 0.0
  %v280 = vmax.f32 %v264, 0.0
  %v281 = vmin.f32 %v265, 1.0
  %v282 = vmin.f32 %v266, 1.0
  %v283 = vmin.f32 %v267, 1.0
  %v284 = vmin.f32 %v268, 1.0
  %v285 = vmin.f32 %v269, 1.0
  %v286 = vmin.f32 %v270, 1.0
  %v287 = vmin.f32 %v271, 1.0
  %v288 = vmin.f32 %v272, 1.0
  %v289 = vmin.f32 %v273, 1.0
  %v290 = vmin.f32 %v274, 1.0
  %v291 = vmin.f32 %v275, 1.0
  %v292 = vmin.f32 %v276, 1.0
  %v293 = vmin.f32 %v277, 1.0
  %v294 = vmin.f32 %v278, 1.0
  %v295 = vmin.f32 %v279, 1.0
  %v296 = vmin.f32 %v280, 1.0
  %v297 = vmul.f32 %v216, %v281
  %v298 = vmul.f32 %v217, %v282
  %v299 = vmul.f32 %v218, %v283
  %v300 = vmul.f32 %v219, %v284
  %v301 = vmul.f32 %v220, %v285
  %v302 = vmul.f32 %v221, %v286
  %v303 = vmul.f32 %v222, %v287
  %v304 = vmul.f32 %v223, %v288
  %v305 = vmul.f32 %v224, %v289
  %v306 = vmul.f32 %v225, %v290
  %v307 = vmul.f32 %v226, %v291
  %v308 = vmul.f32 %v227, %v292
  %v309 = vmul.f32 %v228, %v293
  %v310 = vmul.f32 %v229, %v294
  %v311 = vmul.f32 %v230, %v295
  %v312 = vmul.f32 %v231, %v296
  %vm313 = vcmask 130048
  %314 = vst.msk [vmem:[%s4] sm:$0xff] %vm313, %v297
  %315 = vst.msk [vmem:[%s4 + $0x8] sm:$0xff] %vm313, %v298
  %316 = vst.msk [vmem:[%s4 + $0x10] sm:$0xff] %vm313, %v299
  %317 = vst.msk [vmem:[%s4 + $0x18] sm:$0xff] %vm313, %v300
  %318 = vst.msk [vmem:[%s4 + $0x20] sm:$0xff] %vm313, %v301
  %319 = vst.msk [vmem:[%s4 + $0x28] sm:$0xff] %vm313, %v302
  %320 = vst.msk [vmem:[%s4 + $0x30] sm:$0xff] %vm313, %v303
  %321 = vst.msk [vmem:[%s4 + $0x38] sm:$0xff] %vm313, %v304
  %322 = vst.msk [vmem:[%s4 + $0x40] sm:$0xff] %vm313, %v305
  %323 = vst.msk [vmem:[%s4 + $0x48] sm:$0xff] %vm313, %v306
  %324 = vst.msk [vmem:[%s4 + $0x50] sm:$0xff] %vm313, %v307
  %325 = vst.msk [vmem:[%s4 + $0x58] sm:$0xff] %vm313, %v308
  %326 = vst.msk [vmem:[%s4 + $0x60] sm:$0xff] %vm313, %v309
  %327 = vst.msk [vmem:[%s4 + $0x68] sm:$0xff] %vm313, %v310
  %328 = vst.msk [vmem:[%s4 + $0x70] sm:$0xff] %vm313, %v311
  %329 = vst.msk [vmem:[%s4 + $0x78] sm:$0xff] %vm313, %v312
  // Predicated region
  $region18: #{_lambda_.6} parent=0 // pred_check
    _
  $region19: #{_lambda_.6} parent=0 // pred_check_branch
    %331 = sbr.rel (0) target = $region21
  $region20: #{_lambda_.6} parent=0 // pred_region
    _
  $region21: #{_lambda_.6} parent=0 // pred_fallthru
    _
  // Predicated region
  $region22: #{_lambda_.6} parent=0 // pred_check
    _
  $region23: #{_lambda_.6} parent=0 // pred_check_branch
    %333 = sbr.rel (0) target = $region25
  $region24: #{_lambda_.6} parent=0 // pred_region
    _
  $region25: #{_lambda_.6} parent=0 // pred_fallthru
    _

// kernel: _lambda_.7
$region0: #{_lambda_.7}
  #allocation0 [shape = 'u32[]', space=smem, size = 0x4, offset = 0x4, fixed_abs, tag = 'smem constant byte address 0x4 - core index']
  #allocation1 [shape = 'u32[144,128]{1,0:T(1,128)}', space=vmem, size = 0x12000, scoped, tag = 'internal scratch']
  #allocation2 [shape = 'f32[100,16]{1,0:T(8,128)}', space=vmem, size = 0xd000, scoped, tag = 'scratch operand']
  #allocation3 [shape = 'f32[16,16]{1,0:T(8,128)}', space=vmem, size = 0x2000, scoped, tag = 'scratch operand']
  %s0 = inlined_call_operand.vmem [shape: f32[2,64,16], index: 0, kind: input, shape index: {}]
  %s1 = inlined_call_operand.vmem [shape: f32[9,16], index: 1, kind: input, shape index: {}]
  %s2 = inlined_call_operand.vmem [shape: f32[1,16], index: 2, kind: input, shape index: {}]
  %s3 = inlined_call_operand.vmem [shape: f32[1,16], index: 3, kind: input, shape index: {}]
  %s4 = inlined_call_operand.vmem [shape: bf16[16,8], index: 4, kind: input, shape index: {}]
  %s5 = inlined_call_operand.vmem [shape: f32[1,8], index: 5, kind: input, shape index: {}]
  %s6 = inlined_call_operand.vmem [shape: bf16[8,16], index: 6, kind: input, shape index: {}]
  %s7 = inlined_call_operand.vmem [shape: f32[1,16], index: 7, kind: input, shape index: {}]
  %s8 = inlined_call_operand.vmem [shape: bf16[16,16], index: 8, kind: input, shape index: {}]
  %s9 = inlined_call_operand.vmem [shape: f32[1,16], index: 9, kind: input, shape index: {}]
  %s10 = inlined_call_operand.vmem [shape: f32[1,16], index: 10, kind: input, shape index: {}]
  %s11 = inlined_call_operand.vmem [shape: f32[2,16,16], index: 11, kind: output, shape index: {}]
  %s12 = sld [smem:[#allocation0]]
  $region77: #{_lambda_.7} parent=0
    _
  %s14 = ssub.s32 1, %s12
  %s15 = scalar_select 0, %s14, %s12
  loop: start=0, step=1, limit=4
  $region2: #{_lambda_.7} parent=0 // loop_pre_header
    _
  $region3: #{_lambda_.7} parent=0 // loop_header
    %s17 = sphi 0, %s21
    %p18 = scmp.ge.s32.totalorder %s17, 4
    %s27 = sphi 0, %s29
    %s30 = sphi 0, %s27
    %s31 = sphi 0, %s30
    %s47 = sphi 0, %s31
    %s51 = sphi 0, %s51
    %s53 = sphi 0, %s51
    %s54 = sphi 0, %s53
    %s68 = sphi 0, %s54
    %s72 = sphi 0, %s72
    %s74 = sphi 0, %s72
    %s75 = sphi 0, %s74
    %s89 = sphi 0, %s75
    %s93 = sphi 0, %s93
    %s95 = sphi 0, %s93
    %s96 = sphi 0, %s95
    %s110 = sphi 0, %s96
    %s114 = sphi 0, %s114
    %s116 = sphi 0, %s114
    %s117 = sphi 0, %s116
    %s131 = sphi 0, %s117
    %s135 = sphi 0, %s135
    %s137 = sphi 0, %s135
    %s138 = sphi 0, %s137
    %s152 = sphi 0, %s138
    %s156 = sphi 0, %s156
    %s158 = sphi 0, %s156
    %s159 = sphi 0, %s158
    %s173 = sphi 0, %s159
    %s177 = sphi 0, %s177
    %s179 = sphi 0, %s177
    %s180 = sphi 0, %s179
    %s194 = sphi 0, %s180
    %s198 = sphi 0, %s198
    %s200 = sphi 0, %s198
    %s201 = sphi 0, %s200
    %s215 = sphi 0, %s201
    %s219 = sphi 0, %s219
    %s221 = sphi 0, %s219
    %s222 = sphi 0, %s221
    %s236 = sphi 0, %s222
    %s240 = sphi 0, %s240
    %s242 = sphi 0, %s240
    %s243 = sphi 0, %s242
    %s257 = sphi 0, %s243
    %s263 = sphi 0, %s265
    %s266 = sphi 0, %s263
    %s267 = sphi 0, %s266
    %s283 = sphi 0, %s267
  $region4: #{_lambda_.7} parent=0 // loop_header_branch
    %20 = sbr.rel (%p18) target = $region8
  $region5: #{_lambda_.7} parent=0 // loop_body
    %s22 = ssub.s32 %s17, 1
    %s23 = ssub.s32 %s17, 2
    %s24 = sadd.s32 %s17, 1
    %s25 = ssub.s32 %s17, %s24
    %p26 = scmp.eq.s32.totalorder %s25, 0
    %s28 = sadd.s32 %s27, 1
    %s29 = scalar_select %p26, %s27, %s28
    %p32 = pneg %p26
    %p33 = scmp.eq.s32.totalorder %s17, 1
    %p34 = por %p32, %p33
    %p35 = scmp.ne.s32.totalorder %s27, %s30
    %p36 = scmp.eq.s32.totalorder %s17, 0
    %p37 = por %p35, %p36
    %p38 = scmp.ne.s32.totalorder %s27, %s30
    %p39 = scmp.eq.s32.totalorder %s22, 1
    %p40 = por %p38, %p39
    %p41 = scmp.ne.s32.totalorder %s30, %s31
    %p42 = scmp.eq.s32.totalorder %s22, 0
    %p43 = por %p41, %p42
    %p44 = scmp.ne.s32.totalorder %s30, %s31
    %p45 = scmp.eq.s32.totalorder %s23, 1
    %p46 = por %p44, %p45
    %p48 = scmp.ne.s32.totalorder %s31, %s47
    %p49 = scmp.eq.s32.totalorder %s23, 0
    %p50 = por %p48, %p49
    %s52 = sadd.s32 %s51, 1
    %p55 = scmp.eq.s32.totalorder %s17, 1
    %p56 = scmp.ne.s32.totalorder %s51, %s53
    %p57 = scmp.eq.s32.totalorder %s17, 0
    %p58 = por %p56, %p57
    %p59 = scmp.ne.s32.totalorder %s51, %s53
    %p60 = scmp.eq.s32.totalorder %s22, 1
    %p61 = por %p59, %p60
    %p62 = scmp.ne.s32.totalorder %s53, %s54
    %p63 = scmp.eq.s32.totalorder %s22, 0
    %p64 = por %p62, %p63
    %p65 = scmp.ne.s32.totalorder %s53, %s54
    %p66 = scmp.eq.s32.totalorder %s23, 1
    %p67 = por %p65, %p66
    %p69 = scmp.ne.s32.totalorder %s54, %s68
    %p70 = scmp.eq.s32.totalorder %s23, 0
    %p71 = por %p69, %p70
    %s73 = sadd.s32 %s72, 1
    %p76 = scmp.eq.s32.totalorder %s17, 1
    %p77 = scmp.ne.s32.totalorder %s72, %s74
    %p78 = scmp.eq.s32.totalorder %s17, 0
    %p79 = por %p77, %p78
    %p80 = scmp.ne.s32.totalorder %s72, %s74
    %p81 = scmp.eq.s32.totalorder %s22, 1
    %p82 = por %p80, %p81
    %p83 = scmp.ne.s32.totalorder %s74, %s75
    %p84 = scmp.eq.s32.totalorder %s22, 0
    %p85 = por %p83, %p84
    %p86 = scmp.ne.s32.totalorder %s74, %s75
    %p87 = scmp.eq.s32.totalorder %s23, 1
    %p88 = por %p86, %p87
    %p90 = scmp.ne.s32.totalorder %s75, %s89
    %p91 = scmp.eq.s32.totalorder %s23, 0
    %p92 = por %p90, %p91
    %s94 = sadd.s32 %s93, 1
    %p97 = scmp.eq.s32.totalorder %s17, 1
    %p98 = scmp.ne.s32.totalorder %s93, %s95
    %p99 = scmp.eq.s32.totalorder %s17, 0
    %p100 = por %p98, %p99
    %p101 = scmp.ne.s32.totalorder %s93, %s95
    %p102 = scmp.eq.s32.totalorder %s22, 1
    %p103 = por %p101, %p102
    %p104 = scmp.ne.s32.totalorder %s95, %s96
    %p105 = scmp.eq.s32.totalorder %s22, 0
    %p106 = por %p104, %p105
    %p107 = scmp.ne.s32.totalorder %s95, %s96
    %p108 = scmp.eq.s32.totalorder %s23, 1
    %p109 = por %p107, %p108
    %p111 = scmp.ne.s32.totalorder %s96, %s110
    %p112 = scmp.eq.s32.totalorder %s23, 0
    %p113 = por %p111, %p112
    %s115 = sadd.s32 %s114, 1
    %p118 = scmp.eq.s32.totalorder %s17, 1
    %p119 = scmp.ne.s32.totalorder %s114, %s116
    %p120 = scmp.eq.s32.totalorder %s17, 0
    %p121 = por %p119, %p120
    %p122 = scmp.ne.s32.totalorder %s114, %s116
    %p123 = scmp.eq.s32.totalorder %s22, 1
    %p124 = por %p122, %p123
    %p125 = scmp.ne.s32.totalorder %s116, %s117
    %p126 = scmp.eq.s32.totalorder %s22, 0
    %p127 = por %p125, %p126
    %p128 = scmp.ne.s32.totalorder %s116, %s117
    %p129 = scmp.eq.s32.totalorder %s23, 1
    %p130 = por %p128, %p129
    %p132 = scmp.ne.s32.totalorder %s117, %s131
    %p133 = scmp.eq.s32.totalorder %s23, 0
    %p134 = por %p132, %p133
    %s136 = sadd.s32 %s135, 1
    %p139 = scmp.eq.s32.totalorder %s17, 1
    %p140 = scmp.ne.s32.totalorder %s135, %s137
    %p141 = scmp.eq.s32.totalorder %s17, 0
    %p142 = por %p140, %p141
    %p143 = scmp.ne.s32.totalorder %s135, %s137
    %p144 = scmp.eq.s32.totalorder %s22, 1
    %p145 = por %p143, %p144
    %p146 = scmp.ne.s32.totalorder %s137, %s138
    %p147 = scmp.eq.s32.totalorder %s22, 0
    %p148 = por %p146, %p147
    %p149 = scmp.ne.s32.totalorder %s137, %s138
    %p150 = scmp.eq.s32.totalorder %s23, 1
    %p151 = por %p149, %p150
    %p153 = scmp.ne.s32.totalorder %s138, %s152
    %p154 = scmp.eq.s32.totalorder %s23, 0
    %p155 = por %p153, %p154
    %s157 = sadd.s32 %s156, 1
    %p160 = scmp.eq.s32.totalorder %s17, 1
    %p161 = scmp.ne.s32.totalorder %s156, %s158
    %p162 = scmp.eq.s32.totalorder %s17, 0
    %p163 = por %p161, %p162
    %p164 = scmp.ne.s32.totalorder %s156, %s158
    %p165 = scmp.eq.s32.totalorder %s22, 1
    %p166 = por %p164, %p165
    %p167 = scmp.ne.s32.totalorder %s158, %s159
    %p168 = scmp.eq.s32.totalorder %s22, 0
    %p169 = por %p167, %p168
    %p170 = scmp.ne.s32.totalorder %s158, %s159
    %p171 = scmp.eq.s32.totalorder %s23, 1
    %p172 = por %p170, %p171
    %p174 = scmp.ne.s32.totalorder %s159, %s173
    %p175 = scmp.eq.s32.totalorder %s23, 0
    %p176 = por %p174, %p175
    %s178 = sadd.s32 %s177, 1
    %p181 = scmp.eq.s32.totalorder %s17, 1
    %p182 = scmp.ne.s32.totalorder %s177, %s179
    %p183 = scmp.eq.s32.totalorder %s17, 0
    %p184 = por %p182, %p183
    %p185 = scmp.ne.s32.totalorder %s177, %s179
    %p186 = scmp.eq.s32.totalorder %s22, 1
    %p187 = por %p185, %p186
    %p188 = scmp.ne.s32.totalorder %s179, %s180
    %p189 = scmp.eq.s32.totalorder %s22, 0
    %p190 = por %p188, %p189
    %p191 = scmp.ne.s32.totalorder %s179, %s180
    %p192 = scmp.eq.s32.totalorder %s23, 1
    %p193 = por %p191, %p192
    %p195 = scmp.ne.s32.totalorder %s180, %s194
    %p196 = scmp.eq.s32.totalorder %s23, 0
    %p197 = por %p195, %p196
    %s199 = sadd.s32 %s198, 1
    %p202 = scmp.eq.s32.totalorder %s17, 1
    %p203 = scmp.ne.s32.totalorder %s198, %s200
    %p204 = scmp.eq.s32.totalorder %s17, 0
    %p205 = por %p203, %p204
    %p206 = scmp.ne.s32.totalorder %s198, %s200
    %p207 = scmp.eq.s32.totalorder %s22, 1
    %p208 = por %p206, %p207
    %p209 = scmp.ne.s32.totalorder %s200, %s201
    %p210 = scmp.eq.s32.totalorder %s22, 0
    %p211 = por %p209, %p210
    %p212 = scmp.ne.s32.totalorder %s200, %s201
    %p213 = scmp.eq.s32.totalorder %s23, 1
    %p214 = por %p212, %p213
    %p216 = scmp.ne.s32.totalorder %s201, %s215
    %p217 = scmp.eq.s32.totalorder %s23, 0
    %p218 = por %p216, %p217
    %s220 = sadd.s32 %s219, 1
    %p223 = scmp.eq.s32.totalorder %s17, 1
    %p224 = scmp.ne.s32.totalorder %s219, %s221
    %p225 = scmp.eq.s32.totalorder %s17, 0
    %p226 = por %p224, %p225
    %p227 = scmp.ne.s32.totalorder %s219, %s221
    %p228 = scmp.eq.s32.totalorder %s22, 1
    %p229 = por %p227, %p228
    %p230 = scmp.ne.s32.totalorder %s221, %s222
    %p231 = scmp.eq.s32.totalorder %s22, 0
    %p232 = por %p230, %p231
    %p233 = scmp.ne.s32.totalorder %s221, %s222
    %p234 = scmp.eq.s32.totalorder %s23, 1
    %p235 = por %p233, %p234
    %p237 = scmp.ne.s32.totalorder %s222, %s236
    %p238 = scmp.eq.s32.totalorder %s23, 0
    %p239 = por %p237, %p238
    %s241 = sadd.s32 %s240, 1
    %p244 = scmp.eq.s32.totalorder %s17, 1
    %p245 = scmp.ne.s32.totalorder %s240, %s242
    %p246 = scmp.eq.s32.totalorder %s17, 0
    %p247 = por %p245, %p246
    %p248 = scmp.ne.s32.totalorder %s240, %s242
    %p249 = scmp.eq.s32.totalorder %s22, 1
    %p250 = por %p248, %p249
    %p251 = scmp.ne.s32.totalorder %s242, %s243
    %p252 = scmp.eq.s32.totalorder %s22, 0
    %p253 = por %p251, %p252
    %p254 = scmp.ne.s32.totalorder %s242, %s243
    %p255 = scmp.eq.s32.totalorder %s23, 1
    %p256 = por %p254, %p255
    %p258 = scmp.ne.s32.totalorder %s243, %s257
    %p259 = scmp.eq.s32.totalorder %s23, 0
    %p260 = por %p258, %p259
    %s261 = ssub.s32 %s17, %s24
    %p262 = scmp.eq.s32.totalorder %s261, 0
    %s264 = sadd.s32 %s263, 1
    %s265 = scalar_select %p262, %s263, %s264
    %p268 = pneg %p262
    %p269 = scmp.eq.s32.totalorder %s17, 1
    %p270 = por %p268, %p269
    %p271 = scmp.ne.s32.totalorder %s263, %s266
    %p272 = scmp.eq.s32.totalorder %s17, 0
    %p273 = por %p271, %p272
    %p274 = scmp.ne.s32.totalorder %s263, %s266
    %p275 = scmp.eq.s32.totalorder %s22, 1
    %p276 = por %p274, %p275
    %p277 = scmp.ne.s32.totalorder %s266, %s267
    %p278 = scmp.eq.s32.totalorder %s22, 0
    %p279 = por %p277, %p278
    %p280 = scmp.ne.s32.totalorder %s266, %s267
    %p281 = scmp.eq.s32.totalorder %s23, 1
    %p282 = por %p280, %p281
    %p284 = scmp.ne.s32.totalorder %s267, %s283
    %p285 = scmp.eq.s32.totalorder %s23, 0
    %p286 = por %p284, %p285
    %p287 = scmp.le.s32.totalorder 1, %s17
    %p288 = scmp.lt.s32.totalorder %s17, 3
    %p289 = pnand %p287, %p288
    %p290 = pneg %p289
    // Predicated region
    $region9: #{_lambda_.7} parent=5 // pred_check
      _
    $region10: #{_lambda_.7} parent=5 // pred_check_branch
      %292 = sbr.rel (%p289) target = $region12
    $region11: #{_lambda_.7} parent=5 // pred_region
      %s293 = ssub.s32 %s17, 1
      // Predicated region
      $region13: #{_lambda_.7} parent=11 // pred_check
        %p294 = pneg %p64
      $region14: #{_lambda_.7} parent=11 // pred_check_branch
        %296 = sbr.rel (%p294) target = $region16
      $region15: #{_lambda_.7} parent=11 // pred_region
        _
      $region16: #{_lambda_.7} parent=11 // pred_fallthru
        _
      // Predicated region
      $region17: #{_lambda_.7} parent=11 // pred_check
        %p297 = pneg %p85
      $region18: #{_lambda_.7} parent=11 // pred_check_branch
        %299 = sbr.rel (%p297) target = $region20
      $region19: #{_lambda_.7} parent=11 // pred_region
        _
      $region20: #{_lambda_.7} parent=11 // pred_fallthru
        _
      // Predicated region
      $region21: #{_lambda_.7} parent=11 // pred_check
        %p300 = pneg %p106
      $region22: #{_lambda_.7} parent=11 // pred_check_branch
        %302 = sbr.rel (%p300) target = $region24
      $region23: #{_lambda_.7} parent=11 // pred_region
        _
      $region24: #{_lambda_.7} parent=11 // pred_fallthru
        _
      // Predicated region
      $region25: #{_lambda_.7} parent=11 // pred_check
        %p303 = pneg %p127
      $region26: #{_lambda_.7} parent=11 // pred_check_branch
        %305 = sbr.rel (%p303) target = $region28
      $region27: #{_lambda_.7} parent=11 // pred_region
        _
      $region28: #{_lambda_.7} parent=11 // pred_fallthru
        _
      // Predicated region
      $region29: #{_lambda_.7} parent=11 // pred_check
        %p306 = pneg %p148
      $region30: #{_lambda_.7} parent=11 // pred_check_branch
        %308 = sbr.rel (%p306) target = $region32
      $region31: #{_lambda_.7} parent=11 // pred_region
        _
      $region32: #{_lambda_.7} parent=11 // pred_fallthru
        _
      // Predicated region
      $region33: #{_lambda_.7} parent=11 // pred_check
        %p309 = pneg %p169
      $region34: #{_lambda_.7} parent=11 // pred_check_branch
        %311 = sbr.rel (%p309) target = $region36
      $region35: #{_lambda_.7} parent=11 // pred_region
        _
      $region36: #{_lambda_.7} parent=11 // pred_fallthru
        _
      // Predicated region
      $region37: #{_lambda_.7} parent=11 // pred_check
        %p312 = pneg %p190
      $region38: #{_lambda_.7} parent=11 // pred_check_branch
        %314 = sbr.rel (%p312) target = $region40
      $region39: #{_lambda_.7} parent=11 // pred_region
        _
      $region40: #{_lambda_.7} parent=11 // pred_fallthru
        _
      // Predicated region
      $region41: #{_lambda_.7} parent=11 // pred_check
        %p315 = pneg %p211
      $region42: #{_lambda_.7} parent=11 // pred_check_branch
        %317 = sbr.rel (%p315) target = $region44
      $region43: #{_lambda_.7} parent=11 // pred_region
        _
      $region44: #{_lambda_.7} parent=11 // pred_fallthru
        _
      // Predicated region
      $region45: #{_lambda_.7} parent=11 // pred_check
        %p318 = pneg %p232
      $region46: #{_lambda_.7} parent=11 // pred_check_branch
        %320 = sbr.rel (%p318) target = $region48
      $region47: #{_lambda_.7} parent=11 // pred_region
        _
      $region48: #{_lambda_.7} parent=11 // pred_fallthru
        _
      // Predicated region
      $region49: #{_lambda_.7} parent=11 // pred_check
        %p321 = pneg %p253
      $region50: #{_lambda_.7} parent=11 // pred_check_branch
        %323 = sbr.rel (%p321) target = $region52
      $region51: #{_lambda_.7} parent=11 // pred_region
        _
      $region52: #{_lambda_.7} parent=11 // pred_fallthru
        _
    $region12: #{_lambda_.7} parent=5 // pred_fallthru
      _
    %p324 = scmp.lt.s32.totalorder %s17, 2
    // Predicated region
    $region53: #{_lambda_.7} parent=5 // pred_check
      %p325 = pneg %p324
    $region54: #{_lambda_.7} parent=5 // pred_check_branch
      %327 = sbr.rel (%p325) target = $region56
    $region55: #{_lambda_.7} parent=5 // pred_region
      // Predicated region
      $region57: #{_lambda_.7} parent=55 // pred_check
        %p328 = pneg %p37
      $region58: #{_lambda_.7} parent=55 // pred_check_branch
        %330 = sbr.rel (%p328) target = $region60
      $region59: #{_lambda_.7} parent=55 // pred_region
        %p331 = scmp.lt.s32.totalorder %s17, 1
        %s332 = scalar_select %p331, %s17, 1
        %s333 = smul.addr %s332, 8
        %s334 = smul.addr %s333, 8
        %s335 = scalar_lea.vmem %s0, %s334
      $region60: #{_lambda_.7} parent=55 // pred_fallthru
        _
    $region56: #{_lambda_.7} parent=5 // pred_fallthru
      _
    %p336 = scmp.le.s32.totalorder 1, %s17
    %p337 = scmp.lt.s32.totalorder %s17, 3
    %p338 = pnand %p336, %p337
    %p339 = pneg %p338
    // Predicated region
    $region61: #{_lambda_.7} parent=5 // pred_check
      _
    $region62: #{_lambda_.7} parent=5 // pred_check_branch
      %341 = sbr.rel (%p338) target = $region64
    $region63: #{_lambda_.7} parent=5 // pred_region
      %s342 = ssub.s32 %s17, 1
      %p343 = scmp.lt.s32.totalorder %s22, 1
      %s344 = scalar_select %p343, %s22, 1
      %s345 = smul.addr %s344, 8
      %s346 = smul.addr %s345, 8
      %s347 = scalar_lea.vmem %s0, %s346
      %p348 = pneg %p43
      %p349 = pneg %p40
      %p350 = pneg %p64
      %p351 = pneg %p61
      %p352 = pneg %p85
      %p353 = pneg %p82
      %p354 = pneg %p106
      %p355 = pneg %p103
      %p356 = pneg %p127
      %p357 = pneg %p124
      %p358 = pneg %p148
      %p359 = pneg %p145
      %p360 = pneg %p169
      %p361 = pneg %p166
      %p362 = pneg %p190
      %p363 = pneg %p187
      %p364 = pneg %p211
      %p365 = pneg %p208
      %p366 = pneg %p232
      %p367 = pneg %p229
      %p368 = pneg %p253
      %p369 = pneg %p250
      %p370 = pneg %p279
      %p371 = pneg %p276
      %p372 = scmp.lt.s32.totalorder %s22, 1
      %s373 = scalar_select %p372, %s22, 1
      %s374 = smul.addr %s373, 2
      %s375 = smul.addr %s374, 8
      %s376 = scalar_lea.vmem %s11, %s375
      %p377 = scmp.lt.s32.totalorder %s22, 1
      %s378 = scalar_select %p377, %s22, 1
      %s379 = smul.addr %s378, 8
      %s380 = smul.addr %s379, 8
      %s381 = scalar_lea.vmem %s0, %s380
      %p382 = scmp.lt.s32.totalorder %s22, 1
      %s383 = scalar_select %p382, %s22, 1
      %s384 = smul.addr %s383, 2
      %s385 = smul.addr %s384, 8
      %s386 = scalar_lea.vmem %s11, %s385
      %v388 = vld [vmem:[%s381] sm:$0xff]
      %v389 = vld [vmem:[%s381 + $0x8] sm:$0xff]
      %v390 = vld [vmem:[%s381 + $0x10] sm:$0xff]
      %v391 = vld [vmem:[%s381 + $0x18] sm:$0xff]
      %v392 = vld [vmem:[%s381 + $0x20] sm:$0xff]
      %v393 = vld [vmem:[%s381 + $0x28] sm:$0xff]
      %v394 = vld [vmem:[%s381 + $0x30] sm:$0xff]
      %v395 = vld [vmem:[%s381 + $0x38] sm:$0xff]
      %vm396 = vcmask 130048
      %397 = vst.msk [vmem:[#allocation2] sm:$0xff] %vm396, 0.0
      %398 = vst.msk [vmem:[#allocation2 + $0x8] sm:$0xff] %vm396, 0.0
      %399 = vst.msk [vmem:[#allocation2 + $0x10] sm:$0xff] %vm396, 0.0
      %400 = vst.msk [vmem:[#allocation2 + $0x18] sm:$0xff] %vm396, 0.0
      %401 = vst.msk [vmem:[#allocation2 + $0x20] sm:$0xff] %vm396, 0.0
      %402 = vst.msk [vmem:[#allocation2 + $0x28] sm:$0xff] %vm396, 0.0
      %403 = vst.msk [vmem:[#allocation2 + $0x30] sm:$0xff] %vm396, 0.0
      %404 = vst.msk [vmem:[#allocation2 + $0x38] sm:$0xff] %vm396, 0.0
      %405 = vst.msk [vmem:[#allocation2 + $0x40] sm:$0xff] %vm396, 0.0
      %406 = vst.msk [vmem:[#allocation2 + $0x48] sm:$0xff] %vm396, 0.0
      %407 = vst.msk [vmem:[#allocation2 + $0x50] sm:$0xff] %vm396, 0.0
      %408 = vst.msk [vmem:[#allocation2 + $0x58] sm:$0xff] %vm396, 0.0
      %vm409 = vcmask 125952
      %410 = vst.msk [vmem:[#allocation2 + $0x60] sm:$0xf] %vm409, 0.0
      %411 = vst.msk [vmem:[#allocation2 + $0xb] sm:$0xff] %vm396, %v388
      %412 = vst.msk [vmem:[#allocation2 + $0x15] sm:$0xff] %vm396, %v389
      %413 = vst.msk [vmem:[#allocation2 + $0x1f] sm:$0xff] %vm396, %v390
      %414 = vst.msk [vmem:[#allocation2 + $0x29] sm:$0xff] %vm396, %v391
      %415 = vst.msk [vmem:[#allocation2 + $0x33] sm:$0xff] %vm396, %v392
      %416 = vst.msk [vmem:[#allocation2 + $0x3d] sm:$0xff] %vm396, %v393
      %417 = vst.msk [vmem:[#allocation2 + $0x47] sm:$0xff] %vm396, %v394
      %418 = vst.msk [vmem:[#allocation2 + $0x51] sm:$0xff] %vm396, %v395
      %v419 = vld [vmem:[%s1] sm:$0xff]
      %v420 = vld [vmem:[%s1 + $0x8] sm:$0x1]
      %v421 = vld [vmem:[%s2] sm:$0x1]
      %v422 = vld [vmem:[%s3] sm:$0x1]
      %v423 = vld [vmem:[#allocation2] ss:$2 sm:$0xf]
      %v424 = vlaneseq
      %v425 = vshrl.u32 %v424, 7
      %v426 = vsub.s32 0, %v425
      %v427 = vrot.slane %v419, %v426
      %v428 = vmul.f32 %v423, %v427
      %v429 = vadd.f32 %v428, 0.0
      %s430 = scalar_lea.vmem [#allocation2], 1
      %v431 = vld [vmem:[%s430] ss:$2 sm:$0xf]
      %v432 = vlaneseq
      %v433 = vshrl.u32 %v432, 7
      %v434 = vsub.s32 1, %v433
      %v435 = vrot.slane %v419, %v434
      %v436 = vmul.f32 %v431, %v435
      %v437 = vadd.f32 %v429, %v436
      %s438 = scalar_lea.vmem [#allocation2], 2
      %v439 = vld [vmem:[%s438] ss:$2 sm:$0xf]
      %v440 = vlaneseq
      %v441 = vshrl.u32 %v440, 7
      %v442 = vsub.s32 2, %v441
      %v443 = vrot.slane %v419, %v442
      %v444 = vmul.f32 %v439, %v443
      %v445 = vadd.f32 %v437, %v444
      %s446 = scalar_lea.vmem [#allocation2], 10
      %v447 = vld [vmem:[%s446] ss:$2 sm:$0xf]
      %v448 = vlaneseq
      %v449 = vshrl.u32 %v448, 7
      %v450 = vsub.s32 3, %v449
      %v451 = vrot.slane %v419, %v450
      %v452 = vmul.f32 %v447, %v451
      %v453 = vadd.f32 %v445, %v452
      %s454 = scalar_lea.vmem [#allocation2], 11
      %v455 = vld [vmem:[%s454] ss:$2 sm:$0xf]
      %v456 = vlaneseq
      %v457 = vshrl.u32 %v456, 7
      %v458 = vsub.s32 4, %v457
      %v459 = vrot.slane %v419, %v458
      %v460 = vmul.f32 %v455, %v459
      %v461 = vadd.f32 %v453, %v460
      %s462 = scalar_lea.vmem [#allocation2], 12
      %v463 = vld [vmem:[%s462] ss:$2 sm:$0xf]
      %v464 = vlaneseq
      %v465 = vshrl.u32 %v464, 7
      %v466 = vsub.s32 5, %v465
      %v467 = vrot.slane %v419, %v466
      %v468 = vmul.f32 %v463, %v467
      %v469 = vadd.f32 %v461, %v468
      %s470 = scalar_lea.vmem [#allocation2], 20
      %v471 = vld [vmem:[%s470] ss:$2 sm:$0xf]
      %v472 = vlaneseq
      %v473 = vshrl.u32 %v472, 7
      %v474 = vsub.s32 6, %v473
      %v475 = vrot.slane %v419, %v474
      %v476 = vmul.f32 %v471, %v475
      %v477 = vadd.f32 %v469, %v476
      %s478 = scalar_lea.vmem [#allocation2], 21
      %v479 = vld [vmem:[%s478] ss:$2 sm:$0xf]
      %v480 = vlaneseq
      %v481 = vshrl.u32 %v480, 7
      %v482 = vsub.s32 7, %v481
      %v483 = vrot.slane %v419, %v482
      %v484 = vmul.f32 %v479, %v483
      %v485 = vadd.f32 %v477, %v484
      %s486 = scalar_lea.vmem [#allocation2], 22
      %v487 = vld [vmem:[%s486] ss:$2 sm:$0xf]
      %v488 = vlaneseq
      %v489 = vshrl.u32 %v488, 7
      %v490 = vsub.s32 0, %v489
      %v491 = vrot.slane %v420, %v490
      %v492 = vmul.f32 %v487, %v491
      %v493 = vadd.f32 %v485, %v492
      %v495 = vlaneseq
      %v496 = vshrl.u32 %v495, 7
      %v497 = vsub.s32 0, %v496
      %v498 = vrot.slane %v421, %v497
      %v500 = vmul.f32 %v493, %v498
      %v502 = vlaneseq
      %v503 = vshrl.u32 %v502, 7
      %v504 = vsub.s32 0, %v503
      %v505 = vrot.slane %v422, %v504
      %v507 = vadd.f32 %v500, %v505
      %v508 = vmax.f32 %v507, 0.0
      %509 = vst.msk [vmem:[#allocation3] sm:$0xf] %vm409, %v508
      %v510 = vld [vmem:[%s470] ss:$2 sm:$0xf]
      %v511 = vmul.f32 %v510, %v427
      %v512 = vadd.f32 %v511, 0.0
      %v513 = vld [vmem:[%s478] ss:$2 sm:$0xf]
      %v514 = vmul.f32 %v513, %v435
      %v515 = vadd.f32 %v512, %v514
      %v516 = vld [vmem:[%s486] ss:$2 sm:$0xf]
      %v517 = vmul.f32 %v516, %v443
      %v518 = vadd.f32 %v515, %v517
      %s519 = scalar_lea.vmem [#allocation2], 30
      %v520 = vld [vmem:[%s519] ss:$2 sm:$0xf]
      %v521 = vmul.f32 %v520, %v451
      %v522 = vadd.f32 %v518, %v521
      %s523 = scalar_lea.vmem [#allocation2], 31
      %v524 = vld [vmem:[%s523] ss:$2 sm:$0xf]
      %v525 = vmul.f32 %v524, %v459
      %v526 = vadd.f32 %v522, %v525
      %s527 = scalar_lea.vmem [#allocation2], 32
      %v528 = vld [vmem:[%s527] ss:$2 sm:$0xf]
      %v529 = vmul.f32 %v528, %v467
      %v530 = vadd.f32 %v526, %v529
      %s531 = scalar_lea.vmem [#allocation2], 40
      %v532 = vld [vmem:[%s531] ss:$2 sm:$0xf]
      %v533 = vmul.f32 %v532, %v475
      %v534 = vadd.f32 %v530, %v533
      %s535 = scalar_lea.vmem [#allocation2], 41
      %v536 = vld [vmem:[%s535] ss:$2 sm:$0xf]
      %v537 = vmul.f32 %v536, %v483
      %v538 = vadd.f32 %v534, %v537
      %s539 = scalar_lea.vmem [#allocation2], 42
      %v540 = vld [vmem:[%s539] ss:$2 sm:$0xf]
      %v541 = vmul.f32 %v540, %v491
      %v542 = vadd.f32 %v538, %v541
      %v543 = vmul.f32 %v542, %v498
      %v544 = vadd.f32 %v543, %v505
      %v545 = vmax.f32 %v544, 0.0
      %546 = vst.msk [vmem:[#allocation3 + $0x4] sm:$0xf] %vm409, %v545
      %v547 = vld [vmem:[%s531] ss:$2 sm:$0xf]
      %v548 = vmul.f32 %v547, %v427
      %v549 = vadd.f32 %v548, 0.0
      %v550 = vld [vmem:[%s535] ss:$2 sm:$0xf]
      %v551 = vmul.f32 %v550, %v435
      %v552 = vadd.f32 %v549, %v551
      %v553 = vld [vmem:[%s539] ss:$2 sm:$0xf]
      %v554 = vmul.f32 %v553, %v443
      %v555 = vadd.f32 %v552, %v554
      %s556 = scalar_lea.vmem [#allocation2], 50
      %v557 = vld [vmem:[%s556] ss:$2 sm:$0xf]
      %v558 = vmul.f32 %v557, %v451
      %v559 = vadd.f32 %v555, %v558
      %s560 = scalar_lea.vmem [#allocation2], 51
      %v561 = vld [vmem:[%s560] ss:$2 sm:$0xf]
      %v562 = vmul.f32 %v561, %v459
      %v563 = vadd.f32 %v559, %v562
      %s564 = scalar_lea.vmem [#allocation2], 52
      %v565 = vld [vmem:[%s564] ss:$2 sm:$0xf]
      %v566 = vmul.f32 %v565, %v467
      %v567 = vadd.f32 %v563, %v566
      %s568 = scalar_lea.vmem [#allocation2], 60
      %v569 = vld [vmem:[%s568] ss:$2 sm:$0xf]
      %v570 = vmul.f32 %v569, %v475
      %v571 = vadd.f32 %v567, %v570
      %s572 = scalar_lea.vmem [#allocation2], 61
      %v573 = vld [vmem:[%s572] ss:$2 sm:$0xf]
      %v574 = vmul.f32 %v573, %v483
      %v575 = vadd.f32 %v571, %v574
      %s576 = scalar_lea.vmem [#allocation2], 62
      %v577 = vld [vmem:[%s576] ss:$2 sm:$0xf]
      %v578 = vmul.f32 %v577, %v491
      %v579 = vadd.f32 %v575, %v578
      %v580 = vmul.f32 %v579, %v498
      %v581 = vadd.f32 %v580, %v505
      %v582 = vmax.f32 %v581, 0.0
      %583 = vst.msk [vmem:[#allocation3 + $0x8] sm:$0xf] %vm409, %v582
      %v584 = vld [vmem:[%s568] ss:$2 sm:$0xf]
      %v585 = vmul.f32 %v584, %v427
      %v586 = vadd.f32 %v585, 0.0
      %v587 = vld [vmem:[%s572] ss:$2 sm:$0xf]
      %v588 = vmul.f32 %v587, %v435
      %v589 = vadd.f32 %v586, %v588
      %v590 = vld [vmem:[%s576] ss:$2 sm:$0xf]
      %v591 = vmul.f32 %v590, %v443
      %v592 = vadd.f32 %v589, %v591
      %s593 = scalar_lea.vmem [#allocation2], 70
      %v594 = vld [vmem:[%s593] ss:$2 sm:$0xf]
      %v595 = vmul.f32 %v594, %v451
      %v596 = vadd.f32 %v592, %v595
      %s597 = scalar_lea.vmem [#allocation2], 71
      %v598 = vld [vmem:[%s597] ss:$2 sm:$0xf]
      %v599 = vmul.f32 %v598, %v459
      %v600 = vadd.f32 %v596, %v599
      %s601 = scalar_lea.vmem [#allocation2], 72
      %v602 = vld [vmem:[%s601] ss:$2 sm:$0xf]
      %v603 = vmul.f32 %v602, %v467
      %v604 = vadd.f32 %v600, %v603
      %s605 = scalar_lea.vmem [#allocation2], 80
      %v606 = vld [vmem:[%s605] ss:$2 sm:$0xf]
      %v607 = vmul.f32 %v606, %v475
      %v608 = vadd.f32 %v604, %v607
      %s609 = scalar_lea.vmem [#allocation2], 81
      %v610 = vld [vmem:[%s609] ss:$2 sm:$0xf]
      %v611 = vmul.f32 %v610, %v483
      %v612 = vadd.f32 %v608, %v611
      %s613 = scalar_lea.vmem [#allocation2], 82
      %v614 = vld [vmem:[%s613] ss:$2 sm:$0xf]
      %v615 = vmul.f32 %v614, %v491
      %v616 = vadd.f32 %v612, %v615
      %v617 = vmul.f32 %v616, %v498
      %v618 = vadd.f32 %v617, %v505
      %v619 = vmax.f32 %v618, 0.0
      %620 = vst.msk [vmem:[#allocation3 + $0xc] sm:$0xf] %vm409, %v619
      %v621 = vld [vmem:[#allocation3] sm:$0xff]
      %v622 = vld [vmem:[#allocation3 + $0x8] sm:$0xff]
      %v623 = vsel %vm396, %v621, 0.0
      %v624 = vsel %vm396, %v622, 0.0
      %v625 = vadd.f32 %v623, %v624
      %v626 = vrot.slane %v625, 4
      %v627 = vadd.f32 %v625, %v626
      %v628 = vrot.slane %v627, 2
      %v629 = vadd.f32 %v627, %v628
      %v630 = vrot.slane %v629, 1
      %v631 = vadd.f32 %v629, %v630
      %v632 = vrcp.pop 16.0
      %v633 = vmul.f32 %v631, %v632
      %v634 = vpack.c.bf16 %v633, %v633
      %v635 = vld [vmem:[%s4] sm:$0xf]
      %v636 = vld [vmem:[%s4 + $0x4] sm:$0xf]
      %v637 = vld [vmem:[%s5] sm:$0x1]
      %v640 = vunpack.c.l.b16 %v635
      %v641 = vunpack.c.l.b16 %v636
      %v642 = vpack.c.b16 %v641, %v640
      %v645 = vsel %vm396, %v634, 0
      %647 = vmatprep.subr.bf16.mxu0 0
      %648 = vmatpush1.bf16.msra.mxu0 0
      %649 = vmatprep.subr.bf16.mxu0 0
      %650 = vmatpush1.bf16.msra.mxu0 0
      %651 = vmatprep.subr.bf16.mxu0 0
      %652 = vmatpush1.bf16.msra.mxu0 0
      %653 = vmatprep.subr.bf16.mxu0 0
      %654 = vmatpush1.bf16.msra.mxu0 0
      %655 = vmatprep.subr.bf16.mxu0 0
      %656 = vmatpush1.bf16.msra.mxu0 0
      %657 = vmatprep.subr.bf16.mxu0 0
      %658 = vmatpush1.bf16.msra.mxu0 0
      %659 = vmatprep.subr.bf16.mxu0 0
      %660 = vmatpush1.bf16.msra.mxu0 0
      %661 = vmatprep.subr.bf16.mxu0 0
      %662 = vmatpush1.bf16.msra.mxu0 %v642
      %663 = vmatprep.subr.bf16.mxu0 0
      %664 = vmatpush2.bf16.msra.mxu0 0
      %665 = vmatprep.subr.bf16.mxu0 0
      %666 = vmatpush2.bf16.msra.mxu0 0
      %667 = vmatprep.subr.bf16.mxu0 0
      %668 = vmatpush2.bf16.msra.mxu0 0
      %669 = vmatprep.subr.bf16.mxu0 0
      %670 = vmatpush2.bf16.msra.mxu0 0
      %671 = vmatprep.subr.bf16.mxu0 0
      %672 = vmatpush2.bf16.msra.mxu0 0
      %673 = vmatprep.subr.bf16.mxu0 0
      %674 = vmatpush2.bf16.msra.mxu0 0
      %675 = vmatprep.subr.bf16.mxu0 0
      %676 = vmatpush2.bf16.msra.mxu0 0
      %677 = vmatprep.subr.bf16.mxu0 0
      %678 = vmatpush2.bf16.msra.mxu0 0
      %679 = vmatprep.mubr.bf16.mxu0 0
      %680 = vmatmul.mubr.bf16.gmra.mxu0 %v645
      %v681 = vpop.f32.mrf.mxu0
      %v682 = vadd.f32 %v637, %v681
      %v683 = vpop.f32.mrf.mxu0
      %v684 = vpop.f32.mrf.mxu0
      %v685 = vpop.f32.mrf.mxu0
      %686 = vdwg.mxu0
      %v687 = vmax.f32 %v682, 0.0
      %v688 = vpack.c.bf16 %v687, %v687
      %v689 = vld [vmem:[%s6] sm:$0xf]
      %v690 = vld [vmem:[%s7] sm:$0x1]
      %vm691 = vcmask 64512
      %v693 = vsel %vm691, %v688, 0
      %vm695 = vcmask 1043456
      %v697 = vsel %vm695, %v689, 0
      %699 = vmatprep.subr.bf16.mxu0 0
      %700 = vmatpush1.bf16.msra.mxu0 0
      %701 = vmatprep.subr.bf16.mxu0 0
      %702 = vmatpush1.bf16.msra.mxu0 0
      %703 = vmatprep.subr.bf16.mxu0 0
      %704 = vmatpush1.bf16.msra.mxu0 0
      %705 = vmatprep.subr.bf16.mxu0 0
      %706 = vmatpush1.bf16.msra.mxu0 0
      %707 = vmatprep.subr.bf16.mxu0 0
      %708 = vmatpush1.bf16.msra.mxu0 0
      %709 = vmatprep.subr.bf16.mxu0 0
      %710 = vmatpush1.bf16.msra.mxu0 0
      %711 = vmatprep.subr.bf16.mxu0 0
      %712 = vmatpush1.bf16.msra.mxu0 0
      %713 = vmatprep.subr.bf16.mxu0 0
      %714 = vmatpush1.bf16.msra.mxu0 %v697
      %715 = vmatprep.subr.bf16.mxu0 0
      %716 = vmatpush2.bf16.msra.mxu0 0
      %717 = vmatprep.subr.bf16.mxu0 0
      %718 = vmatpush2.bf16.msra.mxu0 0
      %719 = vmatprep.subr.bf16.mxu0 0
      %720 = vmatpush2.bf16.msra.mxu0 0
      %721 = vmatprep.subr.bf16.mxu0 0
      %722 = vmatpush2.bf16.msra.mxu0 0
      %723 = vmatprep.subr.bf16.mxu0 0
      %724 = vmatpush2.bf16.msra.mxu0 0
      %725 = vmatprep.subr.bf16.mxu0 0
      %726 = vmatpush2.bf16.msra.mxu0 0
      %727 = vmatprep.subr.bf16.mxu0 0
      %728 = vmatpush2.bf16.msra.mxu0 0
      %729 = vmatprep.subr.bf16.mxu0 0
      %730 = vmatpush2.bf16.msra.mxu0 0
      %731 = vmatprep.mubr.bf16.mxu0 0
      %732 = vmatmul.mubr.bf16.gmra.mxu0 %v693
      %v733 = vpop.f32.mrf.mxu0
      %v734 = vadd.f32 %v690, %v733
      %v735 = vpop.f32.mrf.mxu0
      %v736 = vpop.f32.mrf.mxu0
      %v737 = vpop.f32.mrf.mxu0
      %738 = vdwg.mxu0
      %v739 = vrcp.pop 6.0
      %v740 = vmul.f32 %v734, %v739
      %v741 = vadd.f32 %v740, 0.5
      %v742 = vmax.f32 %v741, 0.0
      %v743 = vmin.f32 %v742, 1.0
      %v744 = vlaneseq
      %v745 = vshrl.u32 %v744, 7
      %v746 = vsub.s32 0, %v745
      %v747 = vrot.slane %v743, %v746
      %v748 = vmul.f32 %v621, %v747
      %v749 = vmul.f32 %v622, %v747
      %v750 = vpack.c.bf16 %v749, %v748
      %v751 = vld [vmem:[%s8] sm:$0xf]
      %v752 = vld [vmem:[%s8 + $0x4] sm:$0xf]
      %v755 = vunpack.c.l.b16 %v751
      %v756 = vunpack.c.l.b16 %v752
      %v757 = vpack.c.b16 %v756, %v755
      %v760 = vsel %vm396, %v750, 0
      %762 = vmatprep.subr.bf16.mxu0 0
      %763 = vmatpush1.bf16.msra.mxu0 0
      %764 = vmatprep.subr.bf16.mxu0 0
      %765 = vmatpush1.bf16.msra.mxu0 0
      %766 = vmatprep.subr.bf16.mxu0 0
      %767 = vmatpush1.bf16.msra.mxu0 0
      %768 = vmatprep.subr.bf16.mxu0 0
      %769 = vmatpush1.bf16.msra.mxu0 0
      %770 = vmatprep.subr.bf16.mxu0 0
      %771 = vmatpush1.bf16.msra.mxu0 0
      %772 = vmatprep.subr.bf16.mxu0 0
      %773 = vmatpush1.bf16.msra.mxu0 0
      %774 = vmatprep.subr.bf16.mxu0 0
      %775 = vmatpush1.bf16.msra.mxu0 0
      %776 = vmatprep.subr.bf16.mxu0 0
      %777 = vmatpush1.bf16.msra.mxu0 %v757
      %778 = vmatprep.subr.bf16.mxu0 0
      %779 = vmatpush2.bf16.msra.mxu0 0
      %780 = vmatprep.subr.bf16.mxu0 0
      %781 = vmatpush2.bf16.msra.mxu0 0
      %782 = vmatprep.subr.bf16.mxu0 0
      %783 = vmatpush2.bf16.msra.mxu0 0
      %784 = vmatprep.subr.bf16.mxu0 0
      %785 = vmatpush2.bf16.msra.mxu0 0
      %786 = vmatprep.subr.bf16.mxu0 0
      %787 = vmatpush2.bf16.msra.mxu0 0
      %788 = vmatprep.subr.bf16.mxu0 0
      %789 = vmatpush2.bf16.msra.mxu0 0
      %790 = vmatprep.subr.bf16.mxu0 0
      %791 = vmatpush2.bf16.msra.mxu0 0
      %792 = vmatprep.subr.bf16.mxu0 0
      %793 = vmatpush2.bf16.msra.mxu0 0
      %794 = vmatprep.mubr.bf16.mxu0 0
      %795 = vmatmul.mubr.bf16.gmra.mxu0 %v760
      %v796 = vpop.f32.mrf.mxu0
      %v797 = vadd.f32 0.0, %v796
      %v798 = vpop.f32.mrf.mxu0
      %v799 = vpop.f32.mrf.mxu0
      %v800 = vadd.f32 0.0, %v799
      %v801 = vpop.f32.mrf.mxu0
      %802 = vdwg.mxu0
      %v803 = vld [vmem:[%s9] sm:$0x1]
      %v805 = vlaneseq
      %v806 = vshrl.u32 %v805, 7
      %v807 = vsub.s32 0, %v806
      %v808 = vrot.slane %v803, %v807
      %v810 = vmul.f32 %v797, %v808
      %v811 = vmul.f32 %v800, %v808
      %v812 = vld [vmem:[%s10] sm:$0x1]
      %v814 = vlaneseq
      %v815 = vshrl.u32 %v814, 7
      %v816 = vsub.s32 0, %v815
      %v817 = vrot.slane %v812, %v816
      %v819 = vadd.f32 %v810, %v817
      %v820 = vadd.f32 %v811, %v817
      %821 = vst.msk [vmem:[%s386] sm:$0xff] %vm396, %v819
      %822 = vst.msk [vmem:[%s386 + $0x8] sm:$0xff] %vm396, %v820
      %p823 = scmp.lt.s32.totalorder %s22, 1
      %s824 = scalar_select %p823, %s22, 1
      %s825 = smul.addr %s824, 2
      %s826 = smul.addr %s825, 8
      %s827 = scalar_lea.vmem %s11, %s826
      // Predicated region
      $region65: #{_lambda_.7} parent=63 // pred_check
        %p828 = pneg %p276
      $region66: #{_lambda_.7} parent=63 // pred_check_branch
        %830 = sbr.rel (%p828) target = $region68
      $region67: #{_lambda_.7} parent=63 // pred_region
        _
      $region68: #{_lambda_.7} parent=63 // pred_fallthru
        _
    $region64: #{_lambda_.7} parent=5 // pred_fallthru
      _
    %p831 = scmp.le.s32.totalorder 2, %s17
    // Predicated region
    $region69: #{_lambda_.7} parent=5 // pred_check
      %p832 = pneg %p831
    $region70: #{_lambda_.7} parent=5 // pred_check_branch
      %834 = sbr.rel (%p832) target = $region72
    $region71: #{_lambda_.7} parent=5 // pred_region
      %s835 = ssub.s32 %s17, 2
      // Predicated region
      $region73: #{_lambda_.7} parent=71 // pred_check
        %p836 = pneg %p282
      $region74: #{_lambda_.7} parent=71 // pred_check_branch
        %838 = sbr.rel (%p836) target = $region76
      $region75: #{_lambda_.7} parent=71 // pred_region
        %p839 = scmp.lt.s32.totalorder %s23, 1
        %s840 = scalar_select %p839, %s23, 1
        %s841 = smul.addr %s840, 2
        %s842 = smul.addr %s841, 8
        %s843 = scalar_lea.vmem %s11, %s842
      $region76: #{_lambda_.7} parent=71 // pred_fallthru
        _
    $region72: #{_lambda_.7} parent=5 // pred_fallthru
      _
  $region6: #{_lambda_.7} parent=0 // loop_footer
    %s21 = sadd.s32 1, %s17
  $region7: #{_lambda_.7} parent=0 // loop_footer_branch
    %16 = sbr.rel target = $region3
  $region8: #{_lambda_.7} parent=0 // loop_exit
    _

// kernel: _lambda_.8
$region0: #{_lambda_.8}
  #allocation0 [shape = 'u32[]', space=smem, size = 0x4, offset = 0x4, fixed_abs, tag = 'smem constant byte address 0x4 - core index']
  #allocation1 [shape = 'u32[144,128]{1,0:T(1,128)}', space=vmem, size = 0x12000, scoped, tag = 'internal scratch']
  #allocation2 [shape = 'f32[36,64]{1,0:T(8,128)}', space=vmem, size = 0x5000, scoped, tag = 'scratch operand']
  #allocation3 [shape = 'f32[4,64]{1,0:T(4,128)}', space=vmem, size = 0x800, scoped, tag = 'scratch operand']
  %s0 = inlined_call_operand.vmem [shape: f32[2,16,16], index: 0, kind: input, shape index: {}]
  %s1 = inlined_call_operand.vmem [shape: bf16[16,64], index: 1, kind: input, shape index: {}]
  %s2 = inlined_call_operand.vmem [shape: f32[1,64], index: 2, kind: input, shape index: {}]
  %s3 = inlined_call_operand.vmem [shape: f32[1,64], index: 3, kind: input, shape index: {}]
  %s4 = inlined_call_operand.vmem [shape: f32[9,64], index: 4, kind: input, shape index: {}]
  %s5 = inlined_call_operand.vmem [shape: f32[1,64], index: 5, kind: input, shape index: {}]
  %s6 = inlined_call_operand.vmem [shape: f32[1,64], index: 6, kind: input, shape index: {}]
  %s7 = inlined_call_operand.vmem [shape: bf16[64,24], index: 7, kind: input, shape index: {}]
  %s8 = inlined_call_operand.vmem [shape: f32[1,24], index: 8, kind: input, shape index: {}]
  %s9 = inlined_call_operand.vmem [shape: f32[1,24], index: 9, kind: input, shape index: {}]
  %s10 = inlined_call_operand.vmem [shape: f32[2,4,24], index: 10, kind: output, shape index: {}]
  %s11 = sld [smem:[#allocation0]]
  $region73: #{_lambda_.8} parent=0
    _
  %s13 = ssub.s32 1, %s11
  %s14 = scalar_select 0, %s13, %s11
  loop: start=0, step=1, limit=4
  $region2: #{_lambda_.8} parent=0 // loop_pre_header
    _
  $region3: #{_lambda_.8} parent=0 // loop_header
    %s16 = sphi 0, %s20
    %p17 = scmp.ge.s32.totalorder %s16, 4
    %s26 = sphi 0, %s28
    %s29 = sphi 0, %s26
    %s30 = sphi 0, %s29
    %s46 = sphi 0, %s30
    %s50 = sphi 0, %s50
    %s52 = sphi 0, %s50
    %s53 = sphi 0, %s52
    %s67 = sphi 0, %s53
    %s71 = sphi 0, %s71
    %s73 = sphi 0, %s71
    %s74 = sphi 0, %s73
    %s88 = sphi 0, %s74
    %s92 = sphi 0, %s92
    %s94 = sphi 0, %s92
    %s95 = sphi 0, %s94
    %s109 = sphi 0, %s95
    %s113 = sphi 0, %s113
    %s115 = sphi 0, %s113
    %s116 = sphi 0, %s115
    %s130 = sphi 0, %s116
    %s134 = sphi 0, %s134
    %s136 = sphi 0, %s134
    %s137 = sphi 0, %s136
    %s151 = sphi 0, %s137
    %s155 = sphi 0, %s155
    %s157 = sphi 0, %s155
    %s158 = sphi 0, %s157
    %s172 = sphi 0, %s158
    %s176 = sphi 0, %s176
    %s178 = sphi 0, %s176
    %s179 = sphi 0, %s178
    %s193 = sphi 0, %s179
    %s197 = sphi 0, %s197
    %s199 = sphi 0, %s197
    %s200 = sphi 0, %s199
    %s214 = sphi 0, %s200
    %s218 = sphi 0, %s218
    %s220 = sphi 0, %s218
    %s221 = sphi 0, %s220
    %s235 = sphi 0, %s221
    %s241 = sphi 0, %s243
    %s244 = sphi 0, %s241
    %s245 = sphi 0, %s244
    %s261 = sphi 0, %s245
  $region4: #{_lambda_.8} parent=0 // loop_header_branch
    %19 = sbr.rel (%p17) target = $region8
  $region5: #{_lambda_.8} parent=0 // loop_body
    %s21 = ssub.s32 %s16, 1
    %s22 = ssub.s32 %s16, 2
    %s23 = sadd.s32 %s16, 1
    %s24 = ssub.s32 %s16, %s23
    %p25 = scmp.eq.s32.totalorder %s24, 0
    %s27 = sadd.s32 %s26, 1
    %s28 = scalar_select %p25, %s26, %s27
    %p31 = pneg %p25
    %p32 = scmp.eq.s32.totalorder %s16, 1
    %p33 = por %p31, %p32
    %p34 = scmp.ne.s32.totalorder %s26, %s29
    %p35 = scmp.eq.s32.totalorder %s16, 0
    %p36 = por %p34, %p35
    %p37 = scmp.ne.s32.totalorder %s26, %s29
    %p38 = scmp.eq.s32.totalorder %s21, 1
    %p39 = por %p37, %p38
    %p40 = scmp.ne.s32.totalorder %s29, %s30
    %p41 = scmp.eq.s32.totalorder %s21, 0
    %p42 = por %p40, %p41
    %p43 = scmp.ne.s32.totalorder %s29, %s30
    %p44 = scmp.eq.s32.totalorder %s22, 1
    %p45 = por %p43, %p44
    %p47 = scmp.ne.s32.totalorder %s30, %s46
    %p48 = scmp.eq.s32.totalorder %s22, 0
    %p49 = por %p47, %p48
    %s51 = sadd.s32 %s50, 1
    %p54 = scmp.eq.s32.totalorder %s16, 1
    %p55 = scmp.ne.s32.totalorder %s50, %s52
    %p56 = scmp.eq.s32.totalorder %s16, 0
    %p57 = por %p55, %p56
    %p58 = scmp.ne.s32.totalorder %s50, %s52
    %p59 = scmp.eq.s32.totalorder %s21, 1
    %p60 = por %p58, %p59
    %p61 = scmp.ne.s32.totalorder %s52, %s53
    %p62 = scmp.eq.s32.totalorder %s21, 0
    %p63 = por %p61, %p62
    %p64 = scmp.ne.s32.totalorder %s52, %s53
    %p65 = scmp.eq.s32.totalorder %s22, 1
    %p66 = por %p64, %p65
    %p68 = scmp.ne.s32.totalorder %s53, %s67
    %p69 = scmp.eq.s32.totalorder %s22, 0
    %p70 = por %p68, %p69
    %s72 = sadd.s32 %s71, 1
    %p75 = scmp.eq.s32.totalorder %s16, 1
    %p76 = scmp.ne.s32.totalorder %s71, %s73
    %p77 = scmp.eq.s32.totalorder %s16, 0
    %p78 = por %p76, %p77
    %p79 = scmp.ne.s32.totalorder %s71, %s73
    %p80 = scmp.eq.s32.totalorder %s21, 1
    %p81 = por %p79, %p80
    %p82 = scmp.ne.s32.totalorder %s73, %s74
    %p83 = scmp.eq.s32.totalorder %s21, 0
    %p84 = por %p82, %p83
    %p85 = scmp.ne.s32.totalorder %s73, %s74
    %p86 = scmp.eq.s32.totalorder %s22, 1
    %p87 = por %p85, %p86
    %p89 = scmp.ne.s32.totalorder %s74, %s88
    %p90 = scmp.eq.s32.totalorder %s22, 0
    %p91 = por %p89, %p90
    %s93 = sadd.s32 %s92, 1
    %p96 = scmp.eq.s32.totalorder %s16, 1
    %p97 = scmp.ne.s32.totalorder %s92, %s94
    %p98 = scmp.eq.s32.totalorder %s16, 0
    %p99 = por %p97, %p98
    %p100 = scmp.ne.s32.totalorder %s92, %s94
    %p101 = scmp.eq.s32.totalorder %s21, 1
    %p102 = por %p100, %p101
    %p103 = scmp.ne.s32.totalorder %s94, %s95
    %p104 = scmp.eq.s32.totalorder %s21, 0
    %p105 = por %p103, %p104
    %p106 = scmp.ne.s32.totalorder %s94, %s95
    %p107 = scmp.eq.s32.totalorder %s22, 1
    %p108 = por %p106, %p107
    %p110 = scmp.ne.s32.totalorder %s95, %s109
    %p111 = scmp.eq.s32.totalorder %s22, 0
    %p112 = por %p110, %p111
    %s114 = sadd.s32 %s113, 1
    %p117 = scmp.eq.s32.totalorder %s16, 1
    %p118 = scmp.ne.s32.totalorder %s113, %s115
    %p119 = scmp.eq.s32.totalorder %s16, 0
    %p120 = por %p118, %p119
    %p121 = scmp.ne.s32.totalorder %s113, %s115
    %p122 = scmp.eq.s32.totalorder %s21, 1
    %p123 = por %p121, %p122
    %p124 = scmp.ne.s32.totalorder %s115, %s116
    %p125 = scmp.eq.s32.totalorder %s21, 0
    %p126 = por %p124, %p125
    %p127 = scmp.ne.s32.totalorder %s115, %s116
    %p128 = scmp.eq.s32.totalorder %s22, 1
    %p129 = por %p127, %p128
    %p131 = scmp.ne.s32.totalorder %s116, %s130
    %p132 = scmp.eq.s32.totalorder %s22, 0
    %p133 = por %p131, %p132
    %s135 = sadd.s32 %s134, 1
    %p138 = scmp.eq.s32.totalorder %s16, 1
    %p139 = scmp.ne.s32.totalorder %s134, %s136
    %p140 = scmp.eq.s32.totalorder %s16, 0
    %p141 = por %p139, %p140
    %p142 = scmp.ne.s32.totalorder %s134, %s136
    %p143 = scmp.eq.s32.totalorder %s21, 1
    %p144 = por %p142, %p143
    %p145 = scmp.ne.s32.totalorder %s136, %s137
    %p146 = scmp.eq.s32.totalorder %s21, 0
    %p147 = por %p145, %p146
    %p148 = scmp.ne.s32.totalorder %s136, %s137
    %p149 = scmp.eq.s32.totalorder %s22, 1
    %p150 = por %p148, %p149
    %p152 = scmp.ne.s32.totalorder %s137, %s151
    %p153 = scmp.eq.s32.totalorder %s22, 0
    %p154 = por %p152, %p153
    %s156 = sadd.s32 %s155, 1
    %p159 = scmp.eq.s32.totalorder %s16, 1
    %p160 = scmp.ne.s32.totalorder %s155, %s157
    %p161 = scmp.eq.s32.totalorder %s16, 0
    %p162 = por %p160, %p161
    %p163 = scmp.ne.s32.totalorder %s155, %s157
    %p164 = scmp.eq.s32.totalorder %s21, 1
    %p165 = por %p163, %p164
    %p166 = scmp.ne.s32.totalorder %s157, %s158
    %p167 = scmp.eq.s32.totalorder %s21, 0
    %p168 = por %p166, %p167
    %p169 = scmp.ne.s32.totalorder %s157, %s158
    %p170 = scmp.eq.s32.totalorder %s22, 1
    %p171 = por %p169, %p170
    %p173 = scmp.ne.s32.totalorder %s158, %s172
    %p174 = scmp.eq.s32.totalorder %s22, 0
    %p175 = por %p173, %p174
    %s177 = sadd.s32 %s176, 1
    %p180 = scmp.eq.s32.totalorder %s16, 1
    %p181 = scmp.ne.s32.totalorder %s176, %s178
    %p182 = scmp.eq.s32.totalorder %s16, 0
    %p183 = por %p181, %p182
    %p184 = scmp.ne.s32.totalorder %s176, %s178
    %p185 = scmp.eq.s32.totalorder %s21, 1
    %p186 = por %p184, %p185
    %p187 = scmp.ne.s32.totalorder %s178, %s179
    %p188 = scmp.eq.s32.totalorder %s21, 0
    %p189 = por %p187, %p188
    %p190 = scmp.ne.s32.totalorder %s178, %s179
    %p191 = scmp.eq.s32.totalorder %s22, 1
    %p192 = por %p190, %p191
    %p194 = scmp.ne.s32.totalorder %s179, %s193
    %p195 = scmp.eq.s32.totalorder %s22, 0
    %p196 = por %p194, %p195
    %s198 = sadd.s32 %s197, 1
    %p201 = scmp.eq.s32.totalorder %s16, 1
    %p202 = scmp.ne.s32.totalorder %s197, %s199
    %p203 = scmp.eq.s32.totalorder %s16, 0
    %p204 = por %p202, %p203
    %p205 = scmp.ne.s32.totalorder %s197, %s199
    %p206 = scmp.eq.s32.totalorder %s21, 1
    %p207 = por %p205, %p206
    %p208 = scmp.ne.s32.totalorder %s199, %s200
    %p209 = scmp.eq.s32.totalorder %s21, 0
    %p210 = por %p208, %p209
    %p211 = scmp.ne.s32.totalorder %s199, %s200
    %p212 = scmp.eq.s32.totalorder %s22, 1
    %p213 = por %p211, %p212
    %p215 = scmp.ne.s32.totalorder %s200, %s214
    %p216 = scmp.eq.s32.totalorder %s22, 0
    %p217 = por %p215, %p216
    %s219 = sadd.s32 %s218, 1
    %p222 = scmp.eq.s32.totalorder %s16, 1
    %p223 = scmp.ne.s32.totalorder %s218, %s220
    %p224 = scmp.eq.s32.totalorder %s16, 0
    %p225 = por %p223, %p224
    %p226 = scmp.ne.s32.totalorder %s218, %s220
    %p227 = scmp.eq.s32.totalorder %s21, 1
    %p228 = por %p226, %p227
    %p229 = scmp.ne.s32.totalorder %s220, %s221
    %p230 = scmp.eq.s32.totalorder %s21, 0
    %p231 = por %p229, %p230
    %p232 = scmp.ne.s32.totalorder %s220, %s221
    %p233 = scmp.eq.s32.totalorder %s22, 1
    %p234 = por %p232, %p233
    %p236 = scmp.ne.s32.totalorder %s221, %s235
    %p237 = scmp.eq.s32.totalorder %s22, 0
    %p238 = por %p236, %p237
    %s239 = ssub.s32 %s16, %s23
    %p240 = scmp.eq.s32.totalorder %s239, 0
    %s242 = sadd.s32 %s241, 1
    %s243 = scalar_select %p240, %s241, %s242
    %p246 = pneg %p240
    %p247 = scmp.eq.s32.totalorder %s16, 1
    %p248 = por %p246, %p247
    %p249 = scmp.ne.s32.totalorder %s241, %s244
    %p250 = scmp.eq.s32.totalorder %s16, 0
    %p251 = por %p249, %p250
    %p252 = scmp.ne.s32.totalorder %s241, %s244
    %p253 = scmp.eq.s32.totalorder %s21, 1
    %p254 = por %p252, %p253
    %p255 = scmp.ne.s32.totalorder %s244, %s245
    %p256 = scmp.eq.s32.totalorder %s21, 0
    %p257 = por %p255, %p256
    %p258 = scmp.ne.s32.totalorder %s244, %s245
    %p259 = scmp.eq.s32.totalorder %s22, 1
    %p260 = por %p258, %p259
    %p262 = scmp.ne.s32.totalorder %s245, %s261
    %p263 = scmp.eq.s32.totalorder %s22, 0
    %p264 = por %p262, %p263
    %p265 = scmp.le.s32.totalorder 1, %s16
    %p266 = scmp.lt.s32.totalorder %s16, 3
    %p267 = pnand %p265, %p266
    %p268 = pneg %p267
    // Predicated region
    $region9: #{_lambda_.8} parent=5 // pred_check
      _
    $region10: #{_lambda_.8} parent=5 // pred_check_branch
      %270 = sbr.rel (%p267) target = $region12
    $region11: #{_lambda_.8} parent=5 // pred_region
      %s271 = ssub.s32 %s16, 1
      // Predicated region
      $region13: #{_lambda_.8} parent=11 // pred_check
        %p272 = pneg %p63
      $region14: #{_lambda_.8} parent=11 // pred_check_branch
        %274 = sbr.rel (%p272) target = $region16
      $region15: #{_lambda_.8} parent=11 // pred_region
        _
      $region16: #{_lambda_.8} parent=11 // pred_fallthru
        _
      // Predicated region
      $region17: #{_lambda_.8} parent=11 // pred_check
        %p275 = pneg %p84
      $region18: #{_lambda_.8} parent=11 // pred_check_branch
        %277 = sbr.rel (%p275) target = $region20
      $region19: #{_lambda_.8} parent=11 // pred_region
        _
      $region20: #{_lambda_.8} parent=11 // pred_fallthru
        _
      // Predicated region
      $region21: #{_lambda_.8} parent=11 // pred_check
        %p278 = pneg %p105
      $region22: #{_lambda_.8} parent=11 // pred_check_branch
        %280 = sbr.rel (%p278) target = $region24
      $region23: #{_lambda_.8} parent=11 // pred_region
        _
      $region24: #{_lambda_.8} parent=11 // pred_fallthru
        _
      // Predicated region
      $region25: #{_lambda_.8} parent=11 // pred_check
        %p281 = pneg %p126
      $region26: #{_lambda_.8} parent=11 // pred_check_branch
        %283 = sbr.rel (%p281) target = $region28
      $region27: #{_lambda_.8} parent=11 // pred_region
        _
      $region28: #{_lambda_.8} parent=11 // pred_fallthru
        _
      // Predicated region
      $region29: #{_lambda_.8} parent=11 // pred_check
        %p284 = pneg %p147
      $region30: #{_lambda_.8} parent=11 // pred_check_branch
        %286 = sbr.rel (%p284) target = $region32
      $region31: #{_lambda_.8} parent=11 // pred_region
        _
      $region32: #{_lambda_.8} parent=11 // pred_fallthru
        _
      // Predicated region
      $region33: #{_lambda_.8} parent=11 // pred_check
        %p287 = pneg %p168
      $region34: #{_lambda_.8} parent=11 // pred_check_branch
        %289 = sbr.rel (%p287) target = $region36
      $region35: #{_lambda_.8} parent=11 // pred_region
        _
      $region36: #{_lambda_.8} parent=11 // pred_fallthru
        _
      // Predicated region
      $region37: #{_lambda_.8} parent=11 // pred_check
        %p290 = pneg %p189
      $region38: #{_lambda_.8} parent=11 // pred_check_branch
        %292 = sbr.rel (%p290) target = $region40
      $region39: #{_lambda_.8} parent=11 // pred_region
        _
      $region40: #{_lambda_.8} parent=11 // pred_fallthru
        _
      // Predicated region
      $region41: #{_lambda_.8} parent=11 // pred_check
        %p293 = pneg %p210
      $region42: #{_lambda_.8} parent=11 // pred_check_branch
        %295 = sbr.rel (%p293) target = $region44
      $region43: #{_lambda_.8} parent=11 // pred_region
        _
      $region44: #{_lambda_.8} parent=11 // pred_fallthru
        _
      // Predicated region
      $region45: #{_lambda_.8} parent=11 // pred_check
        %p296 = pneg %p231
      $region46: #{_lambda_.8} parent=11 // pred_check_branch
        %298 = sbr.rel (%p296) target = $region48
      $region47: #{_lambda_.8} parent=11 // pred_region
        _
      $region48: #{_lambda_.8} parent=11 // pred_fallthru
        _
    $region12: #{_lambda_.8} parent=5 // pred_fallthru
      _
    %p299 = scmp.lt.s32.totalorder %s16, 2
    // Predicated region
    $region49: #{_lambda_.8} parent=5 // pred_check
      %p300 = pneg %p299
    $region50: #{_lambda_.8} parent=5 // pred_check_branch
      %302 = sbr.rel (%p300) target = $region52
    $region51: #{_lambda_.8} parent=5 // pred_region
      // Predicated region
      $region53: #{_lambda_.8} parent=51 // pred_check
        %p303 = pneg %p36
      $region54: #{_lambda_.8} parent=51 // pred_check_branch
        %305 = sbr.rel (%p303) target = $region56
      $region55: #{_lambda_.8} parent=51 // pred_region
        %p306 = scmp.lt.s32.totalorder %s16, 1
        %s307 = scalar_select %p306, %s16, 1
        %s308 = smul.addr %s307, 2
        %s309 = smul.addr %s308, 8
        %s310 = scalar_lea.vmem %s0, %s309
      $region56: #{_lambda_.8} parent=51 // pred_fallthru
        _
    $region52: #{_lambda_.8} parent=5 // pred_fallthru
      _
    %p311 = scmp.le.s32.totalorder 1, %s16
    %p312 = scmp.lt.s32.totalorder %s16, 3
    %p313 = pnand %p311, %p312
    %p314 = pneg %p313
    // Predicated region
    $region57: #{_lambda_.8} parent=5 // pred_check
      _
    $region58: #{_lambda_.8} parent=5 // pred_check_branch
      %316 = sbr.rel (%p313) target = $region60
    $region59: #{_lambda_.8} parent=5 // pred_region
      %s317 = ssub.s32 %s16, 1
      %p318 = scmp.lt.s32.totalorder %s21, 1
      %s319 = scalar_select %p318, %s21, 1
      %s320 = smul.addr %s319, 2
      %s321 = smul.addr %s320, 8
      %s322 = scalar_lea.vmem %s0, %s321
      %p323 = pneg %p42
      %p324 = pneg %p39
      %p325 = pneg %p63
      %p326 = pneg %p60
      %p327 = pneg %p84
      %p328 = pneg %p81
      %p329 = pneg %p105
      %p330 = pneg %p102
      %p331 = pneg %p126
      %p332 = pneg %p123
      %p333 = pneg %p147
      %p334 = pneg %p144
      %p335 = pneg %p168
      %p336 = pneg %p165
      %p337 = pneg %p189
      %p338 = pneg %p186
      %p339 = pneg %p210
      %p340 = pneg %p207
      %p341 = pneg %p231
      %p342 = pneg %p228
      %p343 = pneg %p257
      %p344 = pneg %p254
      %p345 = scmp.lt.s32.totalorder %s21, 1
      %s346 = scalar_select %p345, %s21, 1
      %s347 = smul.addr %s346, 4
      %s348 = scalar_lea.vmem %s10, %s347
      %p349 = scmp.lt.s32.totalorder %s21, 1
      %s350 = scalar_select %p349, %s21, 1
      %s351 = smul.addr %s350, 2
      %s352 = smul.addr %s351, 8
      %s353 = scalar_lea.vmem %s0, %s352
      %p354 = scmp.lt.s32.totalorder %s21, 1
      %s355 = scalar_select %p354, %s21, 1
      %s356 = smul.addr %s355, 4
      %s357 = scalar_lea.vmem %s10, %s356
      %v359 = vld [vmem:[%s353] sm:$0xff]
      %v360 = vld [vmem:[%s353 + $0x8] sm:$0xff]
      %v361 = vpack.c.bf16 %v360, %v359
      %v362 = vld [vmem:[%s1] sm:$0xf]
      %v363 = vld [vmem:[%s1 + $0x4] sm:$0xf]
      %v366 = vunpack.c.l.b16 %v362
      %v367 = vunpack.c.l.b16 %v363
      %v368 = vpack.c.b16 %v367, %v366
      %vm370 = vcmask 130048
      %v372 = vsel %vm370, %v361, 0
      %374 = vmatprep.subr.bf16.mxu0 0
      %375 = vmatpush1.bf16.msra.mxu0 0
      %376 = vmatprep.subr.bf16.mxu0 0
      %377 = vmatpush1.bf16.msra.mxu0 0
      %378 = vmatprep.subr.bf16.mxu0 0
      %379 = vmatpush1.bf16.msra.mxu0 0
      %380 = vmatprep.subr.bf16.mxu0 0
      %381 = vmatpush1.bf16.msra.mxu0 0
      %382 = vmatprep.subr.bf16.mxu0 0
      %383 = vmatpush1.bf16.msra.mxu0 0
      %384 = vmatprep.subr.bf16.mxu0 0
      %385 = vmatpush1.bf16.msra.mxu0 0
      %386 = vmatprep.subr.bf16.mxu0 0
      %387 = vmatpush1.bf16.msra.mxu0 0
      %388 = vmatprep.subr.bf16.mxu0 0
      %389 = vmatpush1.bf16.msra.mxu0 %v368
      %390 = vmatprep.subr.bf16.mxu0 0
      %391 = vmatpush2.bf16.msra.mxu0 0
      %392 = vmatprep.subr.bf16.mxu0 0
      %393 = vmatpush2.bf16.msra.mxu0 0
      %394 = vmatprep.subr.bf16.mxu0 0
      %395 = vmatpush2.bf16.msra.mxu0 0
      %396 = vmatprep.subr.bf16.mxu0 0
      %397 = vmatpush2.bf16.msra.mxu0 0
      %398 = vmatprep.subr.bf16.mxu0 0
      %399 = vmatpush2.bf16.msra.mxu0 0
      %400 = vmatprep.subr.bf16.mxu0 0
      %401 = vmatpush2.bf16.msra.mxu0 0
      %402 = vmatprep.subr.bf16.mxu0 0
      %403 = vmatpush2.bf16.msra.mxu0 0
      %404 = vmatprep.subr.bf16.mxu0 0
      %405 = vmatpush2.bf16.msra.mxu0 0
      %406 = vmatprep.mubr.bf16.mxu0 0
      %407 = vmatmul.mubr.bf16.gmra.mxu0 %v372
      %v408 = vpop.f32.mrf.mxu0
      %v409 = vadd.f32 0.0, %v408
      %v410 = vpop.f32.mrf.mxu0
      %v411 = vpop.f32.mrf.mxu0
      %v412 = vadd.f32 0.0, %v411
      %v413 = vpop.f32.mrf.mxu0
      %414 = vdwg.mxu0
      %v415 = vld [vmem:[%s2] sm:$0x1]
      %v417 = vlaneseq
      %v418 = vshrl.u32 %v417, 7
      %v419 = vsub.s32 0, %v418
      %v420 = vrot.slane %v415, %v419
      %v422 = vmul.f32 %v409, %v420
      %v423 = vmul.f32 %v412, %v420
      %v424 = vld [vmem:[%s3] sm:$0x1]
      %v426 = vlaneseq
      %v427 = vshrl.u32 %v426, 7
      %v428 = vsub.s32 0, %v427
      %v429 = vrot.slane %v424, %v428
      %v431 = vadd.f32 %v422, %v429
      %v432 = vadd.f32 %v423, %v429
      %v433 = vmax.f32 %v431, 0.0
      %v434 = vmax.f32 %v432, 0.0
      %vm435 = vcmask 523264
      %436 = vst.msk [vmem:[#allocation2] sm:$0xff] %vm435, 0.0
      %437 = vst.msk [vmem:[#allocation2 + $0x8] sm:$0xff] %vm435, 0.0
      %438 = vst.msk [vmem:[#allocation2 + $0x10] sm:$0xff] %vm435, 0.0
      %439 = vst.msk [vmem:[#allocation2 + $0x18] sm:$0xff] %vm435, 0.0
      %vm440 = vcmask 519168
      %441 = vst.msk [vmem:[#allocation2 + $0x20] sm:$0xf] %vm440, 0.0
      %442 = vst.msk [vmem:[#allocation2 + $0x7] sm:$0xf] %vm440, %v433
      %vm443 = vcmask 523268
      %444 = vst.msk [vmem:[#allocation2 + $0x9] sm:$0xf0] %vm443, %v433
      %445 = vst.msk [vmem:[#allocation2 + $0x13] sm:$0xf] %vm440, %v434
      %446 = vst.msk [vmem:[#allocation2 + $0x15] sm:$0xf0] %vm443, %v434
      %v447 = vld [vmem:[%s4] sm:$0xff]
      %v448 = vld [vmem:[%s4 + $0x8] sm:$0x1]
      %v449 = vld [vmem:[%s5] sm:$0x1]
      %v450 = vld [vmem:[%s6] sm:$0x1]
      %v451 = vld [vmem:[#allocation2] ss:$2 sm:$0x3]
      %v452 = vlaneseq
      %v453 = vshrl.u32 %v452, 7
      %v454 = vsub.s32 0, %v453
      %v455 = vrot.slane %v447, %v454
      %v456 = vmul.f32 %v451, %v455
      %v457 = vadd.f32 %v456, 0.0
      %s458 = scalar_lea.vmem [#allocation2], 1
      %v459 = vld [vmem:[%s458] ss:$2 sm:$0x3]
      %v460 = vlaneseq
      %v461 = vshrl.u32 %v460, 7
      %v462 = vsub.s32 1, %v461
      %v463 = vrot.slane %v447, %v462
      %v464 = vmul.f32 %v459, %v463
      %v465 = vadd.f32 %v457, %v464
      %s466 = scalar_lea.vmem [#allocation2], 2
      %v467 = vld [vmem:[%s466] ss:$2 sm:$0x3]
      %v468 = vlaneseq
      %v469 = vshrl.u32 %v468, 7
      %v470 = vsub.s32 2, %v469
      %v471 = vrot.slane %v447, %v470
      %v472 = vmul.f32 %v467, %v471
      %v473 = vadd.f32 %v465, %v472
      %s474 = scalar_lea.vmem [#allocation2], 6
      %v475 = vld [vmem:[%s474] ss:$2 sm:$0x3]
      %v476 = vlaneseq
      %v477 = vshrl.u32 %v476, 7
      %v478 = vsub.s32 3, %v477
      %v479 = vrot.slane %v447, %v478
      %v480 = vmul.f32 %v475, %v479
      %v481 = vadd.f32 %v473, %v480
      %s482 = scalar_lea.vmem [#allocation2], 7
      %v483 = vld [vmem:[%s482] ss:$2 sm:$0x3]
      %v484 = vlaneseq
      %v485 = vshrl.u32 %v484, 7
      %v486 = vsub.s32 4, %v485
      %v487 = vrot.slane %v447, %v486
      %v488 = vmul.f32 %v483, %v487
      %v489 = vadd.f32 %v481, %v488
      %s490 = scalar_lea.vmem [#allocation2], 8
      %v491 = vld [vmem:[%s490] ss:$2 sm:$0x3]
      %v492 = vlaneseq
      %v493 = vshrl.u32 %v492, 7
      %v494 = vsub.s32 5, %v493
      %v495 = vrot.slane %v447, %v494
      %v496 = vmul.f32 %v491, %v495
      %v497 = vadd.f32 %v489, %v496
      %s498 = scalar_lea.vmem [#allocation2], 12
      %v499 = vld [vmem:[%s498] ss:$2 sm:$0x3]
      %v500 = vlaneseq
      %v501 = vshrl.u32 %v500, 7
      %v502 = vsub.s32 6, %v501
      %v503 = vrot.slane %v447, %v502
      %v504 = vmul.f32 %v499, %v503
      %v505 = vadd.f32 %v497, %v504
      %s506 = scalar_lea.vmem [#allocation2], 13
      %v507 = vld [vmem:[%s506] ss:$2 sm:$0x3]
      %v508 = vlaneseq
      %v509 = vshrl.u32 %v508, 7
      %v510 = vsub.s32 7, %v509
      %v511 = vrot.slane %v447, %v510
      %v512 = vmul.f32 %v507, %v511
      %v513 = vadd.f32 %v505, %v512
      %s514 = scalar_lea.vmem [#allocation2], 14
      %v515 = vld [vmem:[%s514] ss:$2 sm:$0x3]
      %v516 = vlaneseq
      %v517 = vshrl.u32 %v516, 7
      %v518 = vsub.s32 0, %v517
      %v519 = vrot.slane %v448, %v518
      %v520 = vmul.f32 %v515, %v519
      %v521 = vadd.f32 %v513, %v520
      %v523 = vlaneseq
      %v524 = vshrl.u32 %v523, 7
      %v525 = vsub.s32 0, %v524
      %v526 = vrot.slane %v449, %v525
      %v528 = vmul.f32 %v521, %v526
      %v530 = vlaneseq
      %v531 = vshrl.u32 %v530, 7
      %v532 = vsub.s32 0, %v531
      %v533 = vrot.slane %v450, %v532
      %v535 = vadd.f32 %v528, %v533
      %v536 = vmax.f32 %v535, 0.0
      %vm537 = vcmask 517120
      %538 = vst.msk [vmem:[#allocation3] sm:$0x3] %vm537, %v536
      %v539 = vld [vmem:[%s498] ss:$2 sm:$0x3]
      %v540 = vmul.f32 %v539, %v455
      %v541 = vadd.f32 %v540, 0.0
      %v542 = vld [vmem:[%s506] ss:$2 sm:$0x3]
      %v543 = vmul.f32 %v542, %v463
      %v544 = vadd.f32 %v541, %v543
      %v545 = vld [vmem:[%s514] ss:$2 sm:$0x3]
      %v546 = vmul.f32 %v545, %v471
      %v547 = vadd.f32 %v544, %v546
      %s548 = scalar_lea.vmem [#allocation2], 18
      %v549 = vld [vmem:[%s548] ss:$2 sm:$0x3]
      %v550 = vmul.f32 %v549, %v479
      %v551 = vadd.f32 %v547, %v550
      %s552 = scalar_lea.vmem [#allocation2], 19
      %v553 = vld [vmem:[%s552] ss:$2 sm:$0x3]
      %v554 = vmul.f32 %v553, %v487
      %v555 = vadd.f32 %v551, %v554
      %s556 = scalar_lea.vmem [#allocation2], 20
      %v557 = vld [vmem:[%s556] ss:$2 sm:$0x3]
      %v558 = vmul.f32 %v557, %v495
      %v559 = vadd.f32 %v555, %v558
      %s560 = scalar_lea.vmem [#allocation2], 24
      %v561 = vld [vmem:[%s560] ss:$2 sm:$0x3]
      %v562 = vmul.f32 %v561, %v503
      %v563 = vadd.f32 %v559, %v562
      %s564 = scalar_lea.vmem [#allocation2], 25
      %v565 = vld [vmem:[%s564] ss:$2 sm:$0x3]
      %v566 = vmul.f32 %v565, %v511
      %v567 = vadd.f32 %v563, %v566
      %s568 = scalar_lea.vmem [#allocation2], 26
      %v569 = vld [vmem:[%s568] ss:$2 sm:$0x3]
      %v570 = vmul.f32 %v569, %v519
      %v571 = vadd.f32 %v567, %v570
      %v572 = vmul.f32 %v571, %v526
      %v573 = vadd.f32 %v572, %v533
      %v574 = vmax.f32 %v573, 0.0
      %575 = vst.msk [vmem:[#allocation3 + $0x2] sm:$0x3] %vm537, %v574
      %v576 = vld [vmem:[#allocation3] sm:$0xf]
      %v577 = vpack.c.bf16 %v576, %v576
      %v578 = vld [vmem:[%s7] sm:$0xf]
      %v579 = vld [vmem:[%s7 + $0x4] sm:$0xf]
      %v580 = vld [vmem:[%s7 + $0x8] sm:$0xf]
      %v581 = vld [vmem:[%s7 + $0xc] sm:$0xf]
      %v582 = vld [vmem:[%s7 + $0x10] sm:$0xf]
      %v583 = vld [vmem:[%s7 + $0x14] sm:$0xf]
      %v584 = vld [vmem:[%s7 + $0x18] sm:$0xf]
      %v585 = vld [vmem:[%s7 + $0x1c] sm:$0xf]
      %v594 = vunpack.c.l.b16 %v578
      %v595 = vunpack.c.l.b16 %v579
      %v596 = vunpack.c.l.b16 %v580
      %v597 = vunpack.c.l.b16 %v581
      %v598 = vunpack.c.l.b16 %v582
      %v599 = vunpack.c.l.b16 %v583
      %v600 = vunpack.c.l.b16 %v584
      %v601 = vunpack.c.l.b16 %v585
      %v602 = vpack.c.b16 %v595, %v594
      %v603 = vpack.c.b16 %v597, %v596
      %v604 = vpack.c.b16 %v599, %v598
      %v605 = vpack.c.b16 %v601, %v600
      %v611 = vsel %vm435, %v577, 0
      %613 = vmatprep.subr.bf16.mxu0 0
      %614 = vmatpush1.bf16.msra.mxu0 0
      %615 = vmatprep.subr.bf16.mxu0 0
      %616 = vmatpush1.bf16.msra.mxu0 0
      %617 = vmatprep.subr.bf16.mxu0 0
      %618 = vmatpush1.bf16.msra.mxu0 0
      %619 = vmatprep.subr.bf16.mxu0 0
      %620 = vmatpush1.bf16.msra.mxu0 0
      %621 = vmatprep.subr.bf16.mxu0 0
      %622 = vmatpush1.bf16.msra.mxu0 %v605
      %623 = vmatprep.subr.bf16.mxu0 0
      %624 = vmatpush1.bf16.msra.mxu0 %v604
      %625 = vmatprep.subr.bf16.mxu0 0
      %626 = vmatpush1.bf16.msra.mxu0 %v603
      %627 = vmatprep.subr.bf16.mxu0 0
      %628 = vmatpush1.bf16.msra.mxu0 %v602
      %629 = vmatprep.subr.bf16.mxu0 0
      %630 = vmatpush2.bf16.msra.mxu0 0
      %631 = vmatprep.subr.bf16.mxu0 0
      %632 = vmatpush2.bf16.msra.mxu0 0
      %633 = vmatprep.subr.bf16.mxu0 0
      %634 = vmatpush2.bf16.msra.mxu0 0
      %635 = vmatprep.subr.bf16.mxu0 0
      %636 = vmatpush2.bf16.msra.mxu0 0
      %637 = vmatprep.subr.bf16.mxu0 0
      %638 = vmatpush2.bf16.msra.mxu0 0
      %639 = vmatprep.subr.bf16.mxu0 0
      %640 = vmatpush2.bf16.msra.mxu0 0
      %641 = vmatprep.subr.bf16.mxu0 0
      %642 = vmatpush2.bf16.msra.mxu0 0
      %643 = vmatprep.subr.bf16.mxu0 0
      %644 = vmatpush2.bf16.msra.mxu0 0
      %645 = vmatprep.mubr.bf16.mxu0 0
      %646 = vmatmul.mubr.bf16.gmra.mxu0 %v611
      %v647 = vpop.f32.mrf.mxu0
      %v648 = vadd.f32 0.0, %v647
      %v649 = vpop.f32.mrf.mxu0
      %v650 = vpop.f32.mrf.mxu0
      %v651 = vpop.f32.mrf.mxu0
      %652 = vdwg.mxu0
      %v653 = vld [vmem:[%s8] sm:$0x1]
      %v655 = vlaneseq
      %v656 = vshrl.u32 %v655, 7
      %v657 = vsub.s32 0, %v656
      %v658 = vrot.slane %v653, %v657
      %v660 = vmul.f32 %v648, %v658
      %v661 = vld [vmem:[%s9] sm:$0x1]
      %v663 = vlaneseq
      %v664 = vshrl.u32 %v663, 7
      %v665 = vsub.s32 0, %v664
      %v666 = vrot.slane %v661, %v665
      %v668 = vadd.f32 %v660, %v666
      %vm669 = vcmask 191488
      %670 = vst.msk [vmem:[%s357] sm:$0xf] %vm669, %v668
      %p671 = scmp.lt.s32.totalorder %s21, 1
      %s672 = scalar_select %p671, %s21, 1
      %s673 = smul.addr %s672, 4
      %s674 = scalar_lea.vmem %s10, %s673
      // Predicated region
      $region61: #{_lambda_.8} parent=59 // pred_check
        %p675 = pneg %p254
      $region62: #{_lambda_.8} parent=59 // pred_check_branch
        %677 = sbr.rel (%p675) target = $region64
      $region63: #{_lambda_.8} parent=59 // pred_region
        _
      $region64: #{_lambda_.8} parent=59 // pred_fallthru
        _
    $region60: #{_lambda_.8} parent=5 // pred_fallthru
      _
    %p678 = scmp.le.s32.totalorder 2, %s16
    // Predicated region
    $region65: #{_lambda_.8} parent=5 // pred_check
      %p679 = pneg %p678
    $region66: #{_lambda_.8} parent=5 // pred_check_branch
      %681 = sbr.rel (%p679) target = $region68
    $region67: #{_lambda_.8} parent=5 // pred_region
      %s682 = ssub.s32 %s16, 2
      // Predicated region
      $region69: #{_lambda_.8} parent=67 // pred_check
        %p683 = pneg %p260
      $region70: #{_lambda_.8} parent=67 // pred_check_branch
        %685 = sbr.rel (%p683) target = $region72
      $region71: #{_lambda_.8} parent=67 // pred_region
        %p686 = scmp.lt.s32.totalorder %s22, 1
        %s687 = scalar_select %p686, %s22, 1
        %s688 = smul.addr %s687, 4
        %s689 = scalar_lea.vmem %s10, %s688
      $region72: #{_lambda_.8} parent=67 // pred_fallthru
        _
    $region68: #{_lambda_.8} parent=5 // pred_fallthru
      _
  $region6: #{_lambda_.8} parent=0 // loop_footer
    %s20 = sadd.s32 1, %s16
  $region7: #{_lambda_.8} parent=0 // loop_footer_branch
    %15 = sbr.rel target = $region3
  $region8: #{_lambda_.8} parent=0 // loop_exit
    _

// kernel: _lambda_.9
$region0: #{_lambda_.9}
  #allocation0 [shape = 'u32[]', space=smem, size = 0x4, offset = 0x4, fixed_abs, tag = 'smem constant byte address 0x4 - core index']
  #allocation1 [shape = 'u32[144,128]{1,0:T(1,128)}', space=vmem, size = 0x12000, scoped, tag = 'internal scratch']
  #allocation2 [shape = 'f32[16,88]{1,0:T(8,128)}', space=vmem, size = 0x2000, scoped, tag = 'scratch operand']
  #allocation3 [shape = 'f32[4,88]{1,0:T(4,128)}', space=vmem, size = 0x800, scoped, tag = 'scratch operand']
  %s0 = inlined_call_operand.vmem [shape: f32[2,4,24], index: 0, kind: input, shape index: {}]
  %s1 = inlined_call_operand.vmem [shape: bf16[24,88], index: 1, kind: input, shape index: {}]
  %s2 = inlined_call_operand.vmem [shape: f32[1,88], index: 2, kind: input, shape index: {}]
  %s3 = inlined_call_operand.vmem [shape: f32[1,88], index: 3, kind: input, shape index: {}]
  %s4 = inlined_call_operand.vmem [shape: f32[9,88], index: 4, kind: input, shape index: {}]
  %s5 = inlined_call_operand.vmem [shape: f32[1,88], index: 5, kind: input, shape index: {}]
  %s6 = inlined_call_operand.vmem [shape: f32[1,88], index: 6, kind: input, shape index: {}]
  %s7 = inlined_call_operand.vmem [shape: bf16[88,24], index: 7, kind: input, shape index: {}]
  %s8 = inlined_call_operand.vmem [shape: f32[1,24], index: 8, kind: input, shape index: {}]
  %s9 = inlined_call_operand.vmem [shape: f32[1,24], index: 9, kind: input, shape index: {}]
  %s10 = inlined_call_operand.vmem [shape: f32[2,4,24], index: 10, kind: output, shape index: {}]
  %s11 = sld [smem:[#allocation0]]
  $region73: #{_lambda_.9} parent=0
    _
  %s13 = ssub.s32 1, %s11
  %s14 = scalar_select 0, %s13, %s11
  loop: start=0, step=1, limit=4
  $region2: #{_lambda_.9} parent=0 // loop_pre_header
    _
  $region3: #{_lambda_.9} parent=0 // loop_header
    %s16 = sphi 0, %s20
    %p17 = scmp.ge.s32.totalorder %s16, 4
    %s26 = sphi 0, %s28
    %s29 = sphi 0, %s26
    %s30 = sphi 0, %s29
    %s46 = sphi 0, %s30
    %s50 = sphi 0, %s50
    %s52 = sphi 0, %s50
    %s53 = sphi 0, %s52
    %s67 = sphi 0, %s53
    %s71 = sphi 0, %s71
    %s73 = sphi 0, %s71
    %s74 = sphi 0, %s73
    %s88 = sphi 0, %s74
    %s92 = sphi 0, %s92
    %s94 = sphi 0, %s92
    %s95 = sphi 0, %s94
    %s109 = sphi 0, %s95
    %s113 = sphi 0, %s113
    %s115 = sphi 0, %s113
    %s116 = sphi 0, %s115
    %s130 = sphi 0, %s116
    %s134 = sphi 0, %s134
    %s136 = sphi 0, %s134
    %s137 = sphi 0, %s136
    %s151 = sphi 0, %s137
    %s155 = sphi 0, %s155
    %s157 = sphi 0, %s155
    %s158 = sphi 0, %s157
    %s172 = sphi 0, %s158
    %s176 = sphi 0, %s176
    %s178 = sphi 0, %s176
    %s179 = sphi 0, %s178
    %s193 = sphi 0, %s179
    %s197 = sphi 0, %s197
    %s199 = sphi 0, %s197
    %s200 = sphi 0, %s199
    %s214 = sphi 0, %s200
    %s218 = sphi 0, %s218
    %s220 = sphi 0, %s218
    %s221 = sphi 0, %s220
    %s235 = sphi 0, %s221
    %s241 = sphi 0, %s243
    %s244 = sphi 0, %s241
    %s245 = sphi 0, %s244
    %s261 = sphi 0, %s245
  $region4: #{_lambda_.9} parent=0 // loop_header_branch
    %19 = sbr.rel (%p17) target = $region8
  $region5: #{_lambda_.9} parent=0 // loop_body
    %s21 = ssub.s32 %s16, 1
    %s22 = ssub.s32 %s16, 2
    %s23 = sadd.s32 %s16, 1
    %s24 = ssub.s32 %s16, %s23
    %p25 = scmp.eq.s32.totalorder %s24, 0
    %s27 = sadd.s32 %s26, 1
    %s28 = scalar_select %p25, %s26, %s27
    %p31 = pneg %p25
    %p32 = scmp.eq.s32.totalorder %s16, 1
    %p33 = por %p31, %p32
    %p34 = scmp.ne.s32.totalorder %s26, %s29
    %p35 = scmp.eq.s32.totalorder %s16, 0
    %p36 = por %p34, %p35
    %p37 = scmp.ne.s32.totalorder %s26, %s29
    %p38 = scmp.eq.s32.totalorder %s21, 1
    %p39 = por %p37, %p38
    %p40 = scmp.ne.s32.totalorder %s29, %s30
    %p41 = scmp.eq.s32.totalorder %s21, 0
    %p42 = por %p40, %p41
    %p43 = scmp.ne.s32.totalorder %s29, %s30
    %p44 = scmp.eq.s32.totalorder %s22, 1
    %p45 = por %p43, %p44
    %p47 = scmp.ne.s32.totalorder %s30, %s46
    %p48 = scmp.eq.s32.totalorder %s22, 0
    %p49 = por %p47, %p48
    %s51 = sadd.s32 %s50, 1
    %p54 = scmp.eq.s32.totalorder %s16, 1
    %p55 = scmp.ne.s32.totalorder %s50, %s52
    %p56 = scmp.eq.s32.totalorder %s16, 0
    %p57 = por %p55, %p56
    %p58 = scmp.ne.s32.totalorder %s50, %s52
    %p59 = scmp.eq.s32.totalorder %s21, 1
    %p60 = por %p58, %p59
    %p61 = scmp.ne.s32.totalorder %s52, %s53
    %p62 = scmp.eq.s32.totalorder %s21, 0
    %p63 = por %p61, %p62
    %p64 = scmp.ne.s32.totalorder %s52, %s53
    %p65 = scmp.eq.s32.totalorder %s22, 1
    %p66 = por %p64, %p65
    %p68 = scmp.ne.s32.totalorder %s53, %s67
    %p69 = scmp.eq.s32.totalorder %s22, 0
    %p70 = por %p68, %p69
    %s72 = sadd.s32 %s71, 1
    %p75 = scmp.eq.s32.totalorder %s16, 1
    %p76 = scmp.ne.s32.totalorder %s71, %s73
    %p77 = scmp.eq.s32.totalorder %s16, 0
    %p78 = por %p76, %p77
    %p79 = scmp.ne.s32.totalorder %s71, %s73
    %p80 = scmp.eq.s32.totalorder %s21, 1
    %p81 = por %p79, %p80
    %p82 = scmp.ne.s32.totalorder %s73, %s74
    %p83 = scmp.eq.s32.totalorder %s21, 0
    %p84 = por %p82, %p83
    %p85 = scmp.ne.s32.totalorder %s73, %s74
    %p86 = scmp.eq.s32.totalorder %s22, 1
    %p87 = por %p85, %p86
    %p89 = scmp.ne.s32.totalorder %s74, %s88
    %p90 = scmp.eq.s32.totalorder %s22, 0
    %p91 = por %p89, %p90
    %s93 = sadd.s32 %s92, 1
    %p96 = scmp.eq.s32.totalorder %s16, 1
    %p97 = scmp.ne.s32.totalorder %s92, %s94
    %p98 = scmp.eq.s32.totalorder %s16, 0
    %p99 = por %p97, %p98
    %p100 = scmp.ne.s32.totalorder %s92, %s94
    %p101 = scmp.eq.s32.totalorder %s21, 1
    %p102 = por %p100, %p101
    %p103 = scmp.ne.s32.totalorder %s94, %s95
    %p104 = scmp.eq.s32.totalorder %s21, 0
    %p105 = por %p103, %p104
    %p106 = scmp.ne.s32.totalorder %s94, %s95
    %p107 = scmp.eq.s32.totalorder %s22, 1
    %p108 = por %p106, %p107
    %p110 = scmp.ne.s32.totalorder %s95, %s109
    %p111 = scmp.eq.s32.totalorder %s22, 0
    %p112 = por %p110, %p111
    %s114 = sadd.s32 %s113, 1
    %p117 = scmp.eq.s32.totalorder %s16, 1
    %p118 = scmp.ne.s32.totalorder %s113, %s115
    %p119 = scmp.eq.s32.totalorder %s16, 0
    %p120 = por %p118, %p119
    %p121 = scmp.ne.s32.totalorder %s113, %s115
    %p122 = scmp.eq.s32.totalorder %s21, 1
    %p123 = por %p121, %p122
    %p124 = scmp.ne.s32.totalorder %s115, %s116
    %p125 = scmp.eq.s32.totalorder %s21, 0
    %p126 = por %p124, %p125
    %p127 = scmp.ne.s32.totalorder %s115, %s116
    %p128 = scmp.eq.s32.totalorder %s22, 1
    %p129 = por %p127, %p128
    %p131 = scmp.ne.s32.totalorder %s116, %s130
    %p132 = scmp.eq.s32.totalorder %s22, 0
    %p133 = por %p131, %p132
    %s135 = sadd.s32 %s134, 1
    %p138 = scmp.eq.s32.totalorder %s16, 1
    %p139 = scmp.ne.s32.totalorder %s134, %s136
    %p140 = scmp.eq.s32.totalorder %s16, 0
    %p141 = por %p139, %p140
    %p142 = scmp.ne.s32.totalorder %s134, %s136
    %p143 = scmp.eq.s32.totalorder %s21, 1
    %p144 = por %p142, %p143
    %p145 = scmp.ne.s32.totalorder %s136, %s137
    %p146 = scmp.eq.s32.totalorder %s21, 0
    %p147 = por %p145, %p146
    %p148 = scmp.ne.s32.totalorder %s136, %s137
    %p149 = scmp.eq.s32.totalorder %s22, 1
    %p150 = por %p148, %p149
    %p152 = scmp.ne.s32.totalorder %s137, %s151
    %p153 = scmp.eq.s32.totalorder %s22, 0
    %p154 = por %p152, %p153
    %s156 = sadd.s32 %s155, 1
    %p159 = scmp.eq.s32.totalorder %s16, 1
    %p160 = scmp.ne.s32.totalorder %s155, %s157
    %p161 = scmp.eq.s32.totalorder %s16, 0
    %p162 = por %p160, %p161
    %p163 = scmp.ne.s32.totalorder %s155, %s157
    %p164 = scmp.eq.s32.totalorder %s21, 1
    %p165 = por %p163, %p164
    %p166 = scmp.ne.s32.totalorder %s157, %s158
    %p167 = scmp.eq.s32.totalorder %s21, 0
    %p168 = por %p166, %p167
    %p169 = scmp.ne.s32.totalorder %s157, %s158
    %p170 = scmp.eq.s32.totalorder %s22, 1
    %p171 = por %p169, %p170
    %p173 = scmp.ne.s32.totalorder %s158, %s172
    %p174 = scmp.eq.s32.totalorder %s22, 0
    %p175 = por %p173, %p174
    %s177 = sadd.s32 %s176, 1
    %p180 = scmp.eq.s32.totalorder %s16, 1
    %p181 = scmp.ne.s32.totalorder %s176, %s178
    %p182 = scmp.eq.s32.totalorder %s16, 0
    %p183 = por %p181, %p182
    %p184 = scmp.ne.s32.totalorder %s176, %s178
    %p185 = scmp.eq.s32.totalorder %s21, 1
    %p186 = por %p184, %p185
    %p187 = scmp.ne.s32.totalorder %s178, %s179
    %p188 = scmp.eq.s32.totalorder %s21, 0
    %p189 = por %p187, %p188
    %p190 = scmp.ne.s32.totalorder %s178, %s179
    %p191 = scmp.eq.s32.totalorder %s22, 1
    %p192 = por %p190, %p191
    %p194 = scmp.ne.s32.totalorder %s179, %s193
    %p195 = scmp.eq.s32.totalorder %s22, 0
    %p196 = por %p194, %p195
    %s198 = sadd.s32 %s197, 1
    %p201 = scmp.eq.s32.totalorder %s16, 1
    %p202 = scmp.ne.s32.totalorder %s197, %s199
    %p203 = scmp.eq.s32.totalorder %s16, 0
    %p204 = por %p202, %p203
    %p205 = scmp.ne.s32.totalorder %s197, %s199
    %p206 = scmp.eq.s32.totalorder %s21, 1
    %p207 = por %p205, %p206
    %p208 = scmp.ne.s32.totalorder %s199, %s200
    %p209 = scmp.eq.s32.totalorder %s21, 0
    %p210 = por %p208, %p209
    %p211 = scmp.ne.s32.totalorder %s199, %s200
    %p212 = scmp.eq.s32.totalorder %s22, 1
    %p213 = por %p211, %p212
    %p215 = scmp.ne.s32.totalorder %s200, %s214
    %p216 = scmp.eq.s32.totalorder %s22, 0
    %p217 = por %p215, %p216
    %s219 = sadd.s32 %s218, 1
    %p222 = scmp.eq.s32.totalorder %s16, 1
    %p223 = scmp.ne.s32.totalorder %s218, %s220
    %p224 = scmp.eq.s32.totalorder %s16, 0
    %p225 = por %p223, %p224
    %p226 = scmp.ne.s32.totalorder %s218, %s220
    %p227 = scmp.eq.s32.totalorder %s21, 1
    %p228 = por %p226, %p227
    %p229 = scmp.ne.s32.totalorder %s220, %s221
    %p230 = scmp.eq.s32.totalorder %s21, 0
    %p231 = por %p229, %p230
    %p232 = scmp.ne.s32.totalorder %s220, %s221
    %p233 = scmp.eq.s32.totalorder %s22, 1
    %p234 = por %p232, %p233
    %p236 = scmp.ne.s32.totalorder %s221, %s235
    %p237 = scmp.eq.s32.totalorder %s22, 0
    %p238 = por %p236, %p237
    %s239 = ssub.s32 %s16, %s23
    %p240 = scmp.eq.s32.totalorder %s239, 0
    %s242 = sadd.s32 %s241, 1
    %s243 = scalar_select %p240, %s241, %s242
    %p246 = pneg %p240
    %p247 = scmp.eq.s32.totalorder %s16, 1
    %p248 = por %p246, %p247
    %p249 = scmp.ne.s32.totalorder %s241, %s244
    %p250 = scmp.eq.s32.totalorder %s16, 0
    %p251 = por %p249, %p250
    %p252 = scmp.ne.s32.totalorder %s241, %s244
    %p253 = scmp.eq.s32.totalorder %s21, 1
    %p254 = por %p252, %p253
    %p255 = scmp.ne.s32.totalorder %s244, %s245
    %p256 = scmp.eq.s32.totalorder %s21, 0
    %p257 = por %p255, %p256
    %p258 = scmp.ne.s32.totalorder %s244, %s245
    %p259 = scmp.eq.s32.totalorder %s22, 1
    %p260 = por %p258, %p259
    %p262 = scmp.ne.s32.totalorder %s245, %s261
    %p263 = scmp.eq.s32.totalorder %s22, 0
    %p264 = por %p262, %p263
    %p265 = scmp.le.s32.totalorder 1, %s16
    %p266 = scmp.lt.s32.totalorder %s16, 3
    %p267 = pnand %p265, %p266
    %p268 = pneg %p267
    // Predicated region
    $region9: #{_lambda_.9} parent=5 // pred_check
      _
    $region10: #{_lambda_.9} parent=5 // pred_check_branch
      %270 = sbr.rel (%p267) target = $region12
    $region11: #{_lambda_.9} parent=5 // pred_region
      %s271 = ssub.s32 %s16, 1
      // Predicated region
      $region13: #{_lambda_.9} parent=11 // pred_check
        %p272 = pneg %p63
      $region14: #{_lambda_.9} parent=11 // pred_check_branch
        %274 = sbr.rel (%p272) target = $region16
      $region15: #{_lambda_.9} parent=11 // pred_region
        _
      $region16: #{_lambda_.9} parent=11 // pred_fallthru
        _
      // Predicated region
      $region17: #{_lambda_.9} parent=11 // pred_check
        %p275 = pneg %p84
      $region18: #{_lambda_.9} parent=11 // pred_check_branch
        %277 = sbr.rel (%p275) target = $region20
      $region19: #{_lambda_.9} parent=11 // pred_region
        _
      $region20: #{_lambda_.9} parent=11 // pred_fallthru
        _
      // Predicated region
      $region21: #{_lambda_.9} parent=11 // pred_check
        %p278 = pneg %p105
      $region22: #{_lambda_.9} parent=11 // pred_check_branch
        %280 = sbr.rel (%p278) target = $region24
      $region23: #{_lambda_.9} parent=11 // pred_region
        _
      $region24: #{_lambda_.9} parent=11 // pred_fallthru
        _
      // Predicated region
      $region25: #{_lambda_.9} parent=11 // pred_check
        %p281 = pneg %p126
      $region26: #{_lambda_.9} parent=11 // pred_check_branch
        %283 = sbr.rel (%p281) target = $region28
      $region27: #{_lambda_.9} parent=11 // pred_region
        _
      $region28: #{_lambda_.9} parent=11 // pred_fallthru
        _
      // Predicated region
      $region29: #{_lambda_.9} parent=11 // pred_check
        %p284 = pneg %p147
      $region30: #{_lambda_.9} parent=11 // pred_check_branch
        %286 = sbr.rel (%p284) target = $region32
      $region31: #{_lambda_.9} parent=11 // pred_region
        _
      $region32: #{_lambda_.9} parent=11 // pred_fallthru
        _
      // Predicated region
      $region33: #{_lambda_.9} parent=11 // pred_check
        %p287 = pneg %p168
      $region34: #{_lambda_.9} parent=11 // pred_check_branch
        %289 = sbr.rel (%p287) target = $region36
      $region35: #{_lambda_.9} parent=11 // pred_region
        _
      $region36: #{_lambda_.9} parent=11 // pred_fallthru
        _
      // Predicated region
      $region37: #{_lambda_.9} parent=11 // pred_check
        %p290 = pneg %p189
      $region38: #{_lambda_.9} parent=11 // pred_check_branch
        %292 = sbr.rel (%p290) target = $region40
      $region39: #{_lambda_.9} parent=11 // pred_region
        _
      $region40: #{_lambda_.9} parent=11 // pred_fallthru
        _
      // Predicated region
      $region41: #{_lambda_.9} parent=11 // pred_check
        %p293 = pneg %p210
      $region42: #{_lambda_.9} parent=11 // pred_check_branch
        %295 = sbr.rel (%p293) target = $region44
      $region43: #{_lambda_.9} parent=11 // pred_region
        _
      $region44: #{_lambda_.9} parent=11 // pred_fallthru
        _
      // Predicated region
      $region45: #{_lambda_.9} parent=11 // pred_check
        %p296 = pneg %p231
      $region46: #{_lambda_.9} parent=11 // pred_check_branch
        %298 = sbr.rel (%p296) target = $region48
      $region47: #{_lambda_.9} parent=11 // pred_region
        _
      $region48: #{_lambda_.9} parent=11 // pred_fallthru
        _
    $region12: #{_lambda_.9} parent=5 // pred_fallthru
      _
    %p299 = scmp.lt.s32.totalorder %s16, 2
    // Predicated region
    $region49: #{_lambda_.9} parent=5 // pred_check
      %p300 = pneg %p299
    $region50: #{_lambda_.9} parent=5 // pred_check_branch
      %302 = sbr.rel (%p300) target = $region52
    $region51: #{_lambda_.9} parent=5 // pred_region
      // Predicated region
      $region53: #{_lambda_.9} parent=51 // pred_check
        %p303 = pneg %p36
      $region54: #{_lambda_.9} parent=51 // pred_check_branch
        %305 = sbr.rel (%p303) target = $region56
      $region55: #{_lambda_.9} parent=51 // pred_region
        %p306 = scmp.lt.s32.totalorder %s16, 1
        %s307 = scalar_select %p306, %s16, 1
        %s308 = smul.addr %s307, 4
        %s309 = scalar_lea.vmem %s0, %s308
      $region56: #{_lambda_.9} parent=51 // pred_fallthru
        _
    $region52: #{_lambda_.9} parent=5 // pred_fallthru
      _
    %p310 = scmp.le.s32.totalorder 1, %s16
    %p311 = scmp.lt.s32.totalorder %s16, 3
    %p312 = pnand %p310, %p311
    %p313 = pneg %p312
    // Predicated region
    $region57: #{_lambda_.9} parent=5 // pred_check
      _
    $region58: #{_lambda_.9} parent=5 // pred_check_branch
      %315 = sbr.rel (%p312) target = $region60
    $region59: #{_lambda_.9} parent=5 // pred_region
      %s316 = ssub.s32 %s16, 1
      %p317 = scmp.lt.s32.totalorder %s21, 1
      %s318 = scalar_select %p317, %s21, 1
      %s319 = smul.addr %s318, 4
      %s320 = scalar_lea.vmem %s0, %s319
      %p321 = pneg %p42
      %p322 = pneg %p39
      %p323 = pneg %p63
      %p324 = pneg %p60
      %p325 = pneg %p84
      %p326 = pneg %p81
      %p327 = pneg %p105
      %p328 = pneg %p102
      %p329 = pneg %p126
      %p330 = pneg %p123
      %p331 = pneg %p147
      %p332 = pneg %p144
      %p333 = pneg %p168
      %p334 = pneg %p165
      %p335 = pneg %p189
      %p336 = pneg %p186
      %p337 = pneg %p210
      %p338 = pneg %p207
      %p339 = pneg %p231
      %p340 = pneg %p228
      %p341 = pneg %p257
      %p342 = pneg %p254
      %p343 = scmp.lt.s32.totalorder %s21, 1
      %s344 = scalar_select %p343, %s21, 1
      %s345 = smul.addr %s344, 4
      %s346 = scalar_lea.vmem %s10, %s345
      %p347 = scmp.lt.s32.totalorder %s21, 1
      %s348 = scalar_select %p347, %s21, 1
      %s349 = smul.addr %s348, 4
      %s350 = scalar_lea.vmem %s0, %s349
      %p351 = scmp.lt.s32.totalorder %s21, 1
      %s352 = scalar_select %p351, %s21, 1
      %s353 = smul.addr %s352, 4
      %s354 = scalar_lea.vmem %s10, %s353
      %v356 = vld [vmem:[%s350] sm:$0xf]
      %v357 = vpack.c.bf16 %v356, %v356
      %v358 = vld [vmem:[%s1] sm:$0xf]
      %v359 = vld [vmem:[%s1 + $0x4] sm:$0xf]
      %v360 = vld [vmem:[%s1 + $0x8] sm:$0xf]
      %v364 = vunpack.c.l.b16 %v358
      %v365 = vunpack.c.l.b16 %v359
      %v366 = vunpack.c.l.b16 %v360
      %v367 = vpack.c.b16 %v365, %v364
      %v368 = vpack.c.b16 %v366, %v366
      %vm370 = vcmask 195584
      %v372 = vsel %vm370, %v357, 0
      %vm374 = vcmask 1043456
      %v376 = vsel %vm374, %v368, 0
      %378 = vmatprep.subr.bf16.mxu0 0
      %379 = vmatpush1.bf16.msra.mxu0 0
      %380 = vmatprep.subr.bf16.mxu0 0
      %381 = vmatpush1.bf16.msra.mxu0 0
      %382 = vmatprep.subr.bf16.mxu0 0
      %383 = vmatpush1.bf16.msra.mxu0 0
      %384 = vmatprep.subr.bf16.mxu0 0
      %385 = vmatpush1.bf16.msra.mxu0 0
      %386 = vmatprep.subr.bf16.mxu0 0
      %387 = vmatpush1.bf16.msra.mxu0 0
      %388 = vmatprep.subr.bf16.mxu0 0
      %389 = vmatpush1.bf16.msra.mxu0 0
      %390 = vmatprep.subr.bf16.mxu0 0
      %391 = vmatpush1.bf16.msra.mxu0 %v376
      %392 = vmatprep.subr.bf16.mxu0 0
      %393 = vmatpush1.bf16.msra.mxu0 %v367
      %394 = vmatprep.subr.bf16.mxu0 0
      %395 = vmatpush2.bf16.msra.mxu0 0
      %396 = vmatprep.subr.bf16.mxu0 0
      %397 = vmatpush2.bf16.msra.mxu0 0
      %398 = vmatprep.subr.bf16.mxu0 0
      %399 = vmatpush2.bf16.msra.mxu0 0
      %400 = vmatprep.subr.bf16.mxu0 0
      %401 = vmatpush2.bf16.msra.mxu0 0
      %402 = vmatprep.subr.bf16.mxu0 0
      %403 = vmatpush2.bf16.msra.mxu0 0
      %404 = vmatprep.subr.bf16.mxu0 0
      %405 = vmatpush2.bf16.msra.mxu0 0
      %406 = vmatprep.subr.bf16.mxu0 0
      %407 = vmatpush2.bf16.msra.mxu0 0
      %408 = vmatprep.subr.bf16.mxu0 0
      %409 = vmatpush2.bf16.msra.mxu0 0
      %410 = vmatprep.mubr.bf16.mxu0 0
      %411 = vmatmul.mubr.bf16.gmra.mxu0 %v372
      %v412 = vpop.f32.mrf.mxu0
      %v413 = vadd.f32 0.0, %v412
      %v414 = vpop.f32.mrf.mxu0
      %v415 = vpop.f32.mrf.mxu0
      %v416 = vpop.f32.mrf.mxu0
      %417 = vdwg.mxu0
      %v418 = vld [vmem:[%s2] sm:$0x1]
      %v420 = vlaneseq
      %v421 = vshrl.u32 %v420, 7
      %v422 = vsub.s32 0, %v421
      %v423 = vrot.slane %v418, %v422
      %v425 = vmul.f32 %v413, %v423
      %v426 = vld [vmem:[%s3] sm:$0x1]
      %v428 = vlaneseq
      %v429 = vshrl.u32 %v428, 7
      %v430 = vsub.s32 0, %v429
      %v431 = vrot.slane %v426, %v430
      %v433 = vadd.f32 %v425, %v431
      %v434 = vrcp.pop 6.0
      %v435 = vmul.f32 %v433, %v434
      %v436 = vadd.f32 %v435, 0.5
      %v437 = vmax.f32 %v436, 0.0
      %v438 = vmin.f32 %v437, 1.0
      %v439 = vmul.f32 %v433, %v438
      %vm440 = vcmask 719872
      %441 = vst.msk [vmem:[#allocation2] sm:$0xff] %vm440, 0.0
      %442 = vst.msk [vmem:[#allocation2 + $0x8] sm:$0xff] %vm440, 0.0
      %vm443 = vcmask 713728
      %444 = vst.msk [vmem:[#allocation2 + $0x5] sm:$0x3] %vm443, %v439
      %vm445 = vcmask 715778
      %446 = vst.msk [vmem:[#allocation2 + $0x7] sm:$0xc] %vm445, %v439
      %v447 = vld [vmem:[%s4] sm:$0xff]
      %v448 = vld [vmem:[%s4 + $0x8] sm:$0x1]
      %v449 = vld [vmem:[%s5] sm:$0x1]
      %v450 = vld [vmem:[%s6] sm:$0x1]
      %v451 = vld [vmem:[#allocation2] sm:$0x3]
      %v452 = vlaneseq
      %v453 = vshrl.u32 %v452, 7
      %v454 = vsub.s32 0, %v453
      %v455 = vrot.slane %v447, %v454
      %v456 = vmul.f32 %v451, %v455
      %v457 = vadd.f32 %v456, 0.0
      %v458 = vld [vmem:[#allocation2 + $0x1] sm:$0x3]
      %v459 = vlaneseq
      %v460 = vshrl.u32 %v459, 7
      %v461 = vsub.s32 1, %v460
      %v462 = vrot.slane %v447, %v461
      %v463 = vmul.f32 %v458, %v462
      %v464 = vadd.f32 %v457, %v463
      %v465 = vld [vmem:[#allocation2 + $0x2] sm:$0x3]
      %v466 = vlaneseq
      %v467 = vshrl.u32 %v466, 7
      %v468 = vsub.s32 2, %v467
      %v469 = vrot.slane %v447, %v468
      %v470 = vmul.f32 %v465, %v469
      %v471 = vadd.f32 %v464, %v470
      %v472 = vld [vmem:[#allocation2 + $0x4] sm:$0x3]
      %v473 = vlaneseq
      %v474 = vshrl.u32 %v473, 7
      %v475 = vsub.s32 3, %v474
      %v476 = vrot.slane %v447, %v475
      %v477 = vmul.f32 %v472, %v476
      %v478 = vadd.f32 %v471, %v477
      %v479 = vld [vmem:[#allocation2 + $0x5] sm:$0x3]
      %v480 = vlaneseq
      %v481 = vshrl.u32 %v480, 7
      %v482 = vsub.s32 4, %v481
      %v483 = vrot.slane %v447, %v482
      %v484 = vmul.f32 %v479, %v483
      %v485 = vadd.f32 %v478, %v484
      %v486 = vld [vmem:[#allocation2 + $0x6] sm:$0x3]
      %v487 = vlaneseq
      %v488 = vshrl.u32 %v487, 7
      %v489 = vsub.s32 5, %v488
      %v490 = vrot.slane %v447, %v489
      %v491 = vmul.f32 %v486, %v490
      %v492 = vadd.f32 %v485, %v491
      %v493 = vld [vmem:[#allocation2 + $0x8] sm:$0x3]
      %v494 = vlaneseq
      %v495 = vshrl.u32 %v494, 7
      %v496 = vsub.s32 6, %v495
      %v497 = vrot.slane %v447, %v496
      %v498 = vmul.f32 %v493, %v497
      %v499 = vadd.f32 %v492, %v498
      %v500 = vld [vmem:[#allocation2 + $0x9] sm:$0x3]
      %v501 = vlaneseq
      %v502 = vshrl.u32 %v501, 7
      %v503 = vsub.s32 7, %v502
      %v504 = vrot.slane %v447, %v503
      %v505 = vmul.f32 %v500, %v504
      %v506 = vadd.f32 %v499, %v505
      %v507 = vld [vmem:[#allocation2 + $0xa] sm:$0x3]
      %v508 = vlaneseq
      %v509 = vshrl.u32 %v508, 7
      %v510 = vsub.s32 0, %v509
      %v511 = vrot.slane %v448, %v510
      %v512 = vmul.f32 %v507, %v511
      %v513 = vadd.f32 %v506, %v512
      %v515 = vlaneseq
      %v516 = vshrl.u32 %v515, 7
      %v517 = vsub.s32 0, %v516
      %v518 = vrot.slane %v449, %v517
      %v520 = vmul.f32 %v513, %v518
      %v522 = vlaneseq
      %v523 = vshrl.u32 %v522, 7
      %v524 = vsub.s32 0, %v523
      %v525 = vrot.slane %v450, %v524
      %v527 = vadd.f32 %v520, %v525
      %v528 = vmul.f32 %v527, %v434
      %v529 = vadd.f32 %v528, 0.5
      %v530 = vmax.f32 %v529, 0.0
      %v531 = vmin.f32 %v530, 1.0
      %v532 = vmul.f32 %v527, %v531
      %533 = vst.msk [vmem:[#allocation3] sm:$0x3] %vm443, %v532
      %v534 = vld [vmem:[#allocation2 + $0x4] sm:$0x3]
      %v535 = vmul.f32 %v534, %v455
      %v536 = vadd.f32 %v535, 0.0
      %v537 = vld [vmem:[#allocation2 + $0x5] sm:$0x3]
      %v538 = vmul.f32 %v537, %v462
      %v539 = vadd.f32 %v536, %v538
      %v540 = vld [vmem:[#allocation2 + $0x6] sm:$0x3]
      %v541 = vmul.f32 %v540, %v469
      %v542 = vadd.f32 %v539, %v541
      %v543 = vld [vmem:[#allocation2 + $0x8] sm:$0x3]
      %v544 = vmul.f32 %v543, %v476
      %v545 = vadd.f32 %v542, %v544
      %v546 = vld [vmem:[#allocation2 + $0x9] sm:$0x3]
      %v547 = vmul.f32 %v546, %v483
      %v548 = vadd.f32 %v545, %v547
      %v549 = vld [vmem:[#allocation2 + $0xa] sm:$0x3]
      %v550 = vmul.f32 %v549, %v490
      %v551 = vadd.f32 %v548, %v550
      %v552 = vld [vmem:[#allocation2 + $0xc] sm:$0x3]
      %v553 = vmul.f32 %v552, %v497
      %v554 = vadd.f32 %v551, %v553
      %v555 = vld [vmem:[#allocation2 + $0xd] sm:$0x3]
      %v556 = vmul.f32 %v555, %v504
      %v557 = vadd.f32 %v554, %v556
      %v558 = vld [vmem:[#allocation2 + $0xe] sm:$0x3]
      %v559 = vmul.f32 %v558, %v511
      %v560 = vadd.f32 %v557, %v559
      %v561 = vmul.f32 %v560, %v518
      %v562 = vadd.f32 %v561, %v525
      %v563 = vmul.f32 %v562, %v434
      %v564 = vadd.f32 %v563, 0.5
      %v565 = vmax.f32 %v564, 0.0
      %v566 = vmin.f32 %v565, 1.0
      %v567 = vmul.f32 %v562, %v566
      %568 = vst.msk [vmem:[#allocation3 + $0x2] sm:$0x3] %vm443, %v567
      %v569 = vld [vmem:[#allocation3] sm:$0xf]
      %v570 = vpack.c.bf16 %v569, %v569
      %v571 = vld [vmem:[%s7] sm:$0xf]
      %v572 = vld [vmem:[%s7 + $0x4] sm:$0xf]
      %v573 = vld [vmem:[%s7 + $0x8] sm:$0xf]
      %v574 = vld [vmem:[%s7 + $0xc] sm:$0xf]
      %v575 = vld [vmem:[%s7 + $0x10] sm:$0xf]
      %v576 = vld [vmem:[%s7 + $0x14] sm:$0xf]
      %v577 = vld [vmem:[%s7 + $0x18] sm:$0xf]
      %v578 = vld [vmem:[%s7 + $0x1c] sm:$0xf]
      %v579 = vld [vmem:[%s7 + $0x20] sm:$0xf]
      %v580 = vld [vmem:[%s7 + $0x24] sm:$0xf]
      %v581 = vld [vmem:[%s7 + $0x28] sm:$0xf]
      %v593 = vunpack.c.l.b16 %v571
      %v594 = vunpack.c.l.b16 %v572
      %v595 = vunpack.c.l.b16 %v573
      %v596 = vunpack.c.l.b16 %v574
      %v597 = vunpack.c.l.b16 %v575
      %v598 = vunpack.c.l.b16 %v576
      %v599 = vunpack.c.l.b16 %v577
      %v600 = vunpack.c.l.b16 %v578
      %v601 = vunpack.c.l.b16 %v579
      %v602 = vunpack.c.l.b16 %v580
      %v603 = vunpack.c.l.b16 %v581
      %v604 = vpack.c.b16 %v594, %v593
      %v605 = vpack.c.b16 %v596, %v595
      %v606 = vpack.c.b16 %v598, %v597
      %v607 = vpack.c.b16 %v600, %v599
      %v608 = vpack.c.b16 %v602, %v601
      %v609 = vpack.c.b16 %v603, %v603
      %v616 = vsel %vm440, %v570, 0
      %v619 = vsel %vm374, %v609, 0
      %621 = vmatprep.subr.bf16.mxu0 0
      %622 = vmatpush1.bf16.msra.mxu0 0
      %623 = vmatprep.subr.bf16.mxu0 0
      %624 = vmatpush1.bf16.msra.mxu0 0
      %625 = vmatprep.subr.bf16.mxu0 0
      %626 = vmatpush1.bf16.msra.mxu0 %v619
      %627 = vmatprep.subr.bf16.mxu0 0
      %628 = vmatpush1.bf16.msra.mxu0 %v608
      %629 = vmatprep.subr.bf16.mxu0 0
      %630 = vmatpush1.bf16.msra.mxu0 %v607
      %631 = vmatprep.subr.bf16.mxu0 0
      %632 = vmatpush1.bf16.msra.mxu0 %v606
      %633 = vmatprep.subr.bf16.mxu0 0
      %634 = vmatpush1.bf16.msra.mxu0 %v605
      %635 = vmatprep.subr.bf16.mxu0 0
      %636 = vmatpush1.bf16.msra.mxu0 %v604
      %637 = vmatprep.subr.bf16.mxu0 0
      %638 = vmatpush2.bf16.msra.mxu0 0
      %639 = vmatprep.subr.bf16.mxu0 0
      %640 = vmatpush2.bf16.msra.mxu0 0
      %641 = vmatprep.subr.bf16.mxu0 0
      %642 = vmatpush2.bf16.msra.mxu0 0
      %643 = vmatprep.subr.bf16.mxu0 0
      %644 = vmatpush2.bf16.msra.mxu0 0
      %645 = vmatprep.subr.bf16.mxu0 0
      %646 = vmatpush2.bf16.msra.mxu0 0
      %647 = vmatprep.subr.bf16.mxu0 0
      %648 = vmatpush2.bf16.msra.mxu0 0
      %649 = vmatprep.subr.bf16.mxu0 0
      %650 = vmatpush2.bf16.msra.mxu0 0
      %651 = vmatprep.subr.bf16.mxu0 0
      %652 = vmatpush2.bf16.msra.mxu0 0
      %653 = vmatprep.mubr.bf16.mxu0 0
      %654 = vmatmul.mubr.bf16.gmra.mxu0 %v616
      %v655 = vpop.f32.mrf.mxu0
      %v656 = vadd.f32 0.0, %v655
      %v657 = vpop.f32.mrf.mxu0
      %v658 = vpop.f32.mrf.mxu0
      %v659 = vpop.f32.mrf.mxu0
      %660 = vdwg.mxu0
      %v661 = vld [vmem:[%s8] sm:$0x1]
      %v663 = vlaneseq
      %v664 = vshrl.u32 %v663, 7
      %v665 = vsub.s32 0, %v664
      %v666 = vrot.slane %v661, %v665
      %v668 = vmul.f32 %v656, %v666
      %v669 = vld [vmem:[%s9] sm:$0x1]
      %v671 = vlaneseq
      %v672 = vshrl.u32 %v671, 7
      %v673 = vsub.s32 0, %v672
      %v674 = vrot.slane %v669, %v673
      %v676 = vadd.f32 %v668, %v674
      %v677 = vadd.f32 %v676, %v356
      %vm678 = vcmask 191488
      %679 = vst.msk [vmem:[%s354] sm:$0xf] %vm678, %v677
      %p680 = scmp.lt.s32.totalorder %s21, 1
      %s681 = scalar_select %p680, %s21, 1
      %s682 = smul.addr %s681, 4
      %s683 = scalar_lea.vmem %s10, %s682
      // Predicated region
      $region61: #{_lambda_.9} parent=59 // pred_check
        %p684 = pneg %p254
      $region62: #{_lambda_.9} parent=59 // pred_check_branch
        %686 = sbr.rel (%p684) target = $region64
      $region63: #{_lambda_.9} parent=59 // pred_region
        _
      $region64: #{_lambda_.9} parent=59 // pred_fallthru
        _
    $region60: #{_lambda_.9} parent=5 // pred_fallthru
      _
    %p687 = scmp.le.s32.totalorder 2, %s16
    // Predicated region
    $region65: #{_lambda_.9} parent=5 // pred_check
      %p688 = pneg %p687
    $region66: #{_lambda_.9} parent=5 // pred_check_branch
      %690 = sbr.rel (%p688) target = $region68
    $region67: #{_lambda_.9} parent=5 // pred_region
      %s691 = ssub.s32 %s16, 2
      // Predicated region
      $region69: #{_lambda_.9} parent=67 // pred_check
        %p692 = pneg %p260
      $region70: #{_lambda_.9} parent=67 // pred_check_branch
        %694 = sbr.rel (%p692) target = $region72
      $region71: #{_lambda_.9} parent=67 // pred_region
        %p695 = scmp.lt.s32.totalorder %s22, 1
        %s696 = scalar_select %p695, %s22, 1
        %s697 = smul.addr %s696, 4
        %s698 = scalar_lea.vmem %s10, %s697
      $region72: #{_lambda_.9} parent=67 // pred_fallthru
        _
    $region68: #{_lambda_.9} parent=5 // pred_fallthru
      _
  $region6: #{_lambda_.9} parent=0 // loop_footer
    %s20 = sadd.s32 1, %s16
  $region7: #{_lambda_.9} parent=0 // loop_footer_branch
    %15 = sbr.rel target = $region3
  $region8: #{_lambda_.9} parent=0 // loop_exit
    _

// kernel: _lambda_.10
$region0: #{_lambda_.10}
  #allocation0 [shape = 'u32[]', space=smem, size = 0x4, offset = 0x4, fixed_abs, tag = 'smem constant byte address 0x4 - core index']
  #allocation1 [shape = 'u32[144,128]{1,0:T(1,128)}', space=vmem, size = 0x12000, scoped, tag = 'internal scratch']
  %s0 = inlined_call_operand.vmem [shape: f32[8,24], index: 0, kind: input, shape index: {}]
  %s1 = inlined_call_operand.vmem [shape: bf16[24,144], index: 1, kind: input, shape index: {}]
  %s2 = inlined_call_operand.vmem [shape: f32[1,144], index: 2, kind: input, shape index: {}]
  %s3 = inlined_call_operand.vmem [shape: f32[1,144], index: 3, kind: input, shape index: {}]
  %s4 = inlined_call_operand.vmem [shape: f32[8,144], index: 4, kind: output, shape index: {}]
  %s5 = sld [smem:[#allocation0]]
  $region26: #{_lambda_.10} parent=0
    _
  %s7 = ssub.s32 1, %s5
  %s8 = scalar_select 0, %s7, %s5
  // Predicated region
  $region2: #{_lambda_.10} parent=0 // pred_check
    _
  $region3: #{_lambda_.10} parent=0 // pred_check_branch
    %10 = sbr.rel (0) target = $region5
  $region4: #{_lambda_.10} parent=0 // pred_region
    _
  $region5: #{_lambda_.10} parent=0 // pred_fallthru
    _
  // Predicated region
  $region6: #{_lambda_.10} parent=0 // pred_check
    _
  $region7: #{_lambda_.10} parent=0 // pred_check_branch
    %12 = sbr.rel (0) target = $region9
  $region8: #{_lambda_.10} parent=0 // pred_region
    _
  $region9: #{_lambda_.10} parent=0 // pred_fallthru
    _
  // Predicated region
  $region10: #{_lambda_.10} parent=0 // pred_check
    _
  $region11: #{_lambda_.10} parent=0 // pred_check_branch
    %14 = sbr.rel (0) target = $region13
  $region12: #{_lambda_.10} parent=0 // pred_region
    _
  $region13: #{_lambda_.10} parent=0 // pred_fallthru
    _
  // Predicated region
  $region14: #{_lambda_.10} parent=0 // pred_check
    _
  $region15: #{_lambda_.10} parent=0 // pred_check_branch
    %16 = sbr.rel (0) target = $region17
  $region16: #{_lambda_.10} parent=0 // pred_region
    _
  $region17: #{_lambda_.10} parent=0 // pred_fallthru
    _
  %v18 = vld [vmem:[%s0] sm:$0xff]
  %v19 = vpack.c.bf16 %v18, %v18
  %v20 = vld [vmem:[%s1] sm:$0xff]
  %v21 = vld [vmem:[%s1 + $0x8] sm:$0xff]
  %v22 = vld [vmem:[%s1 + $0x10] sm:$0xff]
  %v26 = vunpack.c.l.b16 %v20
  %v27 = vunpack.c.h.b16 %v20
  %v28 = vunpack.c.l.b16 %v21
  %v29 = vunpack.c.h.b16 %v21
  %v30 = vunpack.c.l.b16 %v22
  %v31 = vunpack.c.h.b16 %v22
  %v32 = vpack.c.b16 %v28, %v26
  %v33 = vpack.c.b16 %v29, %v27
  %v34 = vpack.c.b16 %v30, %v30
  %v35 = vpack.c.b16 %v31, %v31
  %vm38 = vcmask 195584
  %v40 = vsel %vm38, %v19, 0
  %vm42 = vcmask 1043456
  %v44 = vsel %vm42, %v34, 0
  %v47 = vsel %vm42, %v35, 0
  %49 = vmatprep.subr.bf16.mxu0 0
  %50 = vmatpush1.bf16.msra.mxu0 0
  %51 = vmatprep.subr.bf16.mxu0 0
  %52 = vmatpush1.bf16.msra.mxu0 0
  %53 = vmatprep.subr.bf16.mxu0 0
  %54 = vmatpush1.bf16.msra.mxu0 0
  %55 = vmatprep.subr.bf16.mxu0 0
  %56 = vmatpush1.bf16.msra.mxu0 0
  %57 = vmatprep.subr.bf16.mxu0 0
  %58 = vmatpush1.bf16.msra.mxu0 0
  %59 = vmatprep.subr.bf16.mxu0 0
  %60 = vmatpush1.bf16.msra.mxu0 0
  %61 = vmatprep.subr.bf16.mxu0 %v47
  %62 = vmatpush1.bf16.msra.mxu0 %v44
  %63 = vmatprep.subr.bf16.mxu0 %v33
  %64 = vmatpush1.bf16.msra.mxu0 %v32
  %65 = vmatprep.subr.bf16.mxu0 0
  %66 = vmatpush2.bf16.msra.mxu0 0
  %67 = vmatprep.subr.bf16.mxu0 0
  %68 = vmatpush2.bf16.msra.mxu0 0
  %69 = vmatprep.subr.bf16.mxu0 0
  %70 = vmatpush2.bf16.msra.mxu0 0
  %71 = vmatprep.subr.bf16.mxu0 0
  %72 = vmatpush2.bf16.msra.mxu0 0
  %73 = vmatprep.subr.bf16.mxu0 0
  %74 = vmatpush2.bf16.msra.mxu0 0
  %75 = vmatprep.subr.bf16.mxu0 0
  %76 = vmatpush2.bf16.msra.mxu0 0
  %77 = vmatprep.subr.bf16.mxu0 0
  %78 = vmatpush2.bf16.msra.mxu0 0
  %79 = vmatprep.subr.bf16.mxu0 0
  %80 = vmatpush2.bf16.msra.mxu0 0
  %81 = vmatprep.mubr.bf16.mxu0 0
  %82 = vmatmul.mubr.bf16.gmra.mxu0 %v40
  %v83 = vpop.f32.mrf.mxu0
  %v84 = vadd.f32 0.0, %v83
  %v85 = vpop.f32.mrf.mxu0
  %v86 = vadd.f32 0.0, %v85
  %v87 = vpop.f32.mrf.mxu0
  %v88 = vpop.f32.mrf.mxu0
  %89 = vdwg.mxu0
  %v90 = vld [vmem:[%s2] sm:$0x3]
  %v92 = vlaneseq
  %v93 = vshrl.u32 %v92, 7
  %v94 = vsub.s32 0, %v93
  %v95 = vrot.slane %v90, %v94
  %v96 = vlaneseq
  %v97 = vshrl.u32 %v96, 7
  %v98 = vsub.s32 1, %v97
  %v99 = vrot.slane %v90, %v98
  %v102 = vmul.f32 %v84, %v95
  %v103 = vmul.f32 %v86, %v99
  %v104 = vld [vmem:[%s3] sm:$0x3]
  %v106 = vlaneseq
  %v107 = vshrl.u32 %v106, 7
  %v108 = vsub.s32 0, %v107
  %v109 = vrot.slane %v104, %v108
  %v110 = vlaneseq
  %v111 = vshrl.u32 %v110, 7
  %v112 = vsub.s32 1, %v111
  %v113 = vrot.slane %v104, %v112
  %v116 = vadd.f32 %v102, %v109
  %v117 = vadd.f32 %v103, %v113
  %v118 = vrcp.pop 6.0
  %v119 = vmul.f32 %v116, %v118
  %v120 = vmul.f32 %v117, %v118
  %v121 = vadd.f32 %v119, 0.5
  %v122 = vadd.f32 %v120, 0.5
  %v123 = vmax.f32 %v121, 0.0
  %v124 = vmax.f32 %v122, 0.0
  %v125 = vmin.f32 %v123, 1.0
  %v126 = vmin.f32 %v124, 1.0
  %v127 = vmul.f32 %v116, %v125
  %v128 = vmul.f32 %v117, %v126
  %129 = vst [vmem:[%s4] sm:$0xff] %v127
  %vm130 = vcmask 130048
  %131 = vst.msk [vmem:[%s4 + $0x8] sm:$0xff] %vm130, %v128
  // Predicated region
  $region18: #{_lambda_.10} parent=0 // pred_check
    _
  $region19: #{_lambda_.10} parent=0 // pred_check_branch
    %133 = sbr.rel (0) target = $region21
  $region20: #{_lambda_.10} parent=0 // pred_region
    _
  $region21: #{_lambda_.10} parent=0 // pred_fallthru
    _
  // Predicated region
  $region22: #{_lambda_.10} parent=0 // pred_check
    _
  $region23: #{_lambda_.10} parent=0 // pred_check_branch
    %135 = sbr.rel (0) target = $region25
  $region24: #{_lambda_.10} parent=0 // pred_region
    _
  $region25: #{_lambda_.10} parent=0 // pred_fallthru
    _

// kernel: _lambda_.11
$region0: #{_lambda_.11}
  #allocation0 [shape = 'u32[]', space=smem, size = 0x4, offset = 0x4, fixed_abs, tag = 'smem constant byte address 0x4 - core index']
  #allocation1 [shape = 'u32[144,128]{1,0:T(1,128)}', space=vmem, size = 0x12000, scoped, tag = 'internal scratch']
  %s0 = inlined_call_operand.vmem [shape: f32[2,4,144], index: 0, kind: input, shape index: {}]
  %s1 = inlined_call_operand.vmem [shape: f32[2,4], index: 1, kind: input, shape index: {}]
  %s2 = inlined_call_operand.vmem [shape: bf16[144,32], index: 2, kind: input, shape index: {}]
  %s3 = inlined_call_operand.vmem [shape: f32[1,32], index: 3, kind: input, shape index: {}]
  %s4 = inlined_call_operand.vmem [shape: bf16[32,5], index: 4, kind: input, shape index: {}]
  %s5 = inlined_call_operand.vmem [shape: bf16[4,5], index: 5, kind: input, shape index: {}]
  %s6 = inlined_call_operand.vmem [shape: f32[1,5], index: 6, kind: input, shape index: {}]
  %s7 = inlined_call_operand.hbm [shape: f32[2,144], index: 7, kind: output, shape index: {0}]
  %s8 = inlined_call_operand.hbm [shape: f32[2,5], index: 8, kind: output, shape index: {1}]
  %9 = xla_tuple %s7, %s8
  %s10 = sld [smem:[#allocation0]]
  $region46: #{_lambda_.11} parent=0
    _
  %s12 = ssub.s32 1, %s10
  %s13 = scalar_select 0, %s12, %s10
  $region1: #{_lambda_.11} parent=0
    #allocation2 [shape = 'u8[2048]{0}', space=vmem, size = 0x800, scoped, tag = 'output window, operand 0, single buffered']
    #allocation3 [shape = 's32[1]{0}', space=sflag, size = 0x4, scoped, tag = 'scoped memory for _lambda_.11']
    #allocation4 [shape = 'u8[1024]{0}', space=vmem, size = 0x400, scoped, tag = 'output window, operand 1, single buffered']
    #allocation5 [shape = 's32[1]{0}', space=sflag, size = 0x4, scoped, tag = 'scoped memory for _lambda_.11']
    %14 = vsyncpa [#allocation3], 0
    %15 = vsyncpa [#allocation5], 0
    // Predicated region
    $region2: #{_lambda_.11} parent=1 // pred_check
      _
    $region3: #{_lambda_.11} parent=1 // pred_check_branch
      %17 = sbr.rel (0) target = $region5
    $region4: #{_lambda_.11} parent=1 // pred_region
      _
    $region5: #{_lambda_.11} parent=1 // pred_fallthru
      _
    // Predicated region
    $region6: #{_lambda_.11} parent=1 // pred_check
      _
    $region7: #{_lambda_.11} parent=1 // pred_check_branch
      %19 = sbr.rel (0) target = $region9
    $region8: #{_lambda_.11} parent=1 // pred_region
      _
    $region9: #{_lambda_.11} parent=1 // pred_fallthru
      _
    // Predicated region
    $region10: #{_lambda_.11} parent=1 // pred_check
      _
    $region11: #{_lambda_.11} parent=1 // pred_check_branch
      %21 = sbr.rel (0) target = $region13
    $region12: #{_lambda_.11} parent=1 // pred_region
      _
    $region13: #{_lambda_.11} parent=1 // pred_fallthru
      _
    // Predicated region
    $region14: #{_lambda_.11} parent=1 // pred_check
      _
    $region15: #{_lambda_.11} parent=1 // pred_check_branch
      %23 = sbr.rel (0) target = $region17
    $region16: #{_lambda_.11} parent=1 // pred_region
      _
    $region17: #{_lambda_.11} parent=1 // pred_fallthru
      _
    // Predicated region
    $region18: #{_lambda_.11} parent=1 // pred_check
      _
    $region19: #{_lambda_.11} parent=1 // pred_check_branch
      %25 = sbr.rel (0) target = $region21
    $region20: #{_lambda_.11} parent=1 // pred_region
      _
    $region21: #{_lambda_.11} parent=1 // pred_fallthru
      _
    // Predicated region
    $region22: #{_lambda_.11} parent=1 // pred_check
      _
    $region23: #{_lambda_.11} parent=1 // pred_check_branch
      %27 = sbr.rel (0) target = $region25
    $region24: #{_lambda_.11} parent=1 // pred_region
      _
    $region25: #{_lambda_.11} parent=1 // pred_fallthru
      _
    // Predicated region
    $region26: #{_lambda_.11} parent=1 // pred_check
      _
    $region27: #{_lambda_.11} parent=1 // pred_check_branch
      %29 = sbr.rel (0) target = $region29
    $region28: #{_lambda_.11} parent=1 // pred_region
      _
    $region29: #{_lambda_.11} parent=1 // pred_fallthru
      _
    %v31 = vld [vmem:[%s0] sm:$0xff]
    %v32 = vld [vmem:[%s0 + $0x8] sm:$0xff]
    %v35 = vcombine.high %v31, %v31
    %v36 = vcombine.high %v32, %v32
    %vm39 = vcmask 1043456
    %v40 = vsel %vm39, %v31, 0.0
    %v41 = vrot.slane %v40, 4
    %v42 = vadd.f32 %v40, %v41
    %v43 = vrot.slane %v42, 2
    %v44 = vadd.f32 %v42, %v43
    %v45 = vrot.slane %v44, 1
    %v46 = vadd.f32 %v44, %v45
    %vm47 = vcmask 125952
    %v48 = vsel %vm47, %v35, 0.0
    %v49 = vrot.slane %v48, 4
    %v50 = vadd.f32 %v48, %v49
    %v51 = vrot.slane %v50, 2
    %v52 = vadd.f32 %v50, %v51
    %v53 = vrot.slane %v52, 1
    %v54 = vadd.f32 %v52, %v53
    %v55 = vsel %vm39, %v32, 0.0
    %v56 = vrot.slane %v55, 4
    %v57 = vadd.f32 %v55, %v56
    %v58 = vrot.slane %v57, 2
    %v59 = vadd.f32 %v57, %v58
    %v60 = vrot.slane %v59, 1
    %v61 = vadd.f32 %v59, %v60
    %v62 = vsel %vm47, %v36, 0.0
    %v63 = vrot.slane %v62, 4
    %v64 = vadd.f32 %v62, %v63
    %v65 = vrot.slane %v64, 2
    %v66 = vadd.f32 %v64, %v65
    %v67 = vrot.slane %v66, 1
    %v68 = vadd.f32 %v66, %v67
    %v69 = vrcp.pop 4.0
    %v70 = vmul.f32 %v46, %v69
    %v71 = vmul.f32 %v54, %v69
    %v72 = vmul.f32 %v61, %v69
    %v73 = vmul.f32 %v68, %v69
    %v78 = vcombine.low %v70, %v71
    %v80 = vunpack.c.l.s4 1983009808
    %v81 = vunpack.c.0.s8 %v80
    %v82 = vlaneseq
    %v83 = vshrl.u32 %v82, 7
    %v84 = vsub.s32 %v81, %v83
    %v85 = vrot.slane %v78, %v84
    %v86 = vcombine.low %v72, %v73
    %v88 = vunpack.c.l.s4 1983009808
    %v89 = vunpack.c.0.s8 %v88
    %v90 = vlaneseq
    %v91 = vshrl.u32 %v90, 7
    %v92 = vsub.s32 %v89, %v91
    %v93 = vrot.slane %v86, %v92
    %vm94 = vcmask 1044484
    %v95 = vsel %vm94, %v85, %v85
    %vm96 = vcmask 1046534
    %v97 = vsel %vm96, %v85, %v95
    %v98 = vrot.slane %v93, 7
    %vm99 = vcmask 1041409
    %v100 = vsel %vm99, %v98, %v97
    %vm101 = vcmask 1043459
    %v102 = vsel %vm101, %v98, %v100
    %vm103 = vcmask 1045509
    %v104 = vsel %vm103, %v98, %v102
    %vm105 = vcmask 1047559
    %v106 = vsel %vm105, %v98, %v104
    %vm108 = vcmask 1041408
    %vm109 = vcmask 125954
    %vm110 = vmor %vm109, %vm108
    %111 = vst.msk [vmem:[#allocation2] sm:$0xf] %vm110, %v106
    %v112 = vpack.c.bf16 %v70, %v70
    %v113 = vpack.c.bf16 %v71, %v71
    %v114 = vpack.c.bf16 %v72, %v72
    %v115 = vpack.c.bf16 %v73, %v73
    %v116 = vld [vmem:[%s2] sm:$0xf]
    %v117 = vld [vmem:[%s2 + $0x4] sm:$0xf]
    %v118 = vld [vmem:[%s2 + $0x8] sm:$0xf]
    %v119 = vld [vmem:[%s2 + $0xc] sm:$0xf]
    %v120 = vld [vmem:[%s2 + $0x10] sm:$0xf]
    %v121 = vld [vmem:[%s2 + $0x14] sm:$0xf]
    %v122 = vld [vmem:[%s2 + $0x18] sm:$0xf]
    %v123 = vld [vmem:[%s2 + $0x1c] sm:$0xf]
    %v124 = vld [vmem:[%s2 + $0x20] sm:$0xf]
    %v125 = vld [vmem:[%s2 + $0x24] sm:$0xf]
    %v126 = vld [vmem:[%s2 + $0x28] sm:$0xf]
    %v127 = vld [vmem:[%s2 + $0x2c] sm:$0xf]
    %v128 = vld [vmem:[%s2 + $0x30] sm:$0xf]
    %v129 = vld [vmem:[%s2 + $0x34] sm:$0xf]
    %v130 = vld [vmem:[%s2 + $0x38] sm:$0xf]
    %v131 = vld [vmem:[%s2 + $0x3c] sm:$0xf]
    %v132 = vld [vmem:[%s2 + $0x40] sm:$0xf]
    %v133 = vld [vmem:[%s2 + $0x44] sm:$0xf]
    %v134 = vld [vmem:[%s3] sm:$0x1]
    %v136 = vlaneseq
    %v137 = vshrl.u32 %v136, 7
    %v138 = vsub.s32 0, %v137
    %v139 = vrot.slane %v134, %v138
    %v145 = vunpack.c.l.b16 %v112
    %v146 = vunpack.c.l.b16 %v113
    %v147 = vunpack.c.l.b16 %v114
    %v148 = vunpack.c.l.b16 %v115
    %v149 = vsel %vm99, %v147, %v145
    %v150 = vsel %vm99, %v148, %v146
    %v151 = vpack.c.b16 %v149, %v149
    %v152 = vpack.c.b16 %v150, %v150
    %v172 = vunpack.c.l.b16 %v116
    %v173 = vunpack.c.l.b16 %v117
    %v174 = vunpack.c.l.b16 %v118
    %v175 = vunpack.c.l.b16 %v119
    %v176 = vunpack.c.l.b16 %v120
    %v177 = vunpack.c.l.b16 %v121
    %v178 = vunpack.c.l.b16 %v122
    %v179 = vunpack.c.l.b16 %v123
    %v180 = vunpack.c.l.b16 %v124
    %v181 = vunpack.c.l.b16 %v125
    %v182 = vunpack.c.l.b16 %v126
    %v183 = vunpack.c.l.b16 %v127
    %v184 = vunpack.c.l.b16 %v128
    %v185 = vunpack.c.l.b16 %v129
    %v186 = vunpack.c.l.b16 %v130
    %v187 = vunpack.c.l.b16 %v131
    %v188 = vunpack.c.l.b16 %v132
    %v189 = vunpack.c.l.b16 %v133
    %v190 = vpack.c.b16 %v173, %v172
    %v191 = vpack.c.b16 %v175, %v174
    %v192 = vpack.c.b16 %v177, %v176
    %v193 = vpack.c.b16 %v179, %v178
    %v194 = vpack.c.b16 %v181, %v180
    %v195 = vpack.c.b16 %v183, %v182
    %v196 = vpack.c.b16 %v185, %v184
    %v197 = vpack.c.b16 %v187, %v186
    %v198 = vpack.c.b16 %v189, %v188
    %vm208 = vcmask 130048
    %v210 = vsel %vm208, %v152, 0
    %212 = vmatprep.subr.bf16.mxu0 0
    %213 = vmatpush1.bf16.msra.mxu0 %v197
    %214 = vmatprep.subr.bf16.mxu0 0
    %215 = vmatpush1.bf16.msra.mxu0 %v196
    %216 = vmatprep.subr.bf16.mxu0 0
    %217 = vmatpush1.bf16.msra.mxu0 %v195
    %218 = vmatprep.subr.bf16.mxu0 0
    %219 = vmatpush1.bf16.msra.mxu0 %v194
    %220 = vmatprep.subr.bf16.mxu0 0
    %221 = vmatpush1.bf16.msra.mxu0 %v193
    %222 = vmatprep.subr.bf16.mxu0 0
    %223 = vmatpush1.bf16.msra.mxu0 %v192
    %224 = vmatprep.subr.bf16.mxu0 0
    %225 = vmatpush1.bf16.msra.mxu0 %v191
    %226 = vmatprep.subr.bf16.mxu0 0
    %227 = vmatpush1.bf16.msra.mxu0 %v190
    %228 = vmatprep.subr.bf16.mxu0 0
    %229 = vmatpush2.bf16.msra.mxu0 0
    %230 = vmatprep.subr.bf16.mxu0 0
    %231 = vmatpush2.bf16.msra.mxu0 0
    %232 = vmatprep.subr.bf16.mxu0 0
    %233 = vmatpush2.bf16.msra.mxu0 0
    %234 = vmatprep.subr.bf16.mxu0 0
    %235 = vmatpush2.bf16.msra.mxu0 0
    %236 = vmatprep.subr.bf16.mxu0 0
    %237 = vmatpush2.bf16.msra.mxu0 0
    %238 = vmatprep.subr.bf16.mxu0 0
    %239 = vmatpush2.bf16.msra.mxu0 0
    %240 = vmatprep.subr.bf16.mxu0 0
    %241 = vmatpush2.bf16.msra.mxu0 0
    %242 = vmatprep.subr.bf16.mxu0 0
    %243 = vmatpush2.bf16.msra.mxu0 %v198
    %244 = vmatprep.mubr.bf16.mxu0 %v210
    %245 = vmatmul.mubr.bf16.gmra.mxu0 %v151
    %v246 = vpop.f32.mrf.mxu0
    %v247 = vadd.f32 %v139, %v246
    %v248 = vpop.f32.mrf.mxu0
    %v249 = vpop.f32.mrf.mxu0
    %v250 = vpop.f32.mrf.mxu0
    %251 = vdwg.mxu0
    %v252 = vrcp.pop 6.0
    %v253 = vmul.f32 %v247, %v252
    %v254 = vadd.f32 %v253, 0.5
    %v255 = vmax.f32 %v254, 0.0
    %v256 = vmin.f32 %v255, 1.0
    %v257 = vmul.f32 %v247, %v256
    %v258 = vpack.c.bf16 %v257, %v257
    %v259 = vld [vmem:[%s4] sm:$0xf]
    %v260 = vld [vmem:[%s4 + $0x4] sm:$0xf]
    %v261 = vld [vmem:[%s4 + $0x8] sm:$0xf]
    %v262 = vld [vmem:[%s4 + $0xc] sm:$0xf]
    %v263 = vld [vmem:[%s6] sm:$0x1]
    %v265 = vlaneseq
    %v266 = vshrl.u32 %v265, 7
    %v267 = vsub.s32 0, %v266
    %v268 = vrot.slane %v263, %v267
    %v274 = vunpack.c.l.b16 %v259
    %v275 = vunpack.c.l.b16 %v260
    %v276 = vunpack.c.l.b16 %v261
    %v277 = vunpack.c.l.b16 %v262
    %v278 = vpack.c.b16 %v275, %v274
    %v279 = vpack.c.b16 %v277, %v276
    %vm282 = vcmask 261120
    %v284 = vsel %vm282, %v258, 0
    %286 = vmatprep.subr.bf16.mxu0 0
    %287 = vmatpush1.bf16.msra.mxu0 0
    %288 = vmatprep.subr.bf16.mxu0 0
    %289 = vmatpush1.bf16.msra.mxu0 0
    %290 = vmatprep.subr.bf16.mxu0 0
    %291 = vmatpush1.bf16.msra.mxu0 0
    %292 = vmatprep.subr.bf16.mxu0 0
    %293 = vmatpush1.bf16.msra.mxu0 0
    %294 = vmatprep.subr.bf16.mxu0 0
    %295 = vmatpush1.bf16.msra.mxu0 0
    %296 = vmatprep.subr.bf16.mxu0 0
    %297 = vmatpush1.bf16.msra.mxu0 0
    %298 = vmatprep.subr.bf16.mxu0 0
    %299 = vmatpush1.bf16.msra.mxu0 %v279
    %300 = vmatprep.subr.bf16.mxu0 0
    %301 = vmatpush1.bf16.msra.mxu0 %v278
    %302 = vmatprep.subr.bf16.mxu0 0
    %303 = vmatpush2.bf16.msra.mxu0 0
    %304 = vmatprep.subr.bf16.mxu0 0
    %305 = vmatpush2.bf16.msra.mxu0 0
    %306 = vmatprep.subr.bf16.mxu0 0
    %307 = vmatpush2.bf16.msra.mxu0 0
    %308 = vmatprep.subr.bf16.mxu0 0
    %309 = vmatpush2.bf16.msra.mxu0 0
    %310 = vmatprep.subr.bf16.mxu0 0
    %311 = vmatpush2.bf16.msra.mxu0 0
    %312 = vmatprep.subr.bf16.mxu0 0
    %313 = vmatpush2.bf16.msra.mxu0 0
    %314 = vmatprep.subr.bf16.mxu0 0
    %315 = vmatpush2.bf16.msra.mxu0 0
    %316 = vmatprep.subr.bf16.mxu0 0
    %317 = vmatpush2.bf16.msra.mxu0 0
    %318 = vmatprep.mubr.bf16.mxu0 0
    %319 = vmatmul.mubr.bf16.gmra.mxu0 %v284
    %v320 = vpop.f32.mrf.mxu0
    %v321 = vadd.f32 %v268, %v320
    %v322 = vpop.f32.mrf.mxu0
    %v323 = vpop.f32.mrf.mxu0
    %v324 = vpop.f32.mrf.mxu0
    %325 = vdwg.mxu0
    %v326 = vld [vmem:[%s1] sm:$0x3]
    %v327 = vpack.c.bf16 %v326, %v326
    %v328 = vld [vmem:[%s5] sm:$0x3]
    %vm329 = vcmask 31744
    %v331 = vsel %vm329, %v327, 0
    %v334 = vsel %vm108, %v328, 0
    %336 = vmatprep.subr.bf16.mxu0 0
    %337 = vmatpush1.bf16.msra.mxu0 0
    %338 = vmatprep.subr.bf16.mxu0 0
    %339 = vmatpush1.bf16.msra.mxu0 0
    %340 = vmatprep.subr.bf16.mxu0 0
    %341 = vmatpush1.bf16.msra.mxu0 0
    %342 = vmatprep.subr.bf16.mxu0 0
    %343 = vmatpush1.bf16.msra.mxu0 0
    %344 = vmatprep.subr.bf16.mxu0 0
    %345 = vmatpush1.bf16.msra.mxu0 0
    %346 = vmatprep.subr.bf16.mxu0 0
    %347 = vmatpush1.bf16.msra.mxu0 0
    %348 = vmatprep.subr.bf16.mxu0 0
    %349 = vmatpush1.bf16.msra.mxu0 0
    %350 = vmatprep.subr.bf16.mxu0 0
    %351 = vmatpush1.bf16.msra.mxu0 %v334
    %352 = vmatprep.subr.bf16.mxu0 0
    %353 = vmatpush2.bf16.msra.mxu0 0
    %354 = vmatprep.subr.bf16.mxu0 0
    %355 = vmatpush2.bf16.msra.mxu0 0
    %356 = vmatprep.subr.bf16.mxu0 0
    %357 = vmatpush2.bf16.msra.mxu0 0
    %358 = vmatprep.subr.bf16.mxu0 0
    %359 = vmatpush2.bf16.msra.mxu0 0
    %360 = vmatprep.subr.bf16.mxu0 0
    %361 = vmatpush2.bf16.msra.mxu0 0
    %362 = vmatprep.subr.bf16.mxu0 0
    %363 = vmatpush2.bf16.msra.mxu0 0
    %364 = vmatprep.subr.bf16.mxu0 0
    %365 = vmatpush2.bf16.msra.mxu0 0
    %366 = vmatprep.subr.bf16.mxu0 0
    %367 = vmatpush2.bf16.msra.mxu0 0
    %368 = vmatprep.mubr.bf16.mxu0 0
    %369 = vmatmul.mubr.bf16.gmra.mxu0 %v331
    %v370 = vpop.f32.mrf.mxu0
    %v371 = vadd.f32 0.0, %v370
    %v372 = vpop.f32.mrf.mxu0
    %v373 = vpop.f32.mrf.mxu0
    %v374 = vpop.f32.mrf.mxu0
    %375 = vdwg.mxu0
    %v376 = vadd.f32 %v321, %v371
    %vm377 = vcmask 33792
    %378 = vst.msk [vmem:[#allocation4] sm:$0x3] %vm377, %v376
    // Predicated region
    $region30: #{_lambda_.11} parent=1 // pred_check
      _
    $region31: #{_lambda_.11} parent=1 // pred_check_branch
      %380 = sbr.rel (0) target = $region33
    $region32: #{_lambda_.11} parent=1 // pred_region
      %s382 = ssub.s32 64, 64
      %383 = vsyncadd [#allocation3], %s382
      %s385 = sshll.u32 [#allocation2], 4
      %s386 = int_to_ptr.vmem [resolvable:$true] %s385
      %388 = dma.vmem_to_hbm [thread:$0]  %s386, 64, %s7, [#allocation3]
    $region33: #{_lambda_.11} parent=1 // pred_fallthru
      _
    // Predicated region
    $region34: #{_lambda_.11} parent=1 // pred_check
      _
    $region35: #{_lambda_.11} parent=1 // pred_check_branch
      %390 = sbr.rel (0) target = $region37
    $region36: #{_lambda_.11} parent=1 // pred_region
      %s392 = ssub.s32 32, 32
      %393 = vsyncadd [#allocation5], %s392
      %s395 = sshll.u32 [#allocation4], 4
      %s396 = int_to_ptr.vmem [resolvable:$true] %s395
      %398 = dma.vmem_to_hbm [thread:$0]  %s396, 32, %s8, [#allocation5]
    $region37: #{_lambda_.11} parent=1 // pred_fallthru
      _
    // Predicated region
    $region38: #{_lambda_.11} parent=1 // pred_check
      _
    $region39: #{_lambda_.11} parent=1 // pred_check_branch
      %400 = sbr.rel (0) target = $region41
    $region40: #{_lambda_.11} parent=1 // pred_region
      %401 = dma.done [#allocation3], 64
    $region41: #{_lambda_.11} parent=1 // pred_fallthru
      _
    // Predicated region
    $region42: #{_lambda_.11} parent=1 // pred_check
      _
    $region43: #{_lambda_.11} parent=1 // pred_check_branch
      %403 = sbr.rel (0) target = $region45
    $region44: #{_lambda_.11} parent=1 // pred_region
      %404 = dma.done [#allocation5], 32
    $region45: #{_lambda_.11} parent=1 // pred_fallthru
      _
    %405 = vsyncpa [#allocation3], 1
    %406 = vsyncpa [#allocation5], 1

</llo_original>
